<compile_context>
chip_gen: v7x
topology: tpu7x:2x2x1
jax: 0.10.0
libtpu: 0.0.40
codegen_flags: <defaults>
</compile_context>

<pallas_src>
import math

import jax
import jax.numpy as jnp
from jax.experimental import pallas as pl
from jax.experimental.pallas import tpu as pltpu

# ----------------------------- configuration --------------------------------
B = 2               # batch
C = 64              # transformer.C (hidden dim), divisible by 32 for GroupNorm
NUM_QUERIES = 8
NUM_CLASSES = 16
NUM_DEC_LAYERS = 3  # transformer.decoder.num_layers
NUM_LEVELS = 2      # num_feature_levels == len(backbone.strides)
BACKBONE_CHANNELS = [16, 32]
IMG_H = IMG_W = 32
GN_GROUPS = 32
GN_EPS = 1e-5
CIN = 3             # image channels feeding the fused projections
HW0 = 16 * 16       # level-0 spatial size (after surrogate backbone stride 2)
HW1 = 8 * 8         # level-1 spatial size (stride 4)
S_TOTAL = HW0 + HW1
OUT_PAD = 128       # lane-dense head output width (coords 0:4, logits 4:20)


# ------------- Pallas kernel: fused backbone-linear + 1x1 conv + GroupNorm ---
def fused_proj_kernel(p0_ref, p1_ref,
                      w0_ref, b0_ref, g0_ref, gamma0_ref, beta0_ref,
                      w1_ref, b1_ref, g1_ref, gamma1_ref, beta1_ref,
                      mem_ref):
    # p{l}_ref:  (B*HWl, CIN)   pooled image pixels for level l (whole batch)
    # w{l}_ref:  (CIN, C)       fused (backbone_linear @ conv1x1) weight
    # b{l}_ref:  (1, C)         conv bias
    # g{l}_ref:  (C, C)         group-average matrix, 1/(HWl*g) folded in
    # gamma/beta: (1, C)        GroupNorm affine params
    # mem_ref:   (B, S_TOTAL, C) concatenated transformer memory
    def do_level(p_ref, w_ref, b_ref, g_ref, gamma_ref, beta_ref, hw, off):
        x = p_ref[...]                                               # (B*hw, CIN)
        y = jnp.dot(x, w_ref[...], preferred_element_type=jnp.float32) + b_ref[...]
        # Per-image sums over the spatial axis on the MXU (block-ones selector)
        # instead of an XLU cross-sublane reduction.
        row = jax.lax.broadcasted_iota(jnp.int32, (B, B * hw), 0)
        col = jax.lax.broadcasted_iota(jnp.int32, (B, B * hw), 1)
        sel = jnp.logical_and(col >= row * hw,
                              col < (row + 1) * hw).astype(jnp.float32)
        s = jnp.dot(sel, y, preferred_element_type=jnp.float32)       # (B, C)
        ss = jnp.dot(sel, y * y, preferred_element_type=jnp.float32)  # (B, C)
        mean = jnp.dot(s, g_ref[...], preferred_element_type=jnp.float32)
        meansq = jnp.dot(ss, g_ref[...], preferred_element_type=jnp.float32)
        var = jnp.maximum(meansq - mean * mean, 0.0)                 # guard cancellation
        inv = jax.lax.rsqrt(var + GN_EPS)
        scale = inv * gamma_ref[...]                                 # (B, C)
        shift = beta_ref[...] - mean * scale                         # (B, C)
        yn = y.reshape(B, hw, C) * scale[:, None, :] + shift[:, None, :]
        mem_ref[:, off:off + hw, :] = yn.astype(mem_ref.dtype)

    do_level(p0_ref, w0_ref, b0_ref, g0_ref, gamma0_ref, beta0_ref, HW0, 0)
    do_level(p1_ref, w1_ref, b1_ref, g1_ref, gamma1_ref, beta1_ref, HW1, HW0)


def _group_average_matrix(hw):
    g = C // GN_GROUPS
    gid = jnp.arange(C) // g
    mask = (gid[:, None] == gid[None, :]).astype(jnp.float32)
    return mask / float(hw * g)


def backbone_proj_memory(p, x_nchw):
    """Surrogate backbone + fused input_proj (1x1 conv + GN) -> (B, S, C) memory."""
    x = jnp.transpose(x_nchw, (0, 2, 3, 1)).astype(jnp.float32)      # NHWC

    # TODO(synk): backbone module is injected and not defined in
    # deformable_detr.py; a deterministic pool+linear surrogate stands in.
    def pool(z, k):
        Bz, H, W, Ci = z.shape
        return z.reshape(Bz, H // k, k, W // k, k, Ci).mean(axis=(2, 4))

    p0 = pool(x, 2).reshape(B * HW0, CIN)
    p1 = pool(x, 4).reshape(B * HW1, CIN)

    # No nonlinearity between the surrogate backbone linear and the 1x1 conv,
    # so fold them into one (CIN, C) weight per level.
    w0 = p["backbone_w0"] @ p["proj_w"][0]
    w1 = p["backbone_w1"] @ p["proj_w"][1]

    pix_specs = [
        pl.BlockSpec((B * HW0, CIN), lambda i: (0, 0)),
        pl.BlockSpec((B * HW1, CIN), lambda i: (0, 0)),
    ]
    per_level = [
        pl.BlockSpec((CIN, C), lambda i: (0, 0)),
        pl.BlockSpec((1, C), lambda i: (0, 0)),
        pl.BlockSpec((C, C), lambda i: (0, 0)),
        pl.BlockSpec((1, C), lambda i: (0, 0)),
        pl.BlockSpec((1, C), lambda i: (0, 0)),
    ]
    memory = pl.pallas_call(
        fused_proj_kernel,
        out_shape=jax.ShapeDtypeStruct((B, S_TOTAL, C), jnp.float32),
        grid_spec=pltpu.PrefetchScalarGridSpec(
            num_scalar_prefetch=0,
            grid=(1,),
            in_specs=pix_specs + per_level + per_level,
            out_specs=pl.BlockSpec((B, S_TOTAL, C), lambda i: (0, 0, 0)),
        ),
        compiler_params=pltpu.CompilerParams(dimension_semantics=("arbitrary",)),
    )(p0, p1,
      w0, p["proj_b"][0].reshape(1, C), _group_average_matrix(HW0),
      p["gn_gamma"][0].reshape(1, C), p["gn_beta"][0].reshape(1, C),
      w1, p["proj_b"][1].reshape(1, C), _group_average_matrix(HW1),
      p["gn_gamma"][1].reshape(1, C), p["gn_beta"][1].reshape(1, C))
    return memory


# --------------- Pallas kernel: bbox MLP + class head + ref-point ------------
def head_kernel(hs_ref, add_ref, w1_ref, b1_ref, w2_ref, b2_ref, wout_ref, o_ref):
    # hs_ref:   (LQB, C)        decoder outputs, all layers/queries/batch
    # add_ref:  (LQB, OUT_PAD)  inverse-sigmoid(ref) in cols 0,1 + biases
    # wout_ref: (2C, OUT_PAD)   block-diag [[bbox_w3, 0], [0, class_w]] (padded)
    h = hs_ref[...]                                                   # (LQB, C)
    h1 = jnp.maximum(
        jnp.dot(h, w1_ref[...], preferred_element_type=jnp.float32) + b1_ref[...], 0.0)
    h2 = jnp.maximum(
        jnp.dot(h1, w2_ref[...], preferred_element_type=jnp.float32) + b2_ref[...], 0.0)
    # Single block-diagonal matmul produces bbox deltas (cols 0:4) and class
    # logits (cols 4:4+NC) with a lane-dense 128-wide output.
    lhs = jnp.concatenate([h2, h], axis=-1)                           # (LQB, 2C)
    pre = jnp.dot(lhs, wout_ref[...], preferred_element_type=jnp.float32) + add_ref[...]
    col = jax.lax.broadcasted_iota(jnp.int32, pre.shape, 1)
    o_ref[...] = jnp.where(col < 4, jax.nn.sigmoid(pre), pre)


def detr_head(hs, ref_point, p):
    """hs: (L, Q, B, C); ref_point: (Q, B, 2) -> coords (L,B,Q,4), logits (L,B,Q,NC)."""
    L = hs.shape[0]
    QB = NUM_QUERIES * B
    LQB = L * QB
    hs_flat = hs.reshape(LQB, C)                                      # rows in (l, q, b) order

    # Inverse-sigmoid of the reference points is constant across decoder
    # layers -> hoisted out of the kernel (spec formula, eps = 1e-10; inputs
    # come from a sigmoid so they stay strictly inside (0, 1)).
    inv2 = -jnp.log(1.0 / (ref_point.reshape(QB, 2) + 1e-10) - 1.0 + 1e-10)
    inv_pad = jnp.pad(inv2, ((0, 0), (0, OUT_PAD - 2)))               # (QB, OUT_PAD)
    inv_rows = jnp.tile(inv_pad, (L, 1))                              # (LQB, OUT_PAD)

    # Block-diagonal final projection padded to 128 output lanes; biases folded
    # into the same per-row add tensor.
    w_out = jnp.zeros((2 * C, OUT_PAD), jnp.float32)
    w_out = w_out.at[:C, :4].set(p["bbox_w3"])
    w_out = w_out.at[C:, 4:4 + NUM_CLASSES].set(p["class_w"])
    b_out = jnp.zeros((1, OUT_PAD), jnp.float32)
    b_out = b_out.at[:, :4].set(p["bbox_b3"])
    b_out = b_out.at[:, 4:4 + NUM_CLASSES].set(p["class_b"])
    add_rows = inv_rows + b_out                                       # (LQB, OUT_PAD)

    out = pl.pallas_call(
        head_kernel,
        out_shape=jax.ShapeDtypeStruct((LQB, OUT_PAD), jnp.float32),
        grid_spec=pltpu.PrefetchScalarGridSpec(
            num_scalar_prefetch=0,
            grid=(1,),
            in_specs=[
                pl.BlockSpec((LQB, C), lambda i: (0, 0)),
                pl.BlockSpec((LQB, OUT_PAD), lambda i: (0, 0)),
                pl.BlockSpec((C, C), lambda i: (0, 0)),
                pl.BlockSpec((1, C), lambda i: (0, 0)),
                pl.BlockSpec((C, C), lambda i: (0, 0)),
                pl.BlockSpec((1, C), lambda i: (0, 0)),
                pl.BlockSpec((2 * C, OUT_PAD), lambda i: (0, 0)),
            ],
            out_specs=pl.BlockSpec((LQB, OUT_PAD), lambda i: (0, 0)),
        ),
        compiler_params=pltpu.CompilerParams(dimension_semantics=("arbitrary",)),
    )(hs_flat, add_rows,
      p["bbox_w1"], p["bbox_b1"], p["bbox_w2"], p["bbox_b2"], w_out)

    out = out.reshape(L, NUM_QUERIES, B, OUT_PAD)
    coords = jnp.transpose(out[..., :4], (0, 2, 1, 3))                # (L, B, Q, 4)
    logits = jnp.transpose(out[..., 4:4 + NUM_CLASSES], (0, 2, 1, 3)) # (L, B, Q, NC)
    return coords, logits


# ---------------------- plain-JAX surrogate (external module) ----------------
# TODO(synk): the deformable transformer module is injected and not defined in
# deformable_detr.py; a deterministic cross-attention surrogate producing
# hs: (L, Q, B, C) and ref_point: (Q, B, 2) stands in for it.
def surrogate_transformer(p, memory, query_embed):
    Bz, S, Cdim = memory.shape
    Q = query_embed.shape[0]
    mem = memory + p["pos"]
    h = jnp.broadcast_to(query_embed[None], (Bz, Q, Cdim))
    hs = []
    scale = 1.0 / math.sqrt(Cdim)
    for l in range(NUM_DEC_LAYERS):
        attn = jax.nn.softmax(jnp.einsum("bqc,bsc->bqs", h, mem) * scale, axis=-1)
        ctx = jnp.einsum("bqs,bsc->bqc", attn, mem)
        h = jnp.maximum(
            jnp.einsum("bqc,cd->bqd", h + ctx, p["dec_w"][l]) + p["dec_b"][l], 0.0)
        hs.append(jnp.transpose(h, (1, 0, 2)))                        # (Q, B, C)
    hs = jnp.stack(hs, axis=0)                                        # (L, Q, B, C)
    ref = jax.nn.sigmoid(query_embed @ p["ref_w"])                    # (Q, 2)
    ref = jnp.broadcast_to(ref[:, None, :], (Q, Bz, 2))
    return hs, ref


# ------------------------------- full forward --------------------------------
@jax.jit
def deformable_detr_forward(p, x_nchw):
    # Fused backbone-linear + input_proj (conv1x1 + GroupNorm) -> memory (Pallas)
    memory = backbone_proj_memory(p, x_nchw)                          # (B, S, C)
    # TODO(synk): masks / NestedTensor / F.interpolate extra-level path is not
    # exercised because num_feature_levels == len(backbone.strides).
    hs, ref_point = surrogate_transformer(p, memory, p["query_embed"])
    coords, logits = detr_head(hs, ref_point, p)                      # (L, B, Q, .)
    # aux_loss=False path only (matching the default constructor argument).
    return {"pred_logits": logits[-1], "pred_boxes": coords[-1]}


# ------------------------------- param init ----------------------------------
def init_params(key):
    ks = iter(jax.random.split(key, 32))
    nrm = lambda k, s, sc=0.02: (sc * jax.random.normal(k, s)).astype(jnp.float32)
    p = {}
    # surrogate backbone
    p["backbone_w0"] = nrm(next(ks), (CIN, BACKBONE_CHANNELS[0]), 0.2)
    p["backbone_w1"] = nrm(next(ks), (CIN, BACKBONE_CHANNELS[1]), 0.2)
    # input projections: conv1x1 + GroupNorm(32, C) per level
    p["proj_w"] = [nrm(next(ks), (BACKBONE_CHANNELS[l], C), 0.1) for l in range(NUM_LEVELS)]
    p["proj_b"] = [nrm(next(ks), (C,), 0.01) for _ in range(NUM_LEVELS)]
    p["gn_gamma"] = [jnp.ones((C,), jnp.float32) for _ in range(NUM_LEVELS)]
    p["gn_beta"] = [jnp.zeros((C,), jnp.float32) for _ in range(NUM_LEVELS)]
    # query embeddings (nn.Embedding(num_queries, C))
    p["query_embed"] = nrm(next(ks), (NUM_QUERIES, C), 1.0)
    # surrogate transformer
    p["pos"] = nrm(next(ks), (B, S_TOTAL, C), 0.05)
    p["dec_w"] = [nrm(next(ks), (C, C), 0.05) for _ in range(NUM_DEC_LAYERS)]
    p["dec_b"] = [nrm(next(ks), (1, 1, C), 0.01) for _ in range(NUM_DEC_LAYERS)]
    p["ref_w"] = nrm(next(ks), (C, 2), 0.1)
    # bbox_pred = MLP(C, C, 4, 3)
    p["bbox_w1"] = nrm(next(ks), (C, C), 0.05)
    p["bbox_b1"] = nrm(next(ks), (1, C), 0.01)
    p["bbox_w2"] = nrm(next(ks), (C, C), 0.05)
    p["bbox_b2"] = nrm(next(ks), (1, C), 0.01)
    p["bbox_w3"] = nrm(next(ks), (C, 4), 0.05)
    p["bbox_b3"] = nrm(next(ks), (1, 4), 0.01)
    # class_pred = Linear(C, num_classes), bias = -log((1-p)/p), p=0.01
    bias_value = -math.log((1 - 0.01) / 0.01)
    p["class_w"] = nrm(next(ks), (C, NUM_CLASSES), 0.05)
    p["class_b"] = jnp.full((1, NUM_CLASSES), bias_value, jnp.float32)
    return p


if __name__ == "__main__":
    key = jax.random.PRNGKey(0)
    pkey, xkey = jax.random.split(key)
    params = init_params(pkey)
    x = jax.random.normal(xkey, (B, CIN, IMG_H, IMG_W), dtype=jnp.float32)  # NCHW like PyTorch

    out = deformable_detr_forward(params, x)
    jax.block_until_ready(out)

    assert out["pred_logits"].shape == (B, NUM_QUERIES, NUM_CLASSES)
    assert out["pred_boxes"].shape == (B, NUM_QUERIES, 4)
    assert bool(jnp.all(jnp.isfinite(out["pred_logits"])))
    assert bool(jnp.all((out["pred_boxes"] >= 0.0) & (out["pred_boxes"] <= 1.0)))
    print("KERNEL_OK")
</pallas_src>

<mosaic_0001>
module attributes {stable_mosaic.version = 11 : i64} {
  func.func @fused_proj_kernel(%arg0: i32, %arg1: memref<512x3xf32, #tpu.memory_space<vmem>>, %arg2: memref<128x3xf32, #tpu.memory_space<vmem>>, %arg3: memref<3x64xf32, #tpu.memory_space<vmem>>, %arg4: memref<1x64xf32, #tpu.memory_space<vmem>>, %arg5: memref<64x64xf32, #tpu.memory_space<vmem>>, %arg6: memref<1x64xf32, #tpu.memory_space<vmem>>, %arg7: memref<1x64xf32, #tpu.memory_space<vmem>>, %arg8: memref<3x64xf32, #tpu.memory_space<vmem>>, %arg9: memref<1x64xf32, #tpu.memory_space<vmem>>, %arg10: memref<64x64xf32, #tpu.memory_space<vmem>>, %arg11: memref<1x64xf32, #tpu.memory_space<vmem>>, %arg12: memref<1x64xf32, #tpu.memory_space<vmem>>, %arg13: memref<2x320x64xf32, #tpu.memory_space<vmem>>) attributes {dimension_semantics = [#tpu.dimension_semantics<arbitrary>], iteration_bounds = array<i64: 1>, scalar_prefetch = 0 : i64, scratch_operands = 0 : i64, tpu.core_type = #tpu.core_type<tc>, window_params = [{pipeline_mode = #tpu.pipeline_mode<synchronous>, transform_indices = @transform_0, window_bounds = array<i64: 512, 3>}, {pipeline_mode = #tpu.pipeline_mode<synchronous>, transform_indices = @transform_1, window_bounds = array<i64: 128, 3>}, {pipeline_mode = #tpu.pipeline_mode<synchronous>, transform_indices = @transform_2, window_bounds = array<i64: 3, 64>}, {pipeline_mode = #tpu.pipeline_mode<synchronous>, transform_indices = @transform_3, window_bounds = array<i64: 1, 64>}, {pipeline_mode = #tpu.pipeline_mode<synchronous>, transform_indices = @transform_4, window_bounds = array<i64: 64, 64>}, {pipeline_mode = #tpu.pipeline_mode<synchronous>, transform_indices = @transform_5, window_bounds = array<i64: 1, 64>}, {pipeline_mode = #tpu.pipeline_mode<synchronous>, transform_indices = @transform_6, window_bounds = array<i64: 1, 64>}, {pipeline_mode = #tpu.pipeline_mode<synchronous>, transform_indices = @transform_7, window_bounds = array<i64: 3, 64>}, {pipeline_mode = #tpu.pipeline_mode<synchronous>, transform_indices = @transform_8, window_bounds = array<i64: 1, 64>}, {pipeline_mode = #tpu.pipeline_mode<synchronous>, transform_indices = @transform_9, window_bounds = array<i64: 64, 64>}, {pipeline_mode = #tpu.pipeline_mode<synchronous>, transform_indices = @transform_10, window_bounds = array<i64: 1, 64>}, {pipeline_mode = #tpu.pipeline_mode<synchronous>, transform_indices = @transform_11, window_bounds = array<i64: 1, 64>}, {pipeline_mode = #tpu.pipeline_mode<synchronous>, transform_indices = @transform_12, window_bounds = array<i64: 2, 320, 64>}]} {
    %c0 = arith.constant 0 : index
    %c0_0 = arith.constant 0 : index
    %0 = vector.load %arg1[%c0, %c0_0] : memref<512x3xf32, #tpu.memory_space<vmem>>, vector<512x3xf32>
    %c0_1 = arith.constant 0 : index
    %c0_2 = arith.constant 0 : index
    %1 = vector.load %arg3[%c0_1, %c0_2] : memref<3x64xf32, #tpu.memory_space<vmem>>, vector<3x64xf32>
    %cst = arith.constant dense<0.000000e+00> : vector<512x64xf32>
    %2 = tpu.matmul %0, %1, %cst {dimension_numbers = #tpu.dot_dimension_numbers<[1], [0], [0], [1], [0, 0, 1, 1], [], []>} : vector<512x3xf32>, vector<3x64xf32>, vector<512x64xf32> -> vector<512x64xf32>
    %c0_3 = arith.constant 0 : index
    %c0_4 = arith.constant 0 : index
    %3 = vector.load %arg4[%c0_3, %c0_4] : memref<1x64xf32, #tpu.memory_space<vmem>>, vector<1x64xf32>
    %4 = vector.broadcast %3 : vector<1x64xf32> to vector<512x64xf32>
    %5 = arith.addf %2, %4 : vector<512x64xf32>
    %6 = tpu.iota {dimensions = array<i32: 0>} : vector<2x512xi32>
    %7 = tpu.iota {dimensions = array<i32: 1>} : vector<2x512xi32>
    %c256_i32 = arith.constant 256 : i32
    %8 = vector.broadcast %c256_i32 : i32 to vector<2x512xi32>
    %9 = arith.muli %6, %8 : vector<2x512xi32>
    %10 = arith.cmpi sge, %7, %9 : vector<2x512xi32>
    %c1_i32 = arith.constant 1 : i32
    %11 = vector.broadcast %c1_i32 : i32 to vector<2x512xi32>
    %12 = arith.addi %6, %11 : vector<2x512xi32>
    %c256_i32_5 = arith.constant 256 : i32
    %13 = vector.broadcast %c256_i32_5 : i32 to vector<2x512xi32>
    %14 = arith.muli %12, %13 : vector<2x512xi32>
    %15 = arith.cmpi slt, %7, %14 : vector<2x512xi32>
    %16 = arith.andi %10, %15 : vector<2x512xi1>
    %17 = arith.extui %16 : vector<2x512xi1> to vector<2x512xi32>
    %18 = arith.sitofp %17 : vector<2x512xi32> to vector<2x512xf32>
    %cst_6 = arith.constant dense<0.000000e+00> : vector<2x64xf32>
    %19 = tpu.matmul %18, %5, %cst_6 {dimension_numbers = #tpu.dot_dimension_numbers<[1], [0], [0], [1], [0, 0, 1, 1], [], []>} : vector<2x512xf32>, vector<512x64xf32>, vector<2x64xf32> -> vector<2x64xf32>
    %20 = arith.mulf %5, %5 : vector<512x64xf32>
    %cst_7 = arith.constant dense<0.000000e+00> : vector<2x64xf32>
    %21 = tpu.matmul %18, %20, %cst_7 {dimension_numbers = #tpu.dot_dimension_numbers<[1], [0], [0], [1], [0, 0, 1, 1], [], []>} : vector<2x512xf32>, vector<512x64xf32>, vector<2x64xf32> -> vector<2x64xf32>
    %c0_8 = arith.constant 0 : index
    %c0_9 = arith.constant 0 : index
    %22 = vector.load %arg5[%c0_8, %c0_9] : memref<64x64xf32, #tpu.memory_space<vmem>>, vector<64x64xf32>
    %cst_10 = arith.constant dense<0.000000e+00> : vector<2x64xf32>
    %23 = tpu.matmul %19, %22, %cst_10 {dimension_numbers = #tpu.dot_dimension_numbers<[1], [0], [0], [1], [0, 0, 1, 1], [], []>} : vector<2x64xf32>, vector<64x64xf32>, vector<2x64xf32> -> vector<2x64xf32>
    %c0_11 = arith.constant 0 : index
    %c0_12 = arith.constant 0 : index
    %24 = vector.load %arg5[%c0_11, %c0_12] : memref<64x64xf32, #tpu.memory_space<vmem>>, vector<64x64xf32>
    %cst_13 = arith.constant dense<0.000000e+00> : vector<2x64xf32>
    %25 = tpu.matmul %21, %24, %cst_13 {dimension_numbers = #tpu.dot_dimension_numbers<[1], [0], [0], [1], [0, 0, 1, 1], [], []>} : vector<2x64xf32>, vector<64x64xf32>, vector<2x64xf32> -> vector<2x64xf32>
    %26 = arith.mulf %23, %23 : vector<2x64xf32>
    %27 = arith.subf %25, %26 : vector<2x64xf32>
    %cst_14 = arith.constant 0.000000e+00 : f32
    %28 = vector.broadcast %cst_14 : f32 to vector<2x64xf32>
    %29 = arith.maximumf %27, %28 : vector<2x64xf32>
    %cst_15 = arith.constant 9.99999974E-6 : f32
    %30 = vector.broadcast %cst_15 : f32 to vector<2x64xf32>
    %31 = arith.addf %29, %30 : vector<2x64xf32>
    %32 = math.rsqrt %31 : vector<2x64xf32>
    %c0_16 = arith.constant 0 : index
    %c0_17 = arith.constant 0 : index
    %33 = vector.load %arg6[%c0_16, %c0_17] : memref<1x64xf32, #tpu.memory_space<vmem>>, vector<1x64xf32>
    %34 = vector.broadcast %33 : vector<1x64xf32> to vector<2x64xf32>
    %35 = arith.mulf %32, %34 : vector<2x64xf32>
    %c0_18 = arith.constant 0 : index
    %c0_19 = arith.constant 0 : index
    %36 = vector.load %arg7[%c0_18, %c0_19] : memref<1x64xf32, #tpu.memory_space<vmem>>, vector<1x64xf32>
    %37 = arith.mulf %23, %35 : vector<2x64xf32>
    %38 = vector.broadcast %36 : vector<1x64xf32> to vector<2x64xf32>
    %39 = arith.subf %38, %37 : vector<2x64xf32>
    %40 = vector.shape_cast %5 : vector<512x64xf32> to vector<2x256x64xf32>
    %41 = vector.shape_cast %35 : vector<2x64xf32> to vector<2x1x64xf32>
    %42 = vector.broadcast %41 : vector<2x1x64xf32> to vector<2x256x64xf32>
    %43 = arith.mulf %40, %42 : vector<2x256x64xf32>
    %44 = vector.shape_cast %39 : vector<2x64xf32> to vector<2x1x64xf32>
    %45 = vector.broadcast %44 : vector<2x1x64xf32> to vector<2x256x64xf32>
    %46 = arith.addf %43, %45 : vector<2x256x64xf32>
    %c0_20 = arith.constant 0 : index
    %c0_21 = arith.constant 0 : index
    %c0_22 = arith.constant 0 : index
    %47 = vector.load %arg13[%c0_20, %c0_21, %c0_22] : memref<2x320x64xf32, #tpu.memory_space<vmem>>, vector<2x256x64xf32>
    tpu.vector_store %arg13[%c0_20, %c0_21, %c0_22], %46 {strides = array<i32>} : memref<2x320x64xf32, #tpu.memory_space<vmem>>, vector<2x256x64xf32>,
    %c0_23 = arith.constant 0 : index
    %c0_24 = arith.constant 0 : index
    %48 = vector.load %arg2[%c0_23, %c0_24] : memref<128x3xf32, #tpu.memory_space<vmem>>, vector<128x3xf32>
    %c0_25 = arith.constant 0 : index
    %c0_26 = arith.constant 0 : index
    %49 = vector.load %arg8[%c0_25, %c0_26] : memref<3x64xf32, #tpu.memory_space<vmem>>, vector<3x64xf32>
    %cst_27 = arith.constant dense<0.000000e+00> : vector<128x64xf32>
    %50 = tpu.matmul %48, %49, %cst_27 {dimension_numbers = #tpu.dot_dimension_numbers<[1], [0], [0], [1], [0, 0, 1, 1], [], []>} : vector<128x3xf32>, vector<3x64xf32>, vector<128x64xf32> -> vector<128x64xf32>
    %c0_28 = arith.constant 0 : index
    %c0_29 = arith.constant 0 : index
    %51 = vector.load %arg9[%c0_28, %c0_29] : memref<1x64xf32, #tpu.memory_space<vmem>>, vector<1x64xf32>
    %52 = vector.broadcast %51 : vector<1x64xf32> to vector<128x64xf32>
    %53 = arith.addf %50, %52 : vector<128x64xf32>
    %54 = tpu.iota {dimensions = array<i32: 0>} : vector<2x128xi32>
    %55 = tpu.iota {dimensions = array<i32: 1>} : vector<2x128xi32>
    %c64_i32 = arith.constant 64 : i32
    %56 = vector.broadcast %c64_i32 : i32 to vector<2x128xi32>
    %57 = arith.muli %54, %56 : vector<2x128xi32>
    %58 = arith.cmpi sge, %55, %57 : vector<2x128xi32>
    %c1_i32_30 = arith.constant 1 : i32
    %59 = vector.broadcast %c1_i32_30 : i32 to vector<2x128xi32>
    %60 = arith.addi %54, %59 : vector<2x128xi32>
    %c64_i32_31 = arith.constant 64 : i32
    %61 = vector.broadcast %c64_i32_31 : i32 to vector<2x128xi32>
    %62 = arith.muli %60, %61 : vector<2x128xi32>
    %63 = arith.cmpi slt, %55, %62 : vector<2x128xi32>
    %64 = arith.andi %58, %63 : vector<2x128xi1>
    %65 = arith.extui %64 : vector<2x128xi1> to vector<2x128xi32>
    %66 = arith.sitofp %65 : vector<2x128xi32> to vector<2x128xf32>
    %cst_32 = arith.constant dense<0.000000e+00> : vector<2x64xf32>
    %67 = tpu.matmul %66, %53, %cst_32 {dimension_numbers = #tpu.dot_dimension_numbers<[1], [0], [0], [1], [0, 0, 1, 1], [], []>} : vector<2x128xf32>, vector<128x64xf32>, vector<2x64xf32> -> vector<2x64xf32>
    %68 = arith.mulf %53, %53 : vector<128x64xf32>
    %cst_33 = arith.constant dense<0.000000e+00> : vector<2x64xf32>
    %69 = tpu.matmul %66, %68, %cst_33 {dimension_numbers = #tpu.dot_dimension_numbers<[1], [0], [0], [1], [0, 0, 1, 1], [], []>} : vector<2x128xf32>, vector<128x64xf32>, vector<2x64xf32> -> vector<2x64xf32>
    %c0_34 = arith.constant 0 : index
    %c0_35 = arith.constant 0 : index
    %70 = vector.load %arg10[%c0_34, %c0_35] : memref<64x64xf32, #tpu.memory_space<vmem>>, vector<64x64xf32>
    %cst_36 = arith.constant dense<0.000000e+00> : vector<2x64xf32>
    %71 = tpu.matmul %67, %70, %cst_36 {dimension_numbers = #tpu.dot_dimension_numbers<[1], [0], [0], [1], [0, 0, 1, 1], [], []>} : vector<2x64xf32>, vector<64x64xf32>, vector<2x64xf32> -> vector<2x64xf32>
    %c0_37 = arith.constant 0 : index
    %c0_38 = arith.constant 0 : index
    %72 = vector.load %arg10[%c0_37, %c0_38] : memref<64x64xf32, #tpu.memory_space<vmem>>, vector<64x64xf32>
    %cst_39 = arith.constant dense<0.000000e+00> : vector<2x64xf32>
    %73 = tpu.matmul %69, %72, %cst_39 {dimension_numbers = #tpu.dot_dimension_numbers<[1], [0], [0], [1], [0, 0, 1, 1], [], []>} : vector<2x64xf32>, vector<64x64xf32>, vector<2x64xf32> -> vector<2x64xf32>
    %74 = arith.mulf %71, %71 : vector<2x64xf32>
    %75 = arith.subf %73, %74 : vector<2x64xf32>
    %cst_40 = arith.constant 0.000000e+00 : f32
    %76 = vector.broadcast %cst_40 : f32 to vector<2x64xf32>
    %77 = arith.maximumf %75, %76 : vector<2x64xf32>
    %cst_41 = arith.constant 9.99999974E-6 : f32
    %78 = vector.broadcast %cst_41 : f32 to vector<2x64xf32>
    %79 = arith.addf %77, %78 : vector<2x64xf32>
    %80 = math.rsqrt %79 : vector<2x64xf32>
    %c0_42 = arith.constant 0 : index
    %c0_43 = arith.constant 0 : index
    %81 = vector.load %arg11[%c0_42, %c0_43] : memref<1x64xf32, #tpu.memory_space<vmem>>, vector<1x64xf32>
    %82 = vector.broadcast %81 : vector<1x64xf32> to vector<2x64xf32>
    %83 = arith.mulf %80, %82 : vector<2x64xf32>
    %c0_44 = arith.constant 0 : index
    %c0_45 = arith.constant 0 : index
    %84 = vector.load %arg12[%c0_44, %c0_45] : memref<1x64xf32, #tpu.memory_space<vmem>>, vector<1x64xf32>
    %85 = arith.mulf %71, %83 : vector<2x64xf32>
    %86 = vector.broadcast %84 : vector<1x64xf32> to vector<2x64xf32>
    %87 = arith.subf %86, %85 : vector<2x64xf32>
    %88 = vector.shape_cast %53 : vector<128x64xf32> to vector<2x64x64xf32>
    %89 = vector.shape_cast %83 : vector<2x64xf32> to vector<2x1x64xf32>
    %90 = vector.broadcast %89 : vector<2x1x64xf32> to vector<2x64x64xf32>
    %91 = arith.mulf %88, %90 : vector<2x64x64xf32>
    %92 = vector.shape_cast %87 : vector<2x64xf32> to vector<2x1x64xf32>
    %93 = vector.broadcast %92 : vector<2x1x64xf32> to vector<2x64x64xf32>
    %94 = arith.addf %91, %93 : vector<2x64x64xf32>
    %c0_46 = arith.constant 0 : index
    %c256 = arith.constant 256 : index
    %c0_47 = arith.constant 0 : index
    %95 = vector.load %arg13[%c0_46, %c256, %c0_47] : memref<2x320x64xf32, #tpu.memory_space<vmem>>, vector<2x64x64xf32>
    tpu.vector_store %arg13[%c0_46, %c256, %c0_47], %94 {strides = array<i32>} : memref<2x320x64xf32, #tpu.memory_space<vmem>>, vector<2x64x64xf32>,
    return
  }
  func.func @transform_0(%arg0: i32) -> (i32, i32) {
    %c0_i32 = arith.constant 0 : i32
    %c0_i32_0 = arith.constant 0 : i32
    %c0_i32_1 = arith.constant 0 : i32
    return %c0_i32, %c0_i32_0 : i32, i32
  }
  func.func @transform_1(%arg0: i32) -> (i32, i32) {
    %c0_i32 = arith.constant 0 : i32
    %c0_i32_0 = arith.constant 0 : i32
    %c0_i32_1 = arith.constant 0 : i32
    return %c0_i32, %c0_i32_0 : i32, i32
  }
  func.func @transform_2(%arg0: i32) -> (i32, i32) {
    %c0_i32 = arith.constant 0 : i32
    %c0_i32_0 = arith.constant 0 : i32
    %c0_i32_1 = arith.constant 0 : i32
    return %c0_i32, %c0_i32_0 : i32, i32
  }
  func.func @transform_3(%arg0: i32) -> (i32, i32) {
    %c0_i32 = arith.constant 0 : i32
    %c0_i32_0 = arith.constant 0 : i32
    %c0_i32_1 = arith.constant 0 : i32
    return %c0_i32, %c0_i32_0 : i32, i32
  }
  func.func @transform_4(%arg0: i32) -> (i32, i32) {
    %c0_i32 = arith.constant 0 : i32
    %c0_i32_0 = arith.constant 0 : i32
    %c0_i32_1 = arith.constant 0 : i32
    return %c0_i32, %c0_i32_0 : i32, i32
  }
  func.func @transform_5(%arg0: i32) -> (i32, i32) {
    %c0_i32 = arith.constant 0 : i32
    %c0_i32_0 = arith.constant 0 : i32
    %c0_i32_1 = arith.constant 0 : i32
    return %c0_i32, %c0_i32_0 : i32, i32
  }
  func.func @transform_6(%arg0: i32) -> (i32, i32) {
    %c0_i32 = arith.constant 0 : i32
    %c0_i32_0 = arith.constant 0 : i32
    %c0_i32_1 = arith.constant 0 : i32
    return %c0_i32, %c0_i32_0 : i32, i32
  }
  func.func @transform_7(%arg0: i32) -> (i32, i32) {
    %c0_i32 = arith.constant 0 : i32
    %c0_i32_0 = arith.constant 0 : i32
    %c0_i32_1 = arith.constant 0 : i32
    return %c0_i32, %c0_i32_0 : i32, i32
  }
  func.func @transform_8(%arg0: i32) -> (i32, i32) {
    %c0_i32 = arith.constant 0 : i32
    %c0_i32_0 = arith.constant 0 : i32
    %c0_i32_1 = arith.constant 0 : i32
    return %c0_i32, %c0_i32_0 : i32, i32
  }
  func.func @transform_9(%arg0: i32) -> (i32, i32) {
    %c0_i32 = arith.constant 0 : i32
    %c0_i32_0 = arith.constant 0 : i32
    %c0_i32_1 = arith.constant 0 : i32
    return %c0_i32, %c0_i32_0 : i32, i32
  }
  func.func @transform_10(%arg0: i32) -> (i32, i32) {
    %c0_i32 = arith.constant 0 : i32
    %c0_i32_0 = arith.constant 0 : i32
    %c0_i32_1 = arith.constant 0 : i32
    return %c0_i32, %c0_i32_0 : i32, i32
  }
  func.func @transform_11(%arg0: i32) -> (i32, i32) {
    %c0_i32 = arith.constant 0 : i32
    %c0_i32_0 = arith.constant 0 : i32
    %c0_i32_1 = arith.constant 0 : i32
    return %c0_i32, %c0_i32_0 : i32, i32
  }
  func.func @transform_12(%arg0: i32) -> (i32, i32, i32) {
    %c0_i32 = arith.constant 0 : i32
    %c0_i32_0 = arith.constant 0 : i32
    %c0_i32_1 = arith.constant 0 : i32
    %c0_i32_2 = arith.constant 0 : i32
    return %c0_i32, %c0_i32_0, %c0_i32_1 : i32, i32, i32
  }
}

module attributes {stable_mosaic.version = 11 : i64} {
  func.func @head_kernel(%arg0: i32, %arg1: memref<48x64xf32, #tpu.memory_space<vmem>>, %arg2: memref<48x128xf32, #tpu.memory_space<vmem>>, %arg3: memref<64x64xf32, #tpu.memory_space<vmem>>, %arg4: memref<1x64xf32, #tpu.memory_space<vmem>>, %arg5: memref<64x64xf32, #tpu.memory_space<vmem>>, %arg6: memref<1x64xf32, #tpu.memory_space<vmem>>, %arg7: memref<128x128xf32, #tpu.memory_space<vmem>>, %arg8: memref<48x128xf32, #tpu.memory_space<vmem>>) attributes {dimension_semantics = [#tpu.dimension_semantics<arbitrary>], iteration_bounds = array<i64: 1>, scalar_prefetch = 0 : i64, scratch_operands = 0 : i64, tpu.core_type = #tpu.core_type<tc>, window_params = [{pipeline_mode = #tpu.pipeline_mode<synchronous>, transform_indices = @transform_0, window_bounds = array<i64: 48, 64>}, {pipeline_mode = #tpu.pipeline_mode<synchronous>, transform_indices = @transform_1, window_bounds = array<i64: 48, 128>}, {pipeline_mode = #tpu.pipeline_mode<synchronous>, transform_indices = @transform_2, window_bounds = array<i64: 64, 64>}, {pipeline_mode = #tpu.pipeline_mode<synchronous>, transform_indices = @transform_3, window_bounds = array<i64: 1, 64>}, {pipeline_mode = #tpu.pipeline_mode<synchronous>, transform_indices = @transform_4, window_bounds = array<i64: 64, 64>}, {pipeline_mode = #tpu.pipeline_mode<synchronous>, transform_indices = @transform_5, window_bounds = array<i64: 1, 64>}, {pipeline_mode = #tpu.pipeline_mode<synchronous>, transform_indices = @transform_6, window_bounds = array<i64: 128, 128>}, {pipeline_mode = #tpu.pipeline_mode<synchronous>, transform_indices = @transform_7, window_bounds = array<i64: 48, 128>}]} {
    %c0 = arith.constant 0 : index
    %c0_0 = arith.constant 0 : index
    %0 = vector.load %arg1[%c0, %c0_0] : memref<48x64xf32, #tpu.memory_space<vmem>>, vector<48x64xf32>
    %c0_1 = arith.constant 0 : index
    %c0_2 = arith.constant 0 : index
    %1 = vector.load %arg3[%c0_1, %c0_2] : memref<64x64xf32, #tpu.memory_space<vmem>>, vector<64x64xf32>
    %cst = arith.constant dense<0.000000e+00> : vector<48x64xf32>
    %2 = tpu.matmul %0, %1, %cst {dimension_numbers = #tpu.dot_dimension_numbers<[1], [0], [0], [1], [0, 0, 1, 1], [], []>} : vector<48x64xf32>, vector<64x64xf32>, vector<48x64xf32> -> vector<48x64xf32>
    %c0_3 = arith.constant 0 : index
    %c0_4 = arith.constant 0 : index
    %3 = vector.load %arg4[%c0_3, %c0_4] : memref<1x64xf32, #tpu.memory_space<vmem>>, vector<1x64xf32>
    %4 = vector.broadcast %3 : vector<1x64xf32> to vector<48x64xf32>
    %5 = arith.addf %2, %4 : vector<48x64xf32>
    %cst_5 = arith.constant 0.000000e+00 : f32
    %6 = vector.broadcast %cst_5 : f32 to vector<48x64xf32>
    %7 = arith.maximumf %5, %6 : vector<48x64xf32>
    %c0_6 = arith.constant 0 : index
    %c0_7 = arith.constant 0 : index
    %8 = vector.load %arg5[%c0_6, %c0_7] : memref<64x64xf32, #tpu.memory_space<vmem>>, vector<64x64xf32>
    %cst_8 = arith.constant dense<0.000000e+00> : vector<48x64xf32>
    %9 = tpu.matmul %7, %8, %cst_8 {dimension_numbers = #tpu.dot_dimension_numbers<[1], [0], [0], [1], [0, 0, 1, 1], [], []>} : vector<48x64xf32>, vector<64x64xf32>, vector<48x64xf32> -> vector<48x64xf32>
    %c0_9 = arith.constant 0 : index
    %c0_10 = arith.constant 0 : index
    %10 = vector.load %arg6[%c0_9, %c0_10] : memref<1x64xf32, #tpu.memory_space<vmem>>, vector<1x64xf32>
    %11 = vector.broadcast %10 : vector<1x64xf32> to vector<48x64xf32>
    %12 = arith.addf %9, %11 : vector<48x64xf32>
    %cst_11 = arith.constant 0.000000e+00 : f32
    %13 = vector.broadcast %cst_11 : f32 to vector<48x64xf32>
    %14 = arith.maximumf %12, %13 : vector<48x64xf32>
    %15 = tpu.concatenate %14, %0 in 1 : vector<48x64xf32>, vector<48x64xf32> -> vector<48x128xf32>
    %c0_12 = arith.constant 0 : index
    %c0_13 = arith.constant 0 : index
    %16 = vector.load %arg7[%c0_12, %c0_13] : memref<128x128xf32, #tpu.memory_space<vmem>>, vector<128x128xf32>
    %cst_14 = arith.constant dense<0.000000e+00> : vector<48x128xf32>
    %17 = tpu.matmul %15, %16, %cst_14 {dimension_numbers = #tpu.dot_dimension_numbers<[1], [0], [0], [1], [0, 0, 1, 1], [], []>} : vector<48x128xf32>, vector<128x128xf32>, vector<48x128xf32> -> vector<48x128xf32>
    %c0_15 = arith.constant 0 : index
    %c0_16 = arith.constant 0 : index
    %18 = vector.load %arg2[%c0_15, %c0_16] : memref<48x128xf32, #tpu.memory_space<vmem>>, vector<48x128xf32>
    %19 = arith.addf %17, %18 : vector<48x128xf32>
    %20 = tpu.iota {dimensions = array<i32: 1>} : vector<48x128xi32>
    %c4_i32 = arith.constant 4 : i32
    %21 = vector.broadcast %c4_i32 : i32 to vector<48x128xi32>
    %22 = arith.cmpi slt, %20, %21 : vector<48x128xi32>
    %23 = arith.negf %19 : vector<48x128xf32>
    %24 = math.exp %23 : vector<48x128xf32>
    %cst_17 = arith.constant 1.000000e+00 : f32
    %25 = vector.broadcast %cst_17 : f32 to vector<48x128xf32>
    %26 = arith.addf %25, %24 : vector<48x128xf32>
    %27 = arith.divf %25, %26 : vector<48x128xf32>
    %28 = arith.select %22, %27, %19 : vector<48x128xi1>, vector<48x128xf32>
    %c0_18 = arith.constant 0 : index
    %c0_19 = arith.constant 0 : index
    %29 = vector.load %arg8[%c0_18, %c0_19] : memref<48x128xf32, #tpu.memory_space<vmem>>, vector<48x128xf32>
    tpu.vector_store %arg8[%c0_18, %c0_19], %28 {strides = array<i32>} : memref<48x128xf32, #tpu.memory_space<vmem>>, vector<48x128xf32>,
    return
  }
  func.func @transform_0(%arg0: i32) -> (i32, i32) {
    %c0_i32 = arith.constant 0 : i32
    %c0_i32_0 = arith.constant 0 : i32
    %c0_i32_1 = arith.constant 0 : i32
    return %c0_i32, %c0_i32_0 : i32, i32
  }
  func.func @transform_1(%arg0: i32) -> (i32, i32) {
    %c0_i32 = arith.constant 0 : i32
    %c0_i32_0 = arith.constant 0 : i32
    %c0_i32_1 = arith.constant 0 : i32
    return %c0_i32, %c0_i32_0 : i32, i32
  }
  func.func @transform_2(%arg0: i32) -> (i32, i32) {
    %c0_i32 = arith.constant 0 : i32
    %c0_i32_0 = arith.constant 0 : i32
    %c0_i32_1 = arith.constant 0 : i32
    return %c0_i32, %c0_i32_0 : i32, i32
  }
  func.func @transform_3(%arg0: i32) -> (i32, i32) {
    %c0_i32 = arith.constant 0 : i32
    %c0_i32_0 = arith.constant 0 : i32
    %c0_i32_1 = arith.constant 0 : i32
    return %c0_i32, %c0_i32_0 : i32, i32
  }
  func.func @transform_4(%arg0: i32) -> (i32, i32) {
    %c0_i32 = arith.constant 0 : i32
    %c0_i32_0 = arith.constant 0 : i32
    %c0_i32_1 = arith.constant 0 : i32
    return %c0_i32, %c0_i32_0 : i32, i32
  }
  func.func @transform_5(%arg0: i32) -> (i32, i32) {
    %c0_i32 = arith.constant 0 : i32
    %c0_i32_0 = arith.constant 0 : i32
    %c0_i32_1 = arith.constant 0 : i32
    return %c0_i32, %c0_i32_0 : i32, i32
  }
  func.func @transform_6(%arg0: i32) -> (i32, i32) {
    %c0_i32 = arith.constant 0 : i32
    %c0_i32_0 = arith.constant 0 : i32
    %c0_i32_1 = arith.constant 0 : i32
    return %c0_i32, %c0_i32_0 : i32, i32
  }
  func.func @transform_7(%arg0: i32) -> (i32, i32) {
    %c0_i32 = arith.constant 0 : i32
    %c0_i32_0 = arith.constant 0 : i32
    %c0_i32_1 = arith.constant 0 : i32
    return %c0_i32, %c0_i32_0 : i32, i32
  }
}

</mosaic_0001>

<llo_original>
// kernel: deformable_detr_forward.2
$region0: #{deformable_detr_forward.2}
  #allocation0 [shape = 'u32[]', space=smem, size = 0x4, offset = 0x4, fixed_abs, tag = 'smem constant byte address 0x4 - core index']
  #allocation1 [shape = 'u32[144,128]{1,0:T(1,128)}', space=vmem, size = 0x12000, scoped, tag = 'internal scratch']
  %s0 = inlined_call_operand.vmem [shape: f32[512,3], index: 0, kind: input, shape index: {}]
  %s1 = inlined_call_operand.vmem [shape: f32[128,3], index: 1, kind: input, shape index: {}]
  %s2 = inlined_call_operand.vmem [shape: f32[3,64], index: 2, kind: input, shape index: {}]
  %s3 = inlined_call_operand.vmem [shape: f32[1,64], index: 3, kind: input, shape index: {}]
  %s4 = inlined_call_operand.vmem [shape: f32[64,64], index: 4, kind: input, shape index: {}]
  %s5 = inlined_call_operand.vmem [shape: f32[1,64], index: 5, kind: input, shape index: {}]
  %s6 = inlined_call_operand.vmem [shape: f32[1,64], index: 6, kind: input, shape index: {}]
  %s7 = inlined_call_operand.vmem [shape: f32[3,64], index: 7, kind: input, shape index: {}]
  %s8 = inlined_call_operand.vmem [shape: f32[1,64], index: 8, kind: input, shape index: {}]
  %s9 = inlined_call_operand.vmem [shape: f32[64,64], index: 9, kind: input, shape index: {}]
  %s10 = inlined_call_operand.vmem [shape: f32[1,64], index: 10, kind: input, shape index: {}]
  %s11 = inlined_call_operand.vmem [shape: f32[1,64], index: 11, kind: input, shape index: {}]
  %s12 = inlined_call_operand.vmem [shape: f32[2,320,64], index: 12, kind: output, shape index: {}]
  %s13 = sld [smem:[#allocation0]]
  $region58: #{deformable_detr_forward.2} parent=0
    _
  %s15 = ssub.s32 1, %s13
  %s16 = scalar_select 0, %s15, %s13
  // Predicated region
  $region2: #{deformable_detr_forward.2} parent=0 // pred_check
    _
  $region3: #{deformable_detr_forward.2} parent=0 // pred_check_branch
    %18 = sbr.rel (0) target = $region5
  $region4: #{deformable_detr_forward.2} parent=0 // pred_region
    _
  $region5: #{deformable_detr_forward.2} parent=0 // pred_fallthru
    _
  // Predicated region
  $region6: #{deformable_detr_forward.2} parent=0 // pred_check
    _
  $region7: #{deformable_detr_forward.2} parent=0 // pred_check_branch
    %20 = sbr.rel (0) target = $region9
  $region8: #{deformable_detr_forward.2} parent=0 // pred_region
    _
  $region9: #{deformable_detr_forward.2} parent=0 // pred_fallthru
    _
  // Predicated region
  $region10: #{deformable_detr_forward.2} parent=0 // pred_check
    _
  $region11: #{deformable_detr_forward.2} parent=0 // pred_check_branch
    %22 = sbr.rel (0) target = $region13
  $region12: #{deformable_detr_forward.2} parent=0 // pred_region
    _
  $region13: #{deformable_detr_forward.2} parent=0 // pred_fallthru
    _
  // Predicated region
  $region14: #{deformable_detr_forward.2} parent=0 // pred_check
    _
  $region15: #{deformable_detr_forward.2} parent=0 // pred_check_branch
    %24 = sbr.rel (0) target = $region17
  $region16: #{deformable_detr_forward.2} parent=0 // pred_region
    _
  $region17: #{deformable_detr_forward.2} parent=0 // pred_fallthru
    _
  // Predicated region
  $region18: #{deformable_detr_forward.2} parent=0 // pred_check
    _
  $region19: #{deformable_detr_forward.2} parent=0 // pred_check_branch
    %26 = sbr.rel (0) target = $region21
  $region20: #{deformable_detr_forward.2} parent=0 // pred_region
    _
  $region21: #{deformable_detr_forward.2} parent=0 // pred_fallthru
    _
  // Predicated region
  $region22: #{deformable_detr_forward.2} parent=0 // pred_check
    _
  $region23: #{deformable_detr_forward.2} parent=0 // pred_check_branch
    %28 = sbr.rel (0) target = $region25
  $region24: #{deformable_detr_forward.2} parent=0 // pred_region
    _
  $region25: #{deformable_detr_forward.2} parent=0 // pred_fallthru
    _
  // Predicated region
  $region26: #{deformable_detr_forward.2} parent=0 // pred_check
    _
  $region27: #{deformable_detr_forward.2} parent=0 // pred_check_branch
    %30 = sbr.rel (0) target = $region29
  $region28: #{deformable_detr_forward.2} parent=0 // pred_region
    _
  $region29: #{deformable_detr_forward.2} parent=0 // pred_fallthru
    _
  // Predicated region
  $region30: #{deformable_detr_forward.2} parent=0 // pred_check
    _
  $region31: #{deformable_detr_forward.2} parent=0 // pred_check_branch
    %32 = sbr.rel (0) target = $region33
  $region32: #{deformable_detr_forward.2} parent=0 // pred_region
    _
  $region33: #{deformable_detr_forward.2} parent=0 // pred_fallthru
    _
  // Predicated region
  $region34: #{deformable_detr_forward.2} parent=0 // pred_check
    _
  $region35: #{deformable_detr_forward.2} parent=0 // pred_check_branch
    %34 = sbr.rel (0) target = $region37
  $region36: #{deformable_detr_forward.2} parent=0 // pred_region
    _
  $region37: #{deformable_detr_forward.2} parent=0 // pred_fallthru
    _
  // Predicated region
  $region38: #{deformable_detr_forward.2} parent=0 // pred_check
    _
  $region39: #{deformable_detr_forward.2} parent=0 // pred_check_branch
    %36 = sbr.rel (0) target = $region41
  $region40: #{deformable_detr_forward.2} parent=0 // pred_region
    _
  $region41: #{deformable_detr_forward.2} parent=0 // pred_fallthru
    _
  // Predicated region
  $region42: #{deformable_detr_forward.2} parent=0 // pred_check
    _
  $region43: #{deformable_detr_forward.2} parent=0 // pred_check_branch
    %38 = sbr.rel (0) target = $region45
  $region44: #{deformable_detr_forward.2} parent=0 // pred_region
    _
  $region45: #{deformable_detr_forward.2} parent=0 // pred_fallthru
    _
  // Predicated region
  $region46: #{deformable_detr_forward.2} parent=0 // pred_check
    _
  $region47: #{deformable_detr_forward.2} parent=0 // pred_check_branch
    %40 = sbr.rel (0) target = $region49
  $region48: #{deformable_detr_forward.2} parent=0 // pred_region
    _
  $region49: #{deformable_detr_forward.2} parent=0 // pred_fallthru
    _
  %v41 = vld [vmem:[%s0] sm:$0xff]
  %v42 = vld [vmem:[%s0 + $0x8] sm:$0xff]
  %v43 = vld [vmem:[%s0 + $0x10] sm:$0xff]
  %v44 = vld [vmem:[%s0 + $0x18] sm:$0xff]
  %v45 = vld [vmem:[%s0 + $0x20] sm:$0xff]
  %v46 = vld [vmem:[%s0 + $0x28] sm:$0xff]
  %v47 = vld [vmem:[%s0 + $0x30] sm:$0xff]
  %v48 = vld [vmem:[%s0 + $0x38] sm:$0xff]
  %v49 = vld [vmem:[%s0 + $0x40] sm:$0xff]
  %v50 = vld [vmem:[%s0 + $0x48] sm:$0xff]
  %v51 = vld [vmem:[%s0 + $0x50] sm:$0xff]
  %v52 = vld [vmem:[%s0 + $0x58] sm:$0xff]
  %v53 = vld [vmem:[%s0 + $0x60] sm:$0xff]
  %v54 = vld [vmem:[%s0 + $0x68] sm:$0xff]
  %v55 = vld [vmem:[%s0 + $0x70] sm:$0xff]
  %v56 = vld [vmem:[%s0 + $0x78] sm:$0xff]
  %v57 = vld [vmem:[%s0 + $0x80] sm:$0xff]
  %v58 = vld [vmem:[%s0 + $0x88] sm:$0xff]
  %v59 = vld [vmem:[%s0 + $0x90] sm:$0xff]
  %v60 = vld [vmem:[%s0 + $0x98] sm:$0xff]
  %v61 = vld [vmem:[%s0 + $0xa0] sm:$0xff]
  %v62 = vld [vmem:[%s0 + $0xa8] sm:$0xff]
  %v63 = vld [vmem:[%s0 + $0xb0] sm:$0xff]
  %v64 = vld [vmem:[%s0 + $0xb8] sm:$0xff]
  %v65 = vld [vmem:[%s0 + $0xc0] sm:$0xff]
  %v66 = vld [vmem:[%s0 + $0xc8] sm:$0xff]
  %v67 = vld [vmem:[%s0 + $0xd0] sm:$0xff]
  %v68 = vld [vmem:[%s0 + $0xd8] sm:$0xff]
  %v69 = vld [vmem:[%s0 + $0xe0] sm:$0xff]
  %v70 = vld [vmem:[%s0 + $0xe8] sm:$0xff]
  %v71 = vld [vmem:[%s0 + $0xf0] sm:$0xff]
  %v72 = vld [vmem:[%s0 + $0xf8] sm:$0xff]
  %v73 = vld [vmem:[%s0 + $0x100] sm:$0xff]
  %v74 = vld [vmem:[%s0 + $0x108] sm:$0xff]
  %v75 = vld [vmem:[%s0 + $0x110] sm:$0xff]
  %v76 = vld [vmem:[%s0 + $0x118] sm:$0xff]
  %v77 = vld [vmem:[%s0 + $0x120] sm:$0xff]
  %v78 = vld [vmem:[%s0 + $0x128] sm:$0xff]
  %v79 = vld [vmem:[%s0 + $0x130] sm:$0xff]
  %v80 = vld [vmem:[%s0 + $0x138] sm:$0xff]
  %v81 = vld [vmem:[%s0 + $0x140] sm:$0xff]
  %v82 = vld [vmem:[%s0 + $0x148] sm:$0xff]
  %v83 = vld [vmem:[%s0 + $0x150] sm:$0xff]
  %v84 = vld [vmem:[%s0 + $0x158] sm:$0xff]
  %v85 = vld [vmem:[%s0 + $0x160] sm:$0xff]
  %v86 = vld [vmem:[%s0 + $0x168] sm:$0xff]
  %v87 = vld [vmem:[%s0 + $0x170] sm:$0xff]
  %v88 = vld [vmem:[%s0 + $0x178] sm:$0xff]
  %v89 = vld [vmem:[%s0 + $0x180] sm:$0xff]
  %v90 = vld [vmem:[%s0 + $0x188] sm:$0xff]
  %v91 = vld [vmem:[%s0 + $0x190] sm:$0xff]
  %v92 = vld [vmem:[%s0 + $0x198] sm:$0xff]
  %v93 = vld [vmem:[%s0 + $0x1a0] sm:$0xff]
  %v94 = vld [vmem:[%s0 + $0x1a8] sm:$0xff]
  %v95 = vld [vmem:[%s0 + $0x1b0] sm:$0xff]
  %v96 = vld [vmem:[%s0 + $0x1b8] sm:$0xff]
  %v97 = vld [vmem:[%s0 + $0x1c0] sm:$0xff]
  %v98 = vld [vmem:[%s0 + $0x1c8] sm:$0xff]
  %v99 = vld [vmem:[%s0 + $0x1d0] sm:$0xff]
  %v100 = vld [vmem:[%s0 + $0x1d8] sm:$0xff]
  %v101 = vld [vmem:[%s0 + $0x1e0] sm:$0xff]
  %v102 = vld [vmem:[%s0 + $0x1e8] sm:$0xff]
  %v103 = vld [vmem:[%s0 + $0x1f0] sm:$0xff]
  %v104 = vld [vmem:[%s0 + $0x1f8] sm:$0xff]
  %v105 = vld [vmem:[%s2] sm:$0x7]
  %v106 = vld [vmem:[%s3] sm:$0x1]
  %v108 = vlaneseq
  %v109 = vshrl.u32 %v108, 7
  %v110 = vsub.s32 0, %v109
  %v111 = vrot.slane %v106, %v110
  %vm113 = vcmask 23552
  %v115 = vsel %vm113, %v41, 0
  %v118 = vsel %vm113, %v42, 0
  %v121 = vsel %vm113, %v43, 0
  %v124 = vsel %vm113, %v44, 0
  %v127 = vsel %vm113, %v45, 0
  %v130 = vsel %vm113, %v46, 0
  %v133 = vsel %vm113, %v47, 0
  %v136 = vsel %vm113, %v48, 0
  %v139 = vsel %vm113, %v49, 0
  %v142 = vsel %vm113, %v50, 0
  %v145 = vsel %vm113, %v51, 0
  %v148 = vsel %vm113, %v52, 0
  %v151 = vsel %vm113, %v53, 0
  %v154 = vsel %vm113, %v54, 0
  %v157 = vsel %vm113, %v55, 0
  %v160 = vsel %vm113, %v56, 0
  %v163 = vsel %vm113, %v57, 0
  %v166 = vsel %vm113, %v58, 0
  %v169 = vsel %vm113, %v59, 0
  %v172 = vsel %vm113, %v60, 0
  %v175 = vsel %vm113, %v61, 0
  %v178 = vsel %vm113, %v62, 0
  %v181 = vsel %vm113, %v63, 0
  %v184 = vsel %vm113, %v64, 0
  %v187 = vsel %vm113, %v65, 0
  %v190 = vsel %vm113, %v66, 0
  %v193 = vsel %vm113, %v67, 0
  %v196 = vsel %vm113, %v68, 0
  %v199 = vsel %vm113, %v69, 0
  %v202 = vsel %vm113, %v70, 0
  %v205 = vsel %vm113, %v71, 0
  %v208 = vsel %vm113, %v72, 0
  %v211 = vsel %vm113, %v73, 0
  %v214 = vsel %vm113, %v74, 0
  %v217 = vsel %vm113, %v75, 0
  %v220 = vsel %vm113, %v76, 0
  %v223 = vsel %vm113, %v77, 0
  %v226 = vsel %vm113, %v78, 0
  %v229 = vsel %vm113, %v79, 0
  %v232 = vsel %vm113, %v80, 0
  %v235 = vsel %vm113, %v81, 0
  %v238 = vsel %vm113, %v82, 0
  %v241 = vsel %vm113, %v83, 0
  %v244 = vsel %vm113, %v84, 0
  %v247 = vsel %vm113, %v85, 0
  %v250 = vsel %vm113, %v86, 0
  %v253 = vsel %vm113, %v87, 0
  %v256 = vsel %vm113, %v88, 0
  %v259 = vsel %vm113, %v89, 0
  %v262 = vsel %vm113, %v90, 0
  %v265 = vsel %vm113, %v91, 0
  %v268 = vsel %vm113, %v92, 0
  %v271 = vsel %vm113, %v93, 0
  %v274 = vsel %vm113, %v94, 0
  %v277 = vsel %vm113, %v95, 0
  %v280 = vsel %vm113, %v96, 0
  %v283 = vsel %vm113, %v97, 0
  %v286 = vsel %vm113, %v98, 0
  %v289 = vsel %vm113, %v99, 0
  %v292 = vsel %vm113, %v100, 0
  %v295 = vsel %vm113, %v101, 0
  %v298 = vsel %vm113, %v102, 0
  %v301 = vsel %vm113, %v103, 0
  %v304 = vsel %vm113, %v104, 0
  %vm306 = vcmask 1042432
  %v308 = vsel %vm306, %v105, 0
  %310 = vmatprep.subr.mxu0 0.0
  %311 = vmatpush1.msra.mxu0 %v308
  %312 = vmatprep.subr.mxu0 0.0
  %313 = vmatpush1.msra.mxu0 0.0
  %314 = vmatprep.subr.mxu0 0.0
  %315 = vmatpush1.msra.mxu0 0.0
  %316 = vmatprep.subr.mxu0 0.0
  %317 = vmatpush1.msra.mxu0 0.0
  %318 = vmatprep.subr.mxu0 0.0
  %319 = vmatpush1.msra.mxu0 0.0
  %320 = vmatprep.subr.mxu0 0.0
  %321 = vmatpush1.msra.mxu0 0.0
  %322 = vmatprep.subr.mxu0 0.0
  %323 = vmatpush1.msra.mxu0 0.0
  %324 = vmatprep.subr.mxu0 0.0
  %325 = vmatpush1.msra.mxu0 0.0
  %326 = vmatprep.subr.mxu0 0.0
  %327 = vmatpush1.msra.mxu0 0.0
  %328 = vmatprep.subr.mxu0 0.0
  %329 = vmatpush1.msra.mxu0 0.0
  %330 = vmatprep.subr.mxu0 0.0
  %331 = vmatpush1.msra.mxu0 0.0
  %332 = vmatprep.subr.mxu0 0.0
  %333 = vmatpush1.msra.mxu0 0.0
  %334 = vmatprep.subr.mxu0 0.0
  %335 = vmatpush1.msra.mxu0 0.0
  %336 = vmatprep.subr.mxu0 0.0
  %337 = vmatpush1.msra.mxu0 0.0
  %338 = vmatprep.subr.mxu0 0.0
  %339 = vmatpush1.msra.mxu0 0.0
  %340 = vmatprep.subr.mxu0 0.0
  %341 = vmatpush1.msra.mxu0 0.0
  %342 = vmatprep.subr.mxu0 0.0
  %343 = vmatpush1.msra.mxu0 0.0
  %344 = vmatprep.subr.mxu0 0.0
  %345 = vmatpush1.msra.mxu0 0.0
  %346 = vmatprep.subr.mxu0 0.0
  %347 = vmatpush1.msra.mxu0 0.0
  %348 = vmatprep.subr.mxu0 0.0
  %349 = vmatpush1.msra.mxu0 0.0
  %350 = vmatprep.subr.mxu0 0.0
  %351 = vmatpush1.msra.mxu0 0.0
  %352 = vmatprep.subr.mxu0 0.0
  %353 = vmatpush1.msra.mxu0 0.0
  %354 = vmatprep.subr.mxu0 0.0
  %355 = vmatpush1.msra.mxu0 0.0
  %356 = vmatprep.subr.mxu0 0.0
  %357 = vmatpush1.msra.mxu0 0.0
  %358 = vmatprep.subr.mxu0 0.0
  %359 = vmatpush1.msra.mxu0 0.0
  %360 = vmatprep.subr.mxu0 0.0
  %361 = vmatpush1.msra.mxu0 0.0
  %362 = vmatprep.subr.mxu0 0.0
  %363 = vmatpush1.msra.mxu0 0.0
  %364 = vmatprep.subr.mxu0 0.0
  %365 = vmatpush1.msra.mxu0 0.0
  %366 = vmatprep.subr.mxu0 0.0
  %367 = vmatpush1.msra.mxu0 0.0
  %368 = vmatprep.subr.mxu0 0.0
  %369 = vmatpush1.msra.mxu0 0.0
  %370 = vmatprep.subr.mxu0 0.0
  %371 = vmatpush1.msra.mxu0 0.0
  %372 = vmatprep.subr.mxu0 0.0
  %373 = vmatpush1.msra.mxu0 0.0
  %374 = vmatprep.mubr.f32.mxu0 0.0
  %375 = vmatmul.mubr.f32.gmra.mrb[0].mxu0 %v115
  %v376 = vpop.f32.mrb[0].mxu0
  %v377 = vadd.f32 %v111, %v376
  %v378 = vpop.f32.mrb[0].mxu0
  %379 = vmatprep.mubr.f32.mxu0 0.0
  %380 = vmatmul.mubr.f32.gmra.mrb[0].mxu0 %v118
  %v381 = vpop.f32.mrb[0].mxu0
  %v382 = vadd.f32 %v111, %v381
  %v383 = vpop.f32.mrb[0].mxu0
  %384 = vmatprep.mubr.f32.mxu0 0.0
  %385 = vmatmul.mubr.f32.gmra.mrb[0].mxu0 %v121
  %v386 = vpop.f32.mrb[0].mxu0
  %v387 = vadd.f32 %v111, %v386
  %v388 = vpop.f32.mrb[0].mxu0
  %389 = vmatprep.mubr.f32.mxu0 0.0
  %390 = vmatmul.mubr.f32.gmra.mrb[0].mxu0 %v124
  %v391 = vpop.f32.mrb[0].mxu0
  %v392 = vadd.f32 %v111, %v391
  %v393 = vpop.f32.mrb[0].mxu0
  %394 = vmatprep.mubr.f32.mxu0 0.0
  %395 = vmatmul.mubr.f32.gmra.mrb[0].mxu0 %v127
  %v396 = vpop.f32.mrb[0].mxu0
  %v397 = vadd.f32 %v111, %v396
  %v398 = vpop.f32.mrb[0].mxu0
  %399 = vmatprep.mubr.f32.mxu0 0.0
  %400 = vmatmul.mubr.f32.gmra.mrb[0].mxu0 %v130
  %v401 = vpop.f32.mrb[0].mxu0
  %v402 = vadd.f32 %v111, %v401
  %v403 = vpop.f32.mrb[0].mxu0
  %404 = vmatprep.mubr.f32.mxu0 0.0
  %405 = vmatmul.mubr.f32.gmra.mrb[0].mxu0 %v133
  %v406 = vpop.f32.mrb[0].mxu0
  %v407 = vadd.f32 %v111, %v406
  %v408 = vpop.f32.mrb[0].mxu0
  %409 = vmatprep.mubr.f32.mxu0 0.0
  %410 = vmatmul.mubr.f32.gmra.mrb[0].mxu0 %v136
  %v411 = vpop.f32.mrb[0].mxu0
  %v412 = vadd.f32 %v111, %v411
  %v413 = vpop.f32.mrb[0].mxu0
  %414 = vmatprep.mubr.f32.mxu0 0.0
  %415 = vmatmul.mubr.f32.gmra.mrb[0].mxu0 %v139
  %v416 = vpop.f32.mrb[0].mxu0
  %v417 = vadd.f32 %v111, %v416
  %v418 = vpop.f32.mrb[0].mxu0
  %419 = vmatprep.mubr.f32.mxu0 0.0
  %420 = vmatmul.mubr.f32.gmra.mrb[0].mxu0 %v142
  %v421 = vpop.f32.mrb[0].mxu0
  %v422 = vadd.f32 %v111, %v421
  %v423 = vpop.f32.mrb[0].mxu0
  %424 = vmatprep.mubr.f32.mxu0 0.0
  %425 = vmatmul.mubr.f32.gmra.mrb[0].mxu0 %v145
  %v426 = vpop.f32.mrb[0].mxu0
  %v427 = vadd.f32 %v111, %v426
  %v428 = vpop.f32.mrb[0].mxu0
  %429 = vmatprep.mubr.f32.mxu0 0.0
  %430 = vmatmul.mubr.f32.gmra.mrb[0].mxu0 %v148
  %v431 = vpop.f32.mrb[0].mxu0
  %v432 = vadd.f32 %v111, %v431
  %v433 = vpop.f32.mrb[0].mxu0
  %434 = vmatprep.mubr.f32.mxu0 0.0
  %435 = vmatmul.mubr.f32.gmra.mrb[0].mxu0 %v151
  %v436 = vpop.f32.mrb[0].mxu0
  %v437 = vadd.f32 %v111, %v436
  %v438 = vpop.f32.mrb[0].mxu0
  %439 = vmatprep.mubr.f32.mxu0 0.0
  %440 = vmatmul.mubr.f32.gmra.mrb[0].mxu0 %v154
  %v441 = vpop.f32.mrb[0].mxu0
  %v442 = vadd.f32 %v111, %v441
  %v443 = vpop.f32.mrb[0].mxu0
  %444 = vmatprep.mubr.f32.mxu0 0.0
  %445 = vmatmul.mubr.f32.gmra.mrb[0].mxu0 %v157
  %v446 = vpop.f32.mrb[0].mxu0
  %v447 = vadd.f32 %v111, %v446
  %v448 = vpop.f32.mrb[0].mxu0
  %449 = vmatprep.mubr.f32.mxu0 0.0
  %450 = vmatmul.mubr.f32.gmra.mrb[0].mxu0 %v160
  %v451 = vpop.f32.mrb[0].mxu0
  %v452 = vadd.f32 %v111, %v451
  %v453 = vpop.f32.mrb[0].mxu0
  %454 = vmatprep.mubr.f32.mxu0 0.0
  %455 = vmatmul.mubr.f32.gmra.mrb[0].mxu0 %v163
  %v456 = vpop.f32.mrb[0].mxu0
  %v457 = vadd.f32 %v111, %v456
  %v458 = vpop.f32.mrb[0].mxu0
  %459 = vmatprep.mubr.f32.mxu0 0.0
  %460 = vmatmul.mubr.f32.gmra.mrb[0].mxu0 %v166
  %v461 = vpop.f32.mrb[0].mxu0
  %v462 = vadd.f32 %v111, %v461
  %v463 = vpop.f32.mrb[0].mxu0
  %464 = vmatprep.mubr.f32.mxu0 0.0
  %465 = vmatmul.mubr.f32.gmra.mrb[0].mxu0 %v169
  %v466 = vpop.f32.mrb[0].mxu0
  %v467 = vadd.f32 %v111, %v466
  %v468 = vpop.f32.mrb[0].mxu0
  %469 = vmatprep.mubr.f32.mxu0 0.0
  %470 = vmatmul.mubr.f32.gmra.mrb[0].mxu0 %v172
  %v471 = vpop.f32.mrb[0].mxu0
  %v472 = vadd.f32 %v111, %v471
  %v473 = vpop.f32.mrb[0].mxu0
  %474 = vmatprep.mubr.f32.mxu0 0.0
  %475 = vmatmul.mubr.f32.gmra.mrb[0].mxu0 %v175
  %v476 = vpop.f32.mrb[0].mxu0
  %v477 = vadd.f32 %v111, %v476
  %v478 = vpop.f32.mrb[0].mxu0
  %479 = vmatprep.mubr.f32.mxu0 0.0
  %480 = vmatmul.mubr.f32.gmra.mrb[0].mxu0 %v178
  %v481 = vpop.f32.mrb[0].mxu0
  %v482 = vadd.f32 %v111, %v481
  %v483 = vpop.f32.mrb[0].mxu0
  %484 = vmatprep.mubr.f32.mxu0 0.0
  %485 = vmatmul.mubr.f32.gmra.mrb[0].mxu0 %v181
  %v486 = vpop.f32.mrb[0].mxu0
  %v487 = vadd.f32 %v111, %v486
  %v488 = vpop.f32.mrb[0].mxu0
  %489 = vmatprep.mubr.f32.mxu0 0.0
  %490 = vmatmul.mubr.f32.gmra.mrb[0].mxu0 %v184
  %v491 = vpop.f32.mrb[0].mxu0
  %v492 = vadd.f32 %v111, %v491
  %v493 = vpop.f32.mrb[0].mxu0
  %494 = vmatprep.mubr.f32.mxu0 0.0
  %495 = vmatmul.mubr.f32.gmra.mrb[0].mxu0 %v187
  %v496 = vpop.f32.mrb[0].mxu0
  %v497 = vadd.f32 %v111, %v496
  %v498 = vpop.f32.mrb[0].mxu0
  %499 = vmatprep.mubr.f32.mxu0 0.0
  %500 = vmatmul.mubr.f32.gmra.mrb[0].mxu0 %v190
  %v501 = vpop.f32.mrb[0].mxu0
  %v502 = vadd.f32 %v111, %v501
  %v503 = vpop.f32.mrb[0].mxu0
  %504 = vmatprep.mubr.f32.mxu0 0.0
  %505 = vmatmul.mubr.f32.gmra.mrb[0].mxu0 %v193
  %v506 = vpop.f32.mrb[0].mxu0
  %v507 = vadd.f32 %v111, %v506
  %v508 = vpop.f32.mrb[0].mxu0
  %509 = vmatprep.mubr.f32.mxu0 0.0
  %510 = vmatmul.mubr.f32.gmra.mrb[0].mxu0 %v196
  %v511 = vpop.f32.mrb[0].mxu0
  %v512 = vadd.f32 %v111, %v511
  %v513 = vpop.f32.mrb[0].mxu0
  %514 = vmatprep.mubr.f32.mxu0 0.0
  %515 = vmatmul.mubr.f32.gmra.mrb[0].mxu0 %v199
  %v516 = vpop.f32.mrb[0].mxu0
  %v517 = vadd.f32 %v111, %v516
  %v518 = vpop.f32.mrb[0].mxu0
  %519 = vmatprep.mubr.f32.mxu0 0.0
  %520 = vmatmul.mubr.f32.gmra.mrb[0].mxu0 %v202
  %v521 = vpop.f32.mrb[0].mxu0
  %v522 = vadd.f32 %v111, %v521
  %v523 = vpop.f32.mrb[0].mxu0
  %524 = vmatprep.mubr.f32.mxu0 0.0
  %525 = vmatmul.mubr.f32.gmra.mrb[0].mxu0 %v205
  %v526 = vpop.f32.mrb[0].mxu0
  %v527 = vadd.f32 %v111, %v526
  %v528 = vpop.f32.mrb[0].mxu0
  %529 = vmatprep.mubr.f32.mxu0 0.0
  %530 = vmatmul.mubr.f32.gmra.mrb[0].mxu0 %v208
  %v531 = vpop.f32.mrb[0].mxu0
  %v532 = vadd.f32 %v111, %v531
  %v533 = vpop.f32.mrb[0].mxu0
  %534 = vmatprep.mubr.f32.mxu0 0.0
  %535 = vmatmul.mubr.f32.gmra.mrb[0].mxu0 %v211
  %v536 = vpop.f32.mrb[0].mxu0
  %v537 = vadd.f32 %v111, %v536
  %v538 = vpop.f32.mrb[0].mxu0
  %539 = vmatprep.mubr.f32.mxu0 0.0
  %540 = vmatmul.mubr.f32.gmra.mrb[0].mxu0 %v214
  %v541 = vpop.f32.mrb[0].mxu0
  %v542 = vadd.f32 %v111, %v541
  %v543 = vpop.f32.mrb[0].mxu0
  %544 = vmatprep.mubr.f32.mxu0 0.0
  %545 = vmatmul.mubr.f32.gmra.mrb[0].mxu0 %v217
  %v546 = vpop.f32.mrb[0].mxu0
  %v547 = vadd.f32 %v111, %v546
  %v548 = vpop.f32.mrb[0].mxu0
  %549 = vmatprep.mubr.f32.mxu0 0.0
  %550 = vmatmul.mubr.f32.gmra.mrb[0].mxu0 %v220
  %v551 = vpop.f32.mrb[0].mxu0
  %v552 = vadd.f32 %v111, %v551
  %v553 = vpop.f32.mrb[0].mxu0
  %554 = vmatprep.mubr.f32.mxu0 0.0
  %555 = vmatmul.mubr.f32.gmra.mrb[0].mxu0 %v223
  %v556 = vpop.f32.mrb[0].mxu0
  %v557 = vadd.f32 %v111, %v556
  %v558 = vpop.f32.mrb[0].mxu0
  %559 = vmatprep.mubr.f32.mxu0 0.0
  %560 = vmatmul.mubr.f32.gmra.mrb[0].mxu0 %v226
  %v561 = vpop.f32.mrb[0].mxu0
  %v562 = vadd.f32 %v111, %v561
  %v563 = vpop.f32.mrb[0].mxu0
  %564 = vmatprep.mubr.f32.mxu0 0.0
  %565 = vmatmul.mubr.f32.gmra.mrb[0].mxu0 %v229
  %v566 = vpop.f32.mrb[0].mxu0
  %v567 = vadd.f32 %v111, %v566
  %v568 = vpop.f32.mrb[0].mxu0
  %569 = vmatprep.mubr.f32.mxu0 0.0
  %570 = vmatmul.mubr.f32.gmra.mrb[0].mxu0 %v232
  %v571 = vpop.f32.mrb[0].mxu0
  %v572 = vadd.f32 %v111, %v571
  %v573 = vpop.f32.mrb[0].mxu0
  %574 = vmatprep.mubr.f32.mxu0 0.0
  %575 = vmatmul.mubr.f32.gmra.mrb[0].mxu0 %v235
  %v576 = vpop.f32.mrb[0].mxu0
  %v577 = vadd.f32 %v111, %v576
  %v578 = vpop.f32.mrb[0].mxu0
  %579 = vmatprep.mubr.f32.mxu0 0.0
  %580 = vmatmul.mubr.f32.gmra.mrb[0].mxu0 %v238
  %v581 = vpop.f32.mrb[0].mxu0
  %v582 = vadd.f32 %v111, %v581
  %v583 = vpop.f32.mrb[0].mxu0
  %584 = vmatprep.mubr.f32.mxu0 0.0
  %585 = vmatmul.mubr.f32.gmra.mrb[0].mxu0 %v241
  %v586 = vpop.f32.mrb[0].mxu0
  %v587 = vadd.f32 %v111, %v586
  %v588 = vpop.f32.mrb[0].mxu0
  %589 = vmatprep.mubr.f32.mxu0 0.0
  %590 = vmatmul.mubr.f32.gmra.mrb[0].mxu0 %v244
  %v591 = vpop.f32.mrb[0].mxu0
  %v592 = vadd.f32 %v111, %v591
  %v593 = vpop.f32.mrb[0].mxu0
  %594 = vmatprep.mubr.f32.mxu0 0.0
  %595 = vmatmul.mubr.f32.gmra.mrb[0].mxu0 %v247
  %v596 = vpop.f32.mrb[0].mxu0
  %v597 = vadd.f32 %v111, %v596
  %v598 = vpop.f32.mrb[0].mxu0
  %599 = vmatprep.mubr.f32.mxu0 0.0
  %600 = vmatmul.mubr.f32.gmra.mrb[0].mxu0 %v250
  %v601 = vpop.f32.mrb[0].mxu0
  %v602 = vadd.f32 %v111, %v601
  %v603 = vpop.f32.mrb[0].mxu0
  %604 = vmatprep.mubr.f32.mxu0 0.0
  %605 = vmatmul.mubr.f32.gmra.mrb[0].mxu0 %v253
  %v606 = vpop.f32.mrb[0].mxu0
  %v607 = vadd.f32 %v111, %v606
  %v608 = vpop.f32.mrb[0].mxu0
  %609 = vmatprep.mubr.f32.mxu0 0.0
  %610 = vmatmul.mubr.f32.gmra.mrb[0].mxu0 %v256
  %v611 = vpop.f32.mrb[0].mxu0
  %v612 = vadd.f32 %v111, %v611
  %v613 = vpop.f32.mrb[0].mxu0
  %614 = vmatprep.mubr.f32.mxu0 0.0
  %615 = vmatmul.mubr.f32.gmra.mrb[0].mxu0 %v259
  %v616 = vpop.f32.mrb[0].mxu0
  %v617 = vadd.f32 %v111, %v616
  %v618 = vpop.f32.mrb[0].mxu0
  %619 = vmatprep.mubr.f32.mxu0 0.0
  %620 = vmatmul.mubr.f32.gmra.mrb[0].mxu0 %v262
  %v621 = vpop.f32.mrb[0].mxu0
  %v622 = vadd.f32 %v111, %v621
  %v623 = vpop.f32.mrb[0].mxu0
  %624 = vmatprep.mubr.f32.mxu0 0.0
  %625 = vmatmul.mubr.f32.gmra.mrb[0].mxu0 %v265
  %v626 = vpop.f32.mrb[0].mxu0
  %v627 = vadd.f32 %v111, %v626
  %v628 = vpop.f32.mrb[0].mxu0
  %629 = vmatprep.mubr.f32.mxu0 0.0
  %630 = vmatmul.mubr.f32.gmra.mrb[0].mxu0 %v268
  %v631 = vpop.f32.mrb[0].mxu0
  %v632 = vadd.f32 %v111, %v631
  %v633 = vpop.f32.mrb[0].mxu0
  %634 = vmatprep.mubr.f32.mxu0 0.0
  %635 = vmatmul.mubr.f32.gmra.mrb[0].mxu0 %v271
  %v636 = vpop.f32.mrb[0].mxu0
  %v637 = vadd.f32 %v111, %v636
  %v638 = vpop.f32.mrb[0].mxu0
  %639 = vmatprep.mubr.f32.mxu0 0.0
  %640 = vmatmul.mubr.f32.gmra.mrb[0].mxu0 %v274
  %v641 = vpop.f32.mrb[0].mxu0
  %v642 = vadd.f32 %v111, %v641
  %v643 = vpop.f32.mrb[0].mxu0
  %644 = vmatprep.mubr.f32.mxu0 0.0
  %645 = vmatmul.mubr.f32.gmra.mrb[0].mxu0 %v277
  %v646 = vpop.f32.mrb[0].mxu0
  %v647 = vadd.f32 %v111, %v646
  %v648 = vpop.f32.mrb[0].mxu0
  %649 = vmatprep.mubr.f32.mxu0 0.0
  %650 = vmatmul.mubr.f32.gmra.mrb[0].mxu0 %v280
  %v651 = vpop.f32.mrb[0].mxu0
  %v652 = vadd.f32 %v111, %v651
  %v653 = vpop.f32.mrb[0].mxu0
  %654 = vmatprep.mubr.f32.mxu0 0.0
  %655 = vmatmul.mubr.f32.gmra.mrb[0].mxu0 %v283
  %v656 = vpop.f32.mrb[0].mxu0
  %v657 = vadd.f32 %v111, %v656
  %v658 = vpop.f32.mrb[0].mxu0
  %659 = vmatprep.mubr.f32.mxu0 0.0
  %660 = vmatmul.mubr.f32.gmra.mrb[0].mxu0 %v286
  %v661 = vpop.f32.mrb[0].mxu0
  %v662 = vadd.f32 %v111, %v661
  %v663 = vpop.f32.mrb[0].mxu0
  %664 = vmatprep.mubr.f32.mxu0 0.0
  %665 = vmatmul.mubr.f32.gmra.mrb[0].mxu0 %v289
  %v666 = vpop.f32.mrb[0].mxu0
  %v667 = vadd.f32 %v111, %v666
  %v668 = vpop.f32.mrb[0].mxu0
  %669 = vmatprep.mubr.f32.mxu0 0.0
  %670 = vmatmul.mubr.f32.gmra.mrb[0].mxu0 %v292
  %v671 = vpop.f32.mrb[0].mxu0
  %v672 = vadd.f32 %v111, %v671
  %v673 = vpop.f32.mrb[0].mxu0
  %674 = vmatprep.mubr.f32.mxu0 0.0
  %675 = vmatmul.mubr.f32.gmra.mrb[0].mxu0 %v295
  %v676 = vpop.f32.mrb[0].mxu0
  %v677 = vadd.f32 %v111, %v676
  %v678 = vpop.f32.mrb[0].mxu0
  %679 = vmatprep.mubr.f32.mxu0 0.0
  %680 = vmatmul.mubr.f32.gmra.mrb[0].mxu0 %v298
  %v681 = vpop.f32.mrb[0].mxu0
  %v682 = vadd.f32 %v111, %v681
  %v683 = vpop.f32.mrb[0].mxu0
  %684 = vmatprep.mubr.f32.mxu0 0.0
  %685 = vmatmul.mubr.f32.gmra.mrb[0].mxu0 %v301
  %v686 = vpop.f32.mrb[0].mxu0
  %v687 = vadd.f32 %v111, %v686
  %v688 = vpop.f32.mrb[0].mxu0
  %689 = vmatprep.mubr.f32.mxu0 0.0
  %690 = vmatmul.mubr.f32.gmra.mrb[0].mxu0 %v304
  %v691 = vpop.f32.mrb[0].mxu0
  %v692 = vadd.f32 %v111, %v691
  %v693 = vpop.f32.mrb[0].mxu0
  %694 = vdwg.mxu0
  %v695 = vlaneseq
  %v696 = vshrl.u32 %v695, 7
  %v697 = vlaneseq
  %v698 = vand.u32 %v697, 127
  %v699 = vadd.s32 %v698, 128
  %v700 = vadd.s32 %v698, 256
  %v701 = vadd.s32 %v698, 384
  %v702 = vmul.u32 %v696, 256
  %vm703 = vcmp.ge.s32.totalorder %v698, %v702
  %vm704 = vcmp.ge.s32.totalorder %v699, %v702
  %vm705 = vcmp.ge.s32.totalorder %v700, %v702
  %vm706 = vcmp.ge.s32.totalorder %v701, %v702
  %v707 = vadd.s32 %v696, 1
  %v708 = vmul.u32 %v707, 256
  %vm709 = vcmp.lt.s32.totalorder %v698, %v708
  %vm710 = vcmp.lt.s32.totalorder %v699, %v708
  %vm711 = vcmp.lt.s32.totalorder %v700, %v708
  %vm712 = vcmp.lt.s32.totalorder %v701, %v708
  %vm713 = vmand %vm703, %vm709
  %vm714 = vmand %vm704, %vm710
  %vm715 = vmand %vm705, %vm711
  %vm716 = vmand %vm706, %vm712
  %v717 = vsel %vm713, 1, 0
  %v718 = vsel %vm714, 1, 0
  %v719 = vsel %vm715, 1, 0
  %v720 = vsel %vm716, 1, 0
  %v721 = vcvt.s32.f32 %v717
  %v722 = vcvt.s32.f32 %v718
  %v723 = vcvt.s32.f32 %v719
  %v724 = vcvt.s32.f32 %v720
  %725 = vmatprep.subr.mxu0 0.0
  %726 = vmatpush1.msra.mxu0 %v377
  %727 = vmatprep.subr.mxu0 0.0
  %728 = vmatpush1.msra.mxu0 %v382
  %729 = vmatprep.subr.mxu0 0.0
  %730 = vmatpush1.msra.mxu0 %v387
  %731 = vmatprep.subr.mxu0 0.0
  %732 = vmatpush1.msra.mxu0 %v392
  %733 = vmatprep.subr.mxu0 0.0
  %734 = vmatpush1.msra.mxu0 %v397
  %735 = vmatprep.subr.mxu0 0.0
  %736 = vmatpush1.msra.mxu0 %v402
  %737 = vmatprep.subr.mxu0 0.0
  %738 = vmatpush1.msra.mxu0 %v407
  %739 = vmatprep.subr.mxu0 0.0
  %740 = vmatpush1.msra.mxu0 %v412
  %741 = vmatprep.subr.mxu0 0.0
  %742 = vmatpush1.msra.mxu0 %v417
  %743 = vmatprep.subr.mxu0 0.0
  %744 = vmatpush1.msra.mxu0 %v422
  %745 = vmatprep.subr.mxu0 0.0
  %746 = vmatpush1.msra.mxu0 %v427
  %747 = vmatprep.subr.mxu0 0.0
  %748 = vmatpush1.msra.mxu0 %v432
  %749 = vmatprep.subr.mxu0 0.0
  %750 = vmatpush1.msra.mxu0 %v437
  %751 = vmatprep.subr.mxu0 0.0
  %752 = vmatpush1.msra.mxu0 %v442
  %753 = vmatprep.subr.mxu0 0.0
  %754 = vmatpush1.msra.mxu0 %v447
  %755 = vmatprep.subr.mxu0 0.0
  %756 = vmatpush1.msra.mxu0 %v452
  %757 = vmatprep.subr.mxu0 0.0
  %758 = vmatpush1.msra.mxu0 %v457
  %759 = vmatprep.subr.mxu0 0.0
  %760 = vmatpush1.msra.mxu0 %v462
  %761 = vmatprep.subr.mxu0 0.0
  %762 = vmatpush1.msra.mxu0 %v467
  %763 = vmatprep.subr.mxu0 0.0
  %764 = vmatpush1.msra.mxu0 %v472
  %765 = vmatprep.subr.mxu0 0.0
  %766 = vmatpush1.msra.mxu0 %v477
  %767 = vmatprep.subr.mxu0 0.0
  %768 = vmatpush1.msra.mxu0 %v482
  %769 = vmatprep.subr.mxu0 0.0
  %770 = vmatpush1.msra.mxu0 %v487
  %771 = vmatprep.subr.mxu0 0.0
  %772 = vmatpush1.msra.mxu0 %v492
  %773 = vmatprep.subr.mxu0 0.0
  %774 = vmatpush1.msra.mxu0 %v497
  %775 = vmatprep.subr.mxu0 0.0
  %776 = vmatpush1.msra.mxu0 %v502
  %777 = vmatprep.subr.mxu0 0.0
  %778 = vmatpush1.msra.mxu0 %v507
  %779 = vmatprep.subr.mxu0 0.0
  %780 = vmatpush1.msra.mxu0 %v512
  %781 = vmatprep.subr.mxu0 0.0
  %782 = vmatpush1.msra.mxu0 %v517
  %783 = vmatprep.subr.mxu0 0.0
  %784 = vmatpush1.msra.mxu0 %v522
  %785 = vmatprep.subr.mxu0 0.0
  %786 = vmatpush1.msra.mxu0 %v527
  %787 = vmatprep.subr.mxu0 0.0
  %788 = vmatpush1.msra.mxu0 %v532
  %789 = vmatprep.mubr.f32.mxu0 %v722
  %790 = vmatmul.mubr.f32.gmra.mrb[0].mxu0 %v721
  %v791 = vpop.f32.mrb[0].mxu0
  %v792 = vadd.f32 0.0, %v791
  %v793 = vpop.f32.mrb[0].mxu0
  %794 = vdwg.mxu0
  %795 = vmatprep.subr.mxu0 0.0
  %796 = vmatpush1.msra.mxu0 %v537
  %797 = vmatprep.subr.mxu0 0.0
  %798 = vmatpush1.msra.mxu0 %v542
  %799 = vmatprep.subr.mxu0 0.0
  %800 = vmatpush1.msra.mxu0 %v547
  %801 = vmatprep.subr.mxu0 0.0
  %802 = vmatpush1.msra.mxu0 %v552
  %803 = vmatprep.subr.mxu0 0.0
  %804 = vmatpush1.msra.mxu0 %v557
  %805 = vmatprep.subr.mxu0 0.0
  %806 = vmatpush1.msra.mxu0 %v562
  %807 = vmatprep.subr.mxu0 0.0
  %808 = vmatpush1.msra.mxu0 %v567
  %809 = vmatprep.subr.mxu0 0.0
  %810 = vmatpush1.msra.mxu0 %v572
  %811 = vmatprep.subr.mxu0 0.0
  %812 = vmatpush1.msra.mxu0 %v577
  %813 = vmatprep.subr.mxu0 0.0
  %814 = vmatpush1.msra.mxu0 %v582
  %815 = vmatprep.subr.mxu0 0.0
  %816 = vmatpush1.msra.mxu0 %v587
  %817 = vmatprep.subr.mxu0 0.0
  %818 = vmatpush1.msra.mxu0 %v592
  %819 = vmatprep.subr.mxu0 0.0
  %820 = vmatpush1.msra.mxu0 %v597
  %821 = vmatprep.subr.mxu0 0.0
  %822 = vmatpush1.msra.mxu0 %v602
  %823 = vmatprep.subr.mxu0 0.0
  %824 = vmatpush1.msra.mxu0 %v607
  %825 = vmatprep.subr.mxu0 0.0
  %826 = vmatpush1.msra.mxu0 %v612
  %827 = vmatprep.subr.mxu0 0.0
  %828 = vmatpush1.msra.mxu0 %v617
  %829 = vmatprep.subr.mxu0 0.0
  %830 = vmatpush1.msra.mxu0 %v622
  %831 = vmatprep.subr.mxu0 0.0
  %832 = vmatpush1.msra.mxu0 %v627
  %833 = vmatprep.subr.mxu0 0.0
  %834 = vmatpush1.msra.mxu0 %v632
  %835 = vmatprep.subr.mxu0 0.0
  %836 = vmatpush1.msra.mxu0 %v637
  %837 = vmatprep.subr.mxu0 0.0
  %838 = vmatpush1.msra.mxu0 %v642
  %839 = vmatprep.subr.mxu0 0.0
  %840 = vmatpush1.msra.mxu0 %v647
  %841 = vmatprep.subr.mxu0 0.0
  %842 = vmatpush1.msra.mxu0 %v652
  %843 = vmatprep.subr.mxu0 0.0
  %844 = vmatpush1.msra.mxu0 %v657
  %845 = vmatprep.subr.mxu0 0.0
  %846 = vmatpush1.msra.mxu0 %v662
  %847 = vmatprep.subr.mxu0 0.0
  %848 = vmatpush1.msra.mxu0 %v667
  %849 = vmatprep.subr.mxu0 0.0
  %850 = vmatpush1.msra.mxu0 %v672
  %851 = vmatprep.subr.mxu0 0.0
  %852 = vmatpush1.msra.mxu0 %v677
  %853 = vmatprep.subr.mxu0 0.0
  %854 = vmatpush1.msra.mxu0 %v682
  %855 = vmatprep.subr.mxu0 0.0
  %856 = vmatpush1.msra.mxu0 %v687
  %857 = vmatprep.subr.mxu0 0.0
  %858 = vmatpush1.msra.mxu0 %v692
  %859 = vmatprep.mubr.f32.mxu0 %v724
  %860 = vmatmul.mubr.f32.gmra.mrb[0].mxu0 %v723
  %v861 = vpop.f32.mrb[0].mxu0
  %v862 = vadd.f32 %v792, %v861
  %v863 = vpop.f32.mrb[0].mxu0
  %864 = vdwg.mxu0
  %v865 = vmul.f32 %v377, %v377
  %v866 = vmul.f32 %v382, %v382
  %v867 = vmul.f32 %v387, %v387
  %v868 = vmul.f32 %v392, %v392
  %v869 = vmul.f32 %v397, %v397
  %v870 = vmul.f32 %v402, %v402
  %v871 = vmul.f32 %v407, %v407
  %v872 = vmul.f32 %v412, %v412
  %v873 = vmul.f32 %v417, %v417
  %v874 = vmul.f32 %v422, %v422
  %v875 = vmul.f32 %v427, %v427
  %v876 = vmul.f32 %v432, %v432
  %v877 = vmul.f32 %v437, %v437
  %v878 = vmul.f32 %v442, %v442
  %v879 = vmul.f32 %v447, %v447
  %v880 = vmul.f32 %v452, %v452
  %v881 = vmul.f32 %v457, %v457
  %v882 = vmul.f32 %v462, %v462
  %v883 = vmul.f32 %v467, %v467
  %v884 = vmul.f32 %v472, %v472
  %v885 = vmul.f32 %v477, %v477
  %v886 = vmul.f32 %v482, %v482
  %v887 = vmul.f32 %v487, %v487
  %v888 = vmul.f32 %v492, %v492
  %v889 = vmul.f32 %v497, %v497
  %v890 = vmul.f32 %v502, %v502
  %v891 = vmul.f32 %v507, %v507
  %v892 = vmul.f32 %v512, %v512
  %v893 = vmul.f32 %v517, %v517
  %v894 = vmul.f32 %v522, %v522
  %v895 = vmul.f32 %v527, %v527
  %v896 = vmul.f32 %v532, %v532
  %v897 = vmul.f32 %v537, %v537
  %v898 = vmul.f32 %v542, %v542
  %v899 = vmul.f32 %v547, %v547
  %v900 = vmul.f32 %v552, %v552
  %v901 = vmul.f32 %v557, %v557
  %v902 = vmul.f32 %v562, %v562
  %v903 = vmul.f32 %v567, %v567
  %v904 = vmul.f32 %v572, %v572
  %v905 = vmul.f32 %v577, %v577
  %v906 = vmul.f32 %v582, %v582
  %v907 = vmul.f32 %v587, %v587
  %v908 = vmul.f32 %v592, %v592
  %v909 = vmul.f32 %v597, %v597
  %v910 = vmul.f32 %v602, %v602
  %v911 = vmul.f32 %v607, %v607
  %v912 = vmul.f32 %v612, %v612
  %v913 = vmul.f32 %v617, %v617
  %v914 = vmul.f32 %v622, %v622
  %v915 = vmul.f32 %v627, %v627
  %v916 = vmul.f32 %v632, %v632
  %v917 = vmul.f32 %v637, %v637
  %v918 = vmul.f32 %v642, %v642
  %v919 = vmul.f32 %v647, %v647
  %v920 = vmul.f32 %v652, %v652
  %v921 = vmul.f32 %v657, %v657
  %v922 = vmul.f32 %v662, %v662
  %v923 = vmul.f32 %v667, %v667
  %v924 = vmul.f32 %v672, %v672
  %v925 = vmul.f32 %v677, %v677
  %v926 = vmul.f32 %v682, %v682
  %v927 = vmul.f32 %v687, %v687
  %v928 = vmul.f32 %v692, %v692
  %929 = vmatprep.subr.mxu0 0.0
  %930 = vmatpush1.msra.mxu0 %v865
  %931 = vmatprep.subr.mxu0 0.0
  %932 = vmatpush1.msra.mxu0 %v866
  %933 = vmatprep.subr.mxu0 0.0
  %934 = vmatpush1.msra.mxu0 %v867
  %935 = vmatprep.subr.mxu0 0.0
  %936 = vmatpush1.msra.mxu0 %v868
  %937 = vmatprep.subr.mxu0 0.0
  %938 = vmatpush1.msra.mxu0 %v869
  %939 = vmatprep.subr.mxu0 0.0
  %940 = vmatpush1.msra.mxu0 %v870
  %941 = vmatprep.subr.mxu0 0.0
  %942 = vmatpush1.msra.mxu0 %v871
  %943 = vmatprep.subr.mxu0 0.0
  %944 = vmatpush1.msra.mxu0 %v872
  %945 = vmatprep.subr.mxu0 0.0
  %946 = vmatpush1.msra.mxu0 %v873
  %947 = vmatprep.subr.mxu0 0.0
  %948 = vmatpush1.msra.mxu0 %v874
  %949 = vmatprep.subr.mxu0 0.0
  %950 = vmatpush1.msra.mxu0 %v875
  %951 = vmatprep.subr.mxu0 0.0
  %952 = vmatpush1.msra.mxu0 %v876
  %953 = vmatprep.subr.mxu0 0.0
  %954 = vmatpush1.msra.mxu0 %v877
  %955 = vmatprep.subr.mxu0 0.0
  %956 = vmatpush1.msra.mxu0 %v878
  %957 = vmatprep.subr.mxu0 0.0
  %958 = vmatpush1.msra.mxu0 %v879
  %959 = vmatprep.subr.mxu0 0.0
  %960 = vmatpush1.msra.mxu0 %v880
  %961 = vmatprep.subr.mxu0 0.0
  %962 = vmatpush1.msra.mxu0 %v881
  %963 = vmatprep.subr.mxu0 0.0
  %964 = vmatpush1.msra.mxu0 %v882
  %965 = vmatprep.subr.mxu0 0.0
  %966 = vmatpush1.msra.mxu0 %v883
  %967 = vmatprep.subr.mxu0 0.0
  %968 = vmatpush1.msra.mxu0 %v884
  %969 = vmatprep.subr.mxu0 0.0
  %970 = vmatpush1.msra.mxu0 %v885
  %971 = vmatprep.subr.mxu0 0.0
  %972 = vmatpush1.msra.mxu0 %v886
  %973 = vmatprep.subr.mxu0 0.0
  %974 = vmatpush1.msra.mxu0 %v887
  %975 = vmatprep.subr.mxu0 0.0
  %976 = vmatpush1.msra.mxu0 %v888
  %977 = vmatprep.subr.mxu0 0.0
  %978 = vmatpush1.msra.mxu0 %v889
  %979 = vmatprep.subr.mxu0 0.0
  %980 = vmatpush1.msra.mxu0 %v890
  %981 = vmatprep.subr.mxu0 0.0
  %982 = vmatpush1.msra.mxu0 %v891
  %983 = vmatprep.subr.mxu0 0.0
  %984 = vmatpush1.msra.mxu0 %v892
  %985 = vmatprep.subr.mxu0 0.0
  %986 = vmatpush1.msra.mxu0 %v893
  %987 = vmatprep.subr.mxu0 0.0
  %988 = vmatpush1.msra.mxu0 %v894
  %989 = vmatprep.subr.mxu0 0.0
  %990 = vmatpush1.msra.mxu0 %v895
  %991 = vmatprep.subr.mxu0 0.0
  %992 = vmatpush1.msra.mxu0 %v896
  %993 = vmatprep.mubr.f32.mxu0 %v722
  %994 = vmatmul.mubr.f32.gmra.mrb[0].mxu0 %v721
  %v995 = vpop.f32.mrb[0].mxu0
  %v996 = vadd.f32 0.0, %v995
  %v997 = vpop.f32.mrb[0].mxu0
  %998 = vdwg.mxu0
  %999 = vmatprep.subr.mxu0 0.0
  %1000 = vmatpush1.msra.mxu0 %v897
  %1001 = vmatprep.subr.mxu0 0.0
  %1002 = vmatpush1.msra.mxu0 %v898
  %1003 = vmatprep.subr.mxu0 0.0
  %1004 = vmatpush1.msra.mxu0 %v899
  %1005 = vmatprep.subr.mxu0 0.0
  %1006 = vmatpush1.msra.mxu0 %v900
  %1007 = vmatprep.subr.mxu0 0.0
  %1008 = vmatpush1.msra.mxu0 %v901
  %1009 = vmatprep.subr.mxu0 0.0
  %1010 = vmatpush1.msra.mxu0 %v902
  %1011 = vmatprep.subr.mxu0 0.0
  %1012 = vmatpush1.msra.mxu0 %v903
  %1013 = vmatprep.subr.mxu0 0.0
  %1014 = vmatpush1.msra.mxu0 %v904
  %1015 = vmatprep.subr.mxu0 0.0
  %1016 = vmatpush1.msra.mxu0 %v905
  %1017 = vmatprep.subr.mxu0 0.0
  %1018 = vmatpush1.msra.mxu0 %v906
  %1019 = vmatprep.subr.mxu0 0.0
  %1020 = vmatpush1.msra.mxu0 %v907
  %1021 = vmatprep.subr.mxu0 0.0
  %1022 = vmatpush1.msra.mxu0 %v908
  %1023 = vmatprep.subr.mxu0 0.0
  %1024 = vmatpush1.msra.mxu0 %v909
  %1025 = vmatprep.subr.mxu0 0.0
  %1026 = vmatpush1.msra.mxu0 %v910
  %1027 = vmatprep.subr.mxu0 0.0
  %1028 = vmatpush1.msra.mxu0 %v911
  %1029 = vmatprep.subr.mxu0 0.0
  %1030 = vmatpush1.msra.mxu0 %v912
  %1031 = vmatprep.subr.mxu0 0.0
  %1032 = vmatpush1.msra.mxu0 %v913
  %1033 = vmatprep.subr.mxu0 0.0
  %1034 = vmatpush1.msra.mxu0 %v914
  %1035 = vmatprep.subr.mxu0 0.0
  %1036 = vmatpush1.msra.mxu0 %v915
  %1037 = vmatprep.subr.mxu0 0.0
  %1038 = vmatpush1.msra.mxu0 %v916
  %1039 = vmatprep.subr.mxu0 0.0
  %1040 = vmatpush1.msra.mxu0 %v917
  %1041 = vmatprep.subr.mxu0 0.0
  %1042 = vmatpush1.msra.mxu0 %v918
  %1043 = vmatprep.subr.mxu0 0.0
  %1044 = vmatpush1.msra.mxu0 %v919
  %1045 = vmatprep.subr.mxu0 0.0
  %1046 = vmatpush1.msra.mxu0 %v920
  %1047 = vmatprep.subr.mxu0 0.0
  %1048 = vmatpush1.msra.mxu0 %v921
  %1049 = vmatprep.subr.mxu0 0.0
  %1050 = vmatpush1.msra.mxu0 %v922
  %1051 = vmatprep.subr.mxu0 0.0
  %1052 = vmatpush1.msra.mxu0 %v923
  %1053 = vmatprep.subr.mxu0 0.0
  %1054 = vmatpush1.msra.mxu0 %v924
  %1055 = vmatprep.subr.mxu0 0.0
  %1056 = vmatpush1.msra.mxu0 %v925
  %1057 = vmatprep.subr.mxu0 0.0
  %1058 = vmatpush1.msra.mxu0 %v926
  %1059 = vmatprep.subr.mxu0 0.0
  %1060 = vmatpush1.msra.mxu0 %v927
  %1061 = vmatprep.subr.mxu0 0.0
  %1062 = vmatpush1.msra.mxu0 %v928
  %1063 = vmatprep.mubr.f32.mxu0 %v724
  %1064 = vmatmul.mubr.f32.gmra.mrb[0].mxu0 %v723
  %v1065 = vpop.f32.mrb[0].mxu0
  %v1066 = vadd.f32 %v996, %v1065
  %v1067 = vpop.f32.mrb[0].mxu0
  %1068 = vdwg.mxu0
  %v1069 = vld [vmem:[%s4] sm:$0xff]
  %v1070 = vld [vmem:[%s4 + $0x8] sm:$0xff]
  %v1071 = vld [vmem:[%s4 + $0x10] sm:$0xff]
  %v1072 = vld [vmem:[%s4 + $0x18] sm:$0xff]
  %v1073 = vld [vmem:[%s4 + $0x20] sm:$0xff]
  %v1074 = vld [vmem:[%s4 + $0x28] sm:$0xff]
  %v1075 = vld [vmem:[%s4 + $0x30] sm:$0xff]
  %v1076 = vld [vmem:[%s4 + $0x38] sm:$0xff]
  %vm1077 = vcmask 523264
  %v1079 = vsel %vm1077, %v862, 0
  %1081 = vmatprep.subr.mxu0 0.0
  %1082 = vmatpush1.msra.mxu0 %v1069
  %1083 = vmatprep.subr.mxu0 0.0
  %1084 = vmatpush1.msra.mxu0 %v1070
  %1085 = vmatprep.subr.mxu0 0.0
  %1086 = vmatpush1.msra.mxu0 %v1071
  %1087 = vmatprep.subr.mxu0 0.0
  %1088 = vmatpush1.msra.mxu0 %v1072
  %1089 = vmatprep.subr.mxu0 0.0
  %1090 = vmatpush1.msra.mxu0 %v1073
  %1091 = vmatprep.subr.mxu0 0.0
  %1092 = vmatpush1.msra.mxu0 %v1074
  %1093 = vmatprep.subr.mxu0 0.0
  %1094 = vmatpush1.msra.mxu0 %v1075
  %1095 = vmatprep.subr.mxu0 0.0
  %1096 = vmatpush1.msra.mxu0 %v1076
  %1097 = vmatprep.subr.mxu0 0.0
  %1098 = vmatpush1.msra.mxu0 0.0
  %1099 = vmatprep.subr.mxu0 0.0
  %1100 = vmatpush1.msra.mxu0 0.0
  %1101 = vmatprep.subr.mxu0 0.0
  %1102 = vmatpush1.msra.mxu0 0.0
  %1103 = vmatprep.subr.mxu0 0.0
  %1104 = vmatpush1.msra.mxu0 0.0
  %1105 = vmatprep.subr.mxu0 0.0
  %1106 = vmatpush1.msra.mxu0 0.0
  %1107 = vmatprep.subr.mxu0 0.0
  %1108 = vmatpush1.msra.mxu0 0.0
  %1109 = vmatprep.subr.mxu0 0.0
  %1110 = vmatpush1.msra.mxu0 0.0
  %1111 = vmatprep.subr.mxu0 0.0
  %1112 = vmatpush1.msra.mxu0 0.0
  %1113 = vmatprep.subr.mxu0 0.0
  %1114 = vmatpush1.msra.mxu0 0.0
  %1115 = vmatprep.subr.mxu0 0.0
  %1116 = vmatpush1.msra.mxu0 0.0
  %1117 = vmatprep.subr.mxu0 0.0
  %1118 = vmatpush1.msra.mxu0 0.0
  %1119 = vmatprep.subr.mxu0 0.0
  %1120 = vmatpush1.msra.mxu0 0.0
  %1121 = vmatprep.subr.mxu0 0.0
  %1122 = vmatpush1.msra.mxu0 0.0
  %1123 = vmatprep.subr.mxu0 0.0
  %1124 = vmatpush1.msra.mxu0 0.0
  %1125 = vmatprep.subr.mxu0 0.0
  %1126 = vmatpush1.msra.mxu0 0.0
  %1127 = vmatprep.subr.mxu0 0.0
  %1128 = vmatpush1.msra.mxu0 0.0
  %1129 = vmatprep.subr.mxu0 0.0
  %1130 = vmatpush1.msra.mxu0 0.0
  %1131 = vmatprep.subr.mxu0 0.0
  %1132 = vmatpush1.msra.mxu0 0.0
  %1133 = vmatprep.subr.mxu0 0.0
  %1134 = vmatpush1.msra.mxu0 0.0
  %1135 = vmatprep.subr.mxu0 0.0
  %1136 = vmatpush1.msra.mxu0 0.0
  %1137 = vmatprep.subr.mxu0 0.0
  %1138 = vmatpush1.msra.mxu0 0.0
  %1139 = vmatprep.subr.mxu0 0.0
  %1140 = vmatpush1.msra.mxu0 0.0
  %1141 = vmatprep.subr.mxu0 0.0
  %1142 = vmatpush1.msra.mxu0 0.0
  %1143 = vmatprep.subr.mxu0 0.0
  %1144 = vmatpush1.msra.mxu0 0.0
  %1145 = vmatprep.mubr.f32.mxu0 0.0
  %1146 = vmatmul.mubr.f32.gmra.mrb[0].mxu0 %v1079
  %v1147 = vpop.f32.mrb[0].mxu0
  %v1148 = vadd.f32 0.0, %v1147
  %v1149 = vpop.f32.mrb[0].mxu0
  %1150 = vdwg.mxu0
  %v1152 = vsel %vm1077, %v1066, 0
  %1154 = vmatprep.subr.mxu0 0.0
  %1155 = vmatpush1.msra.mxu0 %v1069
  %1156 = vmatprep.subr.mxu0 0.0
  %1157 = vmatpush1.msra.mxu0 %v1070
  %1158 = vmatprep.subr.mxu0 0.0
  %1159 = vmatpush1.msra.mxu0 %v1071
  %1160 = vmatprep.subr.mxu0 0.0
  %1161 = vmatpush1.msra.mxu0 %v1072
  %1162 = vmatprep.subr.mxu0 0.0
  %1163 = vmatpush1.msra.mxu0 %v1073
  %1164 = vmatprep.subr.mxu0 0.0
  %1165 = vmatpush1.msra.mxu0 %v1074
  %1166 = vmatprep.subr.mxu0 0.0
  %1167 = vmatpush1.msra.mxu0 %v1075
  %1168 = vmatprep.subr.mxu0 0.0
  %1169 = vmatpush1.msra.mxu0 %v1076
  %1170 = vmatprep.subr.mxu0 0.0
  %1171 = vmatpush1.msra.mxu0 0.0
  %1172 = vmatprep.subr.mxu0 0.0
  %1173 = vmatpush1.msra.mxu0 0.0
  %1174 = vmatprep.subr.mxu0 0.0
  %1175 = vmatpush1.msra.mxu0 0.0
  %1176 = vmatprep.subr.mxu0 0.0
  %1177 = vmatpush1.msra.mxu0 0.0
  %1178 = vmatprep.subr.mxu0 0.0
  %1179 = vmatpush1.msra.mxu0 0.0
  %1180 = vmatprep.subr.mxu0 0.0
  %1181 = vmatpush1.msra.mxu0 0.0
  %1182 = vmatprep.subr.mxu0 0.0
  %1183 = vmatpush1.msra.mxu0 0.0
  %1184 = vmatprep.subr.mxu0 0.0
  %1185 = vmatpush1.msra.mxu0 0.0
  %1186 = vmatprep.subr.mxu0 0.0
  %1187 = vmatpush1.msra.mxu0 0.0
  %1188 = vmatprep.subr.mxu0 0.0
  %1189 = vmatpush1.msra.mxu0 0.0
  %1190 = vmatprep.subr.mxu0 0.0
  %1191 = vmatpush1.msra.mxu0 0.0
  %1192 = vmatprep.subr.mxu0 0.0
  %1193 = vmatpush1.msra.mxu0 0.0
  %1194 = vmatprep.subr.mxu0 0.0
  %1195 = vmatpush1.msra.mxu0 0.0
  %1196 = vmatprep.subr.mxu0 0.0
  %1197 = vmatpush1.msra.mxu0 0.0
  %1198 = vmatprep.subr.mxu0 0.0
  %1199 = vmatpush1.msra.mxu0 0.0
  %1200 = vmatprep.subr.mxu0 0.0
  %1201 = vmatpush1.msra.mxu0 0.0
  %1202 = vmatprep.subr.mxu0 0.0
  %1203 = vmatpush1.msra.mxu0 0.0
  %1204 = vmatprep.subr.mxu0 0.0
  %1205 = vmatpush1.msra.mxu0 0.0
  %1206 = vmatprep.subr.mxu0 0.0
  %1207 = vmatpush1.msra.mxu0 0.0
  %1208 = vmatprep.subr.mxu0 0.0
  %1209 = vmatpush1.msra.mxu0 0.0
  %1210 = vmatprep.subr.mxu0 0.0
  %1211 = vmatpush1.msra.mxu0 0.0
  %1212 = vmatprep.subr.mxu0 0.0
  %1213 = vmatpush1.msra.mxu0 0.0
  %1214 = vmatprep.subr.mxu0 0.0
  %1215 = vmatpush1.msra.mxu0 0.0
  %1216 = vmatprep.subr.mxu0 0.0
  %1217 = vmatpush1.msra.mxu0 0.0
  %1218 = vmatprep.mubr.f32.mxu0 0.0
  %1219 = vmatmul.mubr.f32.gmra.mrb[0].mxu0 %v1152
  %v1220 = vpop.f32.mrb[0].mxu0
  %v1221 = vadd.f32 0.0, %v1220
  %v1222 = vpop.f32.mrb[0].mxu0
  %1223 = vdwg.mxu0
  %v1224 = vmul.f32 %v1148, %v1148
  %v1225 = vsub.f32 %v1221, %v1224
  %v1226 = vmax.f32 %v1225, 0.0
  %v1227 = vadd.f32 %v1226, 1e-05
  %v1228 = vrsqrt.pop %v1227
  %v1229 = vld [vmem:[%s5] sm:$0x1]
  %v1231 = vlaneseq
  %v1232 = vshrl.u32 %v1231, 7
  %v1233 = vsub.s32 0, %v1232
  %v1234 = vrot.slane %v1229, %v1233
  %v1236 = vmul.f32 %v1228, %v1234
  %v1237 = vld [vmem:[%s6] sm:$0x1]
  %v1238 = vmul.f32 %v1148, %v1236
  %v1240 = vlaneseq
  %v1241 = vshrl.u32 %v1240, 7
  %v1242 = vsub.s32 0, %v1241
  %v1243 = vrot.slane %v1237, %v1242
  %v1245 = vsub.f32 %v1243, %v1238
  %v1248 = vunpack.c.l.s4 1966171168
  %v1249 = vunpack.c.0.s8 %v1248
  %v1250 = vlaneseq
  %v1251 = vshrl.u32 %v1250, 7
  %v1252 = vsub.s32 %v1249, %v1251
  %v1253 = vrot.slane %v1236, %v1252
  %v1254 = vcombine.high %v1253, %v1253
  %v1256 = vunpack.c.l.s4 1966171168
  %v1257 = vunpack.c.0.s8 %v1256
  %v1258 = vlaneseq
  %v1259 = vshrl.u32 %v1258, 7
  %v1260 = vsub.s32 %v1257, %v1259
  %v1261 = vrot.slane %v1253, %v1260
  %v1263 = vunpack.c.l.s4 1966171168
  %v1264 = vunpack.c.0.s8 %v1263
  %v1265 = vlaneseq
  %v1266 = vshrl.u32 %v1265, 7
  %v1267 = vsub.s32 %v1264, %v1266
  %v1268 = vrot.slane %v1254, %v1267
  %v1269 = vlaneseq
  %v1270 = vshrl.u32 %v1269, 7
  %v1271 = vsub.s32 0, %v1270
  %v1272 = vrot.slane %v1261, %v1271
  %v1273 = vlaneseq
  %v1274 = vshrl.u32 %v1273, 7
  %v1275 = vsub.s32 0, %v1274
  %v1276 = vrot.slane %v1268, %v1275
  %v1279 = vmul.f32 %v377, %v1272
  %v1280 = vmul.f32 %v382, %v1272
  %v1281 = vmul.f32 %v387, %v1272
  %v1282 = vmul.f32 %v392, %v1272
  %v1283 = vmul.f32 %v397, %v1272
  %v1284 = vmul.f32 %v402, %v1272
  %v1285 = vmul.f32 %v407, %v1272
  %v1286 = vmul.f32 %v412, %v1272
  %v1287 = vmul.f32 %v417, %v1272
  %v1288 = vmul.f32 %v422, %v1272
  %v1289 = vmul.f32 %v427, %v1272
  %v1290 = vmul.f32 %v432, %v1272
  %v1291 = vmul.f32 %v437, %v1272
  %v1292 = vmul.f32 %v442, %v1272
  %v1293 = vmul.f32 %v447, %v1272
  %v1294 = vmul.f32 %v452, %v1272
  %v1295 = vmul.f32 %v457, %v1272
  %v1296 = vmul.f32 %v462, %v1272
  %v1297 = vmul.f32 %v467, %v1272
  %v1298 = vmul.f32 %v472, %v1272
  %v1299 = vmul.f32 %v477, %v1272
  %v1300 = vmul.f32 %v482, %v1272
  %v1301 = vmul.f32 %v487, %v1272
  %v1302 = vmul.f32 %v492, %v1272
  %v1303 = vmul.f32 %v497, %v1272
  %v1304 = vmul.f32 %v502, %v1272
  %v1305 = vmul.f32 %v507, %v1272
  %v1306 = vmul.f32 %v512, %v1272
  %v1307 = vmul.f32 %v517, %v1272
  %v1308 = vmul.f32 %v522, %v1272
  %v1309 = vmul.f32 %v527, %v1272
  %v1310 = vmul.f32 %v532, %v1272
  %v1311 = vmul.f32 %v537, %v1276
  %v1312 = vmul.f32 %v542, %v1276
  %v1313 = vmul.f32 %v547, %v1276
  %v1314 = vmul.f32 %v552, %v1276
  %v1315 = vmul.f32 %v557, %v1276
  %v1316 = vmul.f32 %v562, %v1276
  %v1317 = vmul.f32 %v567, %v1276
  %v1318 = vmul.f32 %v572, %v1276
  %v1319 = vmul.f32 %v577, %v1276
  %v1320 = vmul.f32 %v582, %v1276
  %v1321 = vmul.f32 %v587, %v1276
  %v1322 = vmul.f32 %v592, %v1276
  %v1323 = vmul.f32 %v597, %v1276
  %v1324 = vmul.f32 %v602, %v1276
  %v1325 = vmul.f32 %v607, %v1276
  %v1326 = vmul.f32 %v612, %v1276
  %v1327 = vmul.f32 %v617, %v1276
  %v1328 = vmul.f32 %v622, %v1276
  %v1329 = vmul.f32 %v627, %v1276
  %v1330 = vmul.f32 %v632, %v1276
  %v1331 = vmul.f32 %v637, %v1276
  %v1332 = vmul.f32 %v642, %v1276
  %v1333 = vmul.f32 %v647, %v1276
  %v1334 = vmul.f32 %v652, %v1276
  %v1335 = vmul.f32 %v657, %v1276
  %v1336 = vmul.f32 %v662, %v1276
  %v1337 = vmul.f32 %v667, %v1276
  %v1338 = vmul.f32 %v672, %v1276
  %v1339 = vmul.f32 %v677, %v1276
  %v1340 = vmul.f32 %v682, %v1276
  %v1341 = vmul.f32 %v687, %v1276
  %v1342 = vmul.f32 %v692, %v1276
  %v1345 = vunpack.c.l.s4 1966171168
  %v1346 = vunpack.c.0.s8 %v1345
  %v1347 = vlaneseq
  %v1348 = vshrl.u32 %v1347, 7
  %v1349 = vsub.s32 %v1346, %v1348
  %v1350 = vrot.slane %v1245, %v1349
  %v1351 = vcombine.high %v1350, %v1350
  %v1353 = vunpack.c.l.s4 1966171168
  %v1354 = vunpack.c.0.s8 %v1353
  %v1355 = vlaneseq
  %v1356 = vshrl.u32 %v1355, 7
  %v1357 = vsub.s32 %v1354, %v1356
  %v1358 = vrot.slane %v1350, %v1357
  %v1360 = vunpack.c.l.s4 1966171168
  %v1361 = vunpack.c.0.s8 %v1360
  %v1362 = vlaneseq
  %v1363 = vshrl.u32 %v1362, 7
  %v1364 = vsub.s32 %v1361, %v1363
  %v1365 = vrot.slane %v1351, %v1364
  %v1366 = vlaneseq
  %v1367 = vshrl.u32 %v1366, 7
  %v1368 = vsub.s32 0, %v1367
  %v1369 = vrot.slane %v1358, %v1368
  %v1370 = vlaneseq
  %v1371 = vshrl.u32 %v1370, 7
  %v1372 = vsub.s32 0, %v1371
  %v1373 = vrot.slane %v1365, %v1372
  %v1376 = vadd.f32 %v1279, %v1369
  %v1377 = vadd.f32 %v1280, %v1369
  %v1378 = vadd.f32 %v1281, %v1369
  %v1379 = vadd.f32 %v1282, %v1369
  %v1380 = vadd.f32 %v1283, %v1369
  %v1381 = vadd.f32 %v1284, %v1369
  %v1382 = vadd.f32 %v1285, %v1369
  %v1383 = vadd.f32 %v1286, %v1369
  %v1384 = vadd.f32 %v1287, %v1369
  %v1385 = vadd.f32 %v1288, %v1369
  %v1386 = vadd.f32 %v1289, %v1369
  %v1387 = vadd.f32 %v1290, %v1369
  %v1388 = vadd.f32 %v1291, %v1369
  %v1389 = vadd.f32 %v1292, %v1369
  %v1390 = vadd.f32 %v1293, %v1369
  %v1391 = vadd.f32 %v1294, %v1369
  %v1392 = vadd.f32 %v1295, %v1369
  %v1393 = vadd.f32 %v1296, %v1369
  %v1394 = vadd.f32 %v1297, %v1369
  %v1395 = vadd.f32 %v1298, %v1369
  %v1396 = vadd.f32 %v1299, %v1369
  %v1397 = vadd.f32 %v1300, %v1369
  %v1398 = vadd.f32 %v1301, %v1369
  %v1399 = vadd.f32 %v1302, %v1369
  %v1400 = vadd.f32 %v1303, %v1369
  %v1401 = vadd.f32 %v1304, %v1369
  %v1402 = vadd.f32 %v1305, %v1369
  %v1403 = vadd.f32 %v1306, %v1369
  %v1404 = vadd.f32 %v1307, %v1369
  %v1405 = vadd.f32 %v1308, %v1369
  %v1406 = vadd.f32 %v1309, %v1369
  %v1407 = vadd.f32 %v1310, %v1369
  %v1408 = vadd.f32 %v1311, %v1373
  %v1409 = vadd.f32 %v1312, %v1373
  %v1410 = vadd.f32 %v1313, %v1373
  %v1411 = vadd.f32 %v1314, %v1373
  %v1412 = vadd.f32 %v1315, %v1373
  %v1413 = vadd.f32 %v1316, %v1373
  %v1414 = vadd.f32 %v1317, %v1373
  %v1415 = vadd.f32 %v1318, %v1373
  %v1416 = vadd.f32 %v1319, %v1373
  %v1417 = vadd.f32 %v1320, %v1373
  %v1418 = vadd.f32 %v1321, %v1373
  %v1419 = vadd.f32 %v1322, %v1373
  %v1420 = vadd.f32 %v1323, %v1373
  %v1421 = vadd.f32 %v1324, %v1373
  %v1422 = vadd.f32 %v1325, %v1373
  %v1423 = vadd.f32 %v1326, %v1373
  %v1424 = vadd.f32 %v1327, %v1373
  %v1425 = vadd.f32 %v1328, %v1373
  %v1426 = vadd.f32 %v1329, %v1373
  %v1427 = vadd.f32 %v1330, %v1373
  %v1428 = vadd.f32 %v1331, %v1373
  %v1429 = vadd.f32 %v1332, %v1373
  %v1430 = vadd.f32 %v1333, %v1373
  %v1431 = vadd.f32 %v1334, %v1373
  %v1432 = vadd.f32 %v1335, %v1373
  %v1433 = vadd.f32 %v1336, %v1373
  %v1434 = vadd.f32 %v1337, %v1373
  %v1435 = vadd.f32 %v1338, %v1373
  %v1436 = vadd.f32 %v1339, %v1373
  %v1437 = vadd.f32 %v1340, %v1373
  %v1438 = vadd.f32 %v1341, %v1373
  %v1439 = vadd.f32 %v1342, %v1373
  %1440 = vst.msk [vmem:[%s12] sm:$0xff] %vm1077, %v1376
  %1441 = vst.msk [vmem:[%s12 + $0x8] sm:$0xff] %vm1077, %v1377
  %1442 = vst.msk [vmem:[%s12 + $0x10] sm:$0xff] %vm1077, %v1378
  %1443 = vst.msk [vmem:[%s12 + $0x18] sm:$0xff] %vm1077, %v1379
  %1444 = vst.msk [vmem:[%s12 + $0x20] sm:$0xff] %vm1077, %v1380
  %1445 = vst.msk [vmem:[%s12 + $0x28] sm:$0xff] %vm1077, %v1381
  %1446 = vst.msk [vmem:[%s12 + $0x30] sm:$0xff] %vm1077, %v1382
  %1447 = vst.msk [vmem:[%s12 + $0x38] sm:$0xff] %vm1077, %v1383
  %1448 = vst.msk [vmem:[%s12 + $0x40] sm:$0xff] %vm1077, %v1384
  %1449 = vst.msk [vmem:[%s12 + $0x48] sm:$0xff] %vm1077, %v1385
  %1450 = vst.msk [vmem:[%s12 + $0x50] sm:$0xff] %vm1077, %v1386
  %1451 = vst.msk [vmem:[%s12 + $0x58] sm:$0xff] %vm1077, %v1387
  %1452 = vst.msk [vmem:[%s12 + $0x60] sm:$0xff] %vm1077, %v1388
  %1453 = vst.msk [vmem:[%s12 + $0x68] sm:$0xff] %vm1077, %v1389
  %1454 = vst.msk [vmem:[%s12 + $0x70] sm:$0xff] %vm1077, %v1390
  %1455 = vst.msk [vmem:[%s12 + $0x78] sm:$0xff] %vm1077, %v1391
  %1456 = vst.msk [vmem:[%s12 + $0x80] sm:$0xff] %vm1077, %v1392
  %1457 = vst.msk [vmem:[%s12 + $0x88] sm:$0xff] %vm1077, %v1393
  %1458 = vst.msk [vmem:[%s12 + $0x90] sm:$0xff] %vm1077, %v1394
  %1459 = vst.msk [vmem:[%s12 + $0x98] sm:$0xff] %vm1077, %v1395
  %1460 = vst.msk [vmem:[%s12 + $0xa0] sm:$0xff] %vm1077, %v1396
  %1461 = vst.msk [vmem:[%s12 + $0xa8] sm:$0xff] %vm1077, %v1397
  %1462 = vst.msk [vmem:[%s12 + $0xb0] sm:$0xff] %vm1077, %v1398
  %1463 = vst.msk [vmem:[%s12 + $0xb8] sm:$0xff] %vm1077, %v1399
  %1464 = vst.msk [vmem:[%s12 + $0xc0] sm:$0xff] %vm1077, %v1400
  %1465 = vst.msk [vmem:[%s12 + $0xc8] sm:$0xff] %vm1077, %v1401
  %1466 = vst.msk [vmem:[%s12 + $0xd0] sm:$0xff] %vm1077, %v1402
  %1467 = vst.msk [vmem:[%s12 + $0xd8] sm:$0xff] %vm1077, %v1403
  %1468 = vst.msk [vmem:[%s12 + $0xe0] sm:$0xff] %vm1077, %v1404
  %1469 = vst.msk [vmem:[%s12 + $0xe8] sm:$0xff] %vm1077, %v1405
  %1470 = vst.msk [vmem:[%s12 + $0xf0] sm:$0xff] %vm1077, %v1406
  %1471 = vst.msk [vmem:[%s12 + $0xf8] sm:$0xff] %vm1077, %v1407
  %1472 = vst.msk [vmem:[%s12 + $0x140] sm:$0xff] %vm1077, %v1408
  %1473 = vst.msk [vmem:[%s12 + $0x148] sm:$0xff] %vm1077, %v1409
  %1474 = vst.msk [vmem:[%s12 + $0x150] sm:$0xff] %vm1077, %v1410
  %1475 = vst.msk [vmem:[%s12 + $0x158] sm:$0xff] %vm1077, %v1411
  %1476 = vst.msk [vmem:[%s12 + $0x160] sm:$0xff] %vm1077, %v1412
  %1477 = vst.msk [vmem:[%s12 + $0x168] sm:$0xff] %vm1077, %v1413
  %1478 = vst.msk [vmem:[%s12 + $0x170] sm:$0xff] %vm1077, %v1414
  %1479 = vst.msk [vmem:[%s12 + $0x178] sm:$0xff] %vm1077, %v1415
  %1480 = vst.msk [vmem:[%s12 + $0x180] sm:$0xff] %vm1077, %v1416
  %1481 = vst.msk [vmem:[%s12 + $0x188] sm:$0xff] %vm1077, %v1417
  %1482 = vst.msk [vmem:[%s12 + $0x190] sm:$0xff] %vm1077, %v1418
  %1483 = vst.msk [vmem:[%s12 + $0x198] sm:$0xff] %vm1077, %v1419
  %1484 = vst.msk [vmem:[%s12 + $0x1a0] sm:$0xff] %vm1077, %v1420
  %1485 = vst.msk [vmem:[%s12 + $0x1a8] sm:$0xff] %vm1077, %v1421
  %1486 = vst.msk [vmem:[%s12 + $0x1b0] sm:$0xff] %vm1077, %v1422
  %1487 = vst.msk [vmem:[%s12 + $0x1b8] sm:$0xff] %vm1077, %v1423
  %1488 = vst.msk [vmem:[%s12 + $0x1c0] sm:$0xff] %vm1077, %v1424
  %1489 = vst.msk [vmem:[%s12 + $0x1c8] sm:$0xff] %vm1077, %v1425
  %1490 = vst.msk [vmem:[%s12 + $0x1d0] sm:$0xff] %vm1077, %v1426
  %1491 = vst.msk [vmem:[%s12 + $0x1d8] sm:$0xff] %vm1077, %v1427
  %1492 = vst.msk [vmem:[%s12 + $0x1e0] sm:$0xff] %vm1077, %v1428
  %1493 = vst.msk [vmem:[%s12 + $0x1e8] sm:$0xff] %vm1077, %v1429
  %1494 = vst.msk [vmem:[%s12 + $0x1f0] sm:$0xff] %vm1077, %v1430
  %1495 = vst.msk [vmem:[%s12 + $0x1f8] sm:$0xff] %vm1077, %v1431
  %1496 = vst.msk [vmem:[%s12 + $0x200] sm:$0xff] %vm1077, %v1432
  %1497 = vst.msk [vmem:[%s12 + $0x208] sm:$0xff] %vm1077, %v1433
  %1498 = vst.msk [vmem:[%s12 + $0x210] sm:$0xff] %vm1077, %v1434
  %1499 = vst.msk [vmem:[%s12 + $0x218] sm:$0xff] %vm1077, %v1435
  %1500 = vst.msk [vmem:[%s12 + $0x220] sm:$0xff] %vm1077, %v1436
  %1501 = vst.msk [vmem:[%s12 + $0x228] sm:$0xff] %vm1077, %v1437
  %1502 = vst.msk [vmem:[%s12 + $0x230] sm:$0xff] %vm1077, %v1438
  %1503 = vst.msk [vmem:[%s12 + $0x238] sm:$0xff] %vm1077, %v1439
  %v1504 = vld [vmem:[%s1] sm:$0xff]
  %v1505 = vld [vmem:[%s1 + $0x8] sm:$0xff]
  %v1506 = vld [vmem:[%s1 + $0x10] sm:$0xff]
  %v1507 = vld [vmem:[%s1 + $0x18] sm:$0xff]
  %v1508 = vld [vmem:[%s1 + $0x20] sm:$0xff]
  %v1509 = vld [vmem:[%s1 + $0x28] sm:$0xff]
  %v1510 = vld [vmem:[%s1 + $0x30] sm:$0xff]
  %v1511 = vld [vmem:[%s1 + $0x38] sm:$0xff]
  %v1512 = vld [vmem:[%s1 + $0x40] sm:$0xff]
  %v1513 = vld [vmem:[%s1 + $0x48] sm:$0xff]
  %v1514 = vld [vmem:[%s1 + $0x50] sm:$0xff]
  %v1515 = vld [vmem:[%s1 + $0x58] sm:$0xff]
  %v1516 = vld [vmem:[%s1 + $0x60] sm:$0xff]
  %v1517 = vld [vmem:[%s1 + $0x68] sm:$0xff]
  %v1518 = vld [vmem:[%s1 + $0x70] sm:$0xff]
  %v1519 = vld [vmem:[%s1 + $0x78] sm:$0xff]
  %v1520 = vld [vmem:[%s7] sm:$0x7]
  %v1521 = vld [vmem:[%s8] sm:$0x1]
  %v1523 = vlaneseq
  %v1524 = vshrl.u32 %v1523, 7
  %v1525 = vsub.s32 0, %v1524
  %v1526 = vrot.slane %v1521, %v1525
  %v1529 = vsel %vm113, %v1504, 0
  %v1532 = vsel %vm113, %v1505, 0
  %v1535 = vsel %vm113, %v1506, 0
  %v1538 = vsel %vm113, %v1507, 0
  %v1541 = vsel %vm113, %v1508, 0
  %v1544 = vsel %vm113, %v1509, 0
  %v1547 = vsel %vm113, %v1510, 0
  %v1550 = vsel %vm113, %v1511, 0
  %v1553 = vsel %vm113, %v1512, 0
  %v1556 = vsel %vm113, %v1513, 0
  %v1559 = vsel %vm113, %v1514, 0
  %v1562 = vsel %vm113, %v1515, 0
  %v1565 = vsel %vm113, %v1516, 0
  %v1568 = vsel %vm113, %v1517, 0
  %v1571 = vsel %vm113, %v1518, 0
  %v1574 = vsel %vm113, %v1519, 0
  %v1577 = vsel %vm306, %v1520, 0
  %1579 = vmatprep.subr.mxu0 0.0
  %1580 = vmatpush1.msra.mxu0 %v1577
  %1581 = vmatprep.subr.mxu0 0.0
  %1582 = vmatpush1.msra.mxu0 0.0
  %1583 = vmatprep.subr.mxu0 0.0
  %1584 = vmatpush1.msra.mxu0 0.0
  %1585 = vmatprep.subr.mxu0 0.0
  %1586 = vmatpush1.msra.mxu0 0.0
  %1587 = vmatprep.subr.mxu0 0.0
  %1588 = vmatpush1.msra.mxu0 0.0
  %1589 = vmatprep.subr.mxu0 0.0
  %1590 = vmatpush1.msra.mxu0 0.0
  %1591 = vmatprep.subr.mxu0 0.0
  %1592 = vmatpush1.msra.mxu0 0.0
  %1593 = vmatprep.subr.mxu0 0.0
  %1594 = vmatpush1.msra.mxu0 0.0
  %1595 = vmatprep.subr.mxu0 0.0
  %1596 = vmatpush1.msra.mxu0 0.0
  %1597 = vmatprep.subr.mxu0 0.0
  %1598 = vmatpush1.msra.mxu0 0.0
  %1599 = vmatprep.subr.mxu0 0.0
  %1600 = vmatpush1.msra.mxu0 0.0
  %1601 = vmatprep.subr.mxu0 0.0
  %1602 = vmatpush1.msra.mxu0 0.0
  %1603 = vmatprep.subr.mxu0 0.0
  %1604 = vmatpush1.msra.mxu0 0.0
  %1605 = vmatprep.subr.mxu0 0.0
  %1606 = vmatpush1.msra.mxu0 0.0
  %1607 = vmatprep.subr.mxu0 0.0
  %1608 = vmatpush1.msra.mxu0 0.0
  %1609 = vmatprep.subr.mxu0 0.0
  %1610 = vmatpush1.msra.mxu0 0.0
  %1611 = vmatprep.subr.mxu0 0.0
  %1612 = vmatpush1.msra.mxu0 0.0
  %1613 = vmatprep.subr.mxu0 0.0
  %1614 = vmatpush1.msra.mxu0 0.0
  %1615 = vmatprep.subr.mxu0 0.0
  %1616 = vmatpush1.msra.mxu0 0.0
  %1617 = vmatprep.subr.mxu0 0.0
  %1618 = vmatpush1.msra.mxu0 0.0
  %1619 = vmatprep.subr.mxu0 0.0
  %1620 = vmatpush1.msra.mxu0 0.0
  %1621 = vmatprep.subr.mxu0 0.0
  %1622 = vmatpush1.msra.mxu0 0.0
  %1623 = vmatprep.subr.mxu0 0.0
  %1624 = vmatpush1.msra.mxu0 0.0
  %1625 = vmatprep.subr.mxu0 0.0
  %1626 = vmatpush1.msra.mxu0 0.0
  %1627 = vmatprep.subr.mxu0 0.0
  %1628 = vmatpush1.msra.mxu0 0.0
  %1629 = vmatprep.subr.mxu0 0.0
  %1630 = vmatpush1.msra.mxu0 0.0
  %1631 = vmatprep.subr.mxu0 0.0
  %1632 = vmatpush1.msra.mxu0 0.0
  %1633 = vmatprep.subr.mxu0 0.0
  %1634 = vmatpush1.msra.mxu0 0.0
  %1635 = vmatprep.subr.mxu0 0.0
  %1636 = vmatpush1.msra.mxu0 0.0
  %1637 = vmatprep.subr.mxu0 0.0
  %1638 = vmatpush1.msra.mxu0 0.0
  %1639 = vmatprep.subr.mxu0 0.0
  %1640 = vmatpush1.msra.mxu0 0.0
  %1641 = vmatprep.subr.mxu0 0.0
  %1642 = vmatpush1.msra.mxu0 0.0
  %1643 = vmatprep.mubr.f32.mxu0 0.0
  %1644 = vmatmul.mubr.f32.gmra.mrb[0].mxu0 %v1529
  %v1645 = vpop.f32.mrb[0].mxu0
  %v1646 = vadd.f32 %v1526, %v1645
  %v1647 = vpop.f32.mrb[0].mxu0
  %1648 = vmatprep.mubr.f32.mxu0 0.0
  %1649 = vmatmul.mubr.f32.gmra.mrb[0].mxu0 %v1532
  %v1650 = vpop.f32.mrb[0].mxu0
  %v1651 = vadd.f32 %v1526, %v1650
  %v1652 = vpop.f32.mrb[0].mxu0
  %1653 = vmatprep.mubr.f32.mxu0 0.0
  %1654 = vmatmul.mubr.f32.gmra.mrb[0].mxu0 %v1535
  %v1655 = vpop.f32.mrb[0].mxu0
  %v1656 = vadd.f32 %v1526, %v1655
  %v1657 = vpop.f32.mrb[0].mxu0
  %1658 = vmatprep.mubr.f32.mxu0 0.0
  %1659 = vmatmul.mubr.f32.gmra.mrb[0].mxu0 %v1538
  %v1660 = vpop.f32.mrb[0].mxu0
  %v1661 = vadd.f32 %v1526, %v1660
  %v1662 = vpop.f32.mrb[0].mxu0
  %1663 = vmatprep.mubr.f32.mxu0 0.0
  %1664 = vmatmul.mubr.f32.gmra.mrb[0].mxu0 %v1541
  %v1665 = vpop.f32.mrb[0].mxu0
  %v1666 = vadd.f32 %v1526, %v1665
  %v1667 = vpop.f32.mrb[0].mxu0
  %1668 = vmatprep.mubr.f32.mxu0 0.0
  %1669 = vmatmul.mubr.f32.gmra.mrb[0].mxu0 %v1544
  %v1670 = vpop.f32.mrb[0].mxu0
  %v1671 = vadd.f32 %v1526, %v1670
  %v1672 = vpop.f32.mrb[0].mxu0
  %1673 = vmatprep.mubr.f32.mxu0 0.0
  %1674 = vmatmul.mubr.f32.gmra.mrb[0].mxu0 %v1547
  %v1675 = vpop.f32.mrb[0].mxu0
  %v1676 = vadd.f32 %v1526, %v1675
  %v1677 = vpop.f32.mrb[0].mxu0
  %1678 = vmatprep.mubr.f32.mxu0 0.0
  %1679 = vmatmul.mubr.f32.gmra.mrb[0].mxu0 %v1550
  %v1680 = vpop.f32.mrb[0].mxu0
  %v1681 = vadd.f32 %v1526, %v1680
  %v1682 = vpop.f32.mrb[0].mxu0
  %1683 = vmatprep.mubr.f32.mxu0 0.0
  %1684 = vmatmul.mubr.f32.gmra.mrb[0].mxu0 %v1553
  %v1685 = vpop.f32.mrb[0].mxu0
  %v1686 = vadd.f32 %v1526, %v1685
  %v1687 = vpop.f32.mrb[0].mxu0
  %1688 = vmatprep.mubr.f32.mxu0 0.0
  %1689 = vmatmul.mubr.f32.gmra.mrb[0].mxu0 %v1556
  %v1690 = vpop.f32.mrb[0].mxu0
  %v1691 = vadd.f32 %v1526, %v1690
  %v1692 = vpop.f32.mrb[0].mxu0
  %1693 = vmatprep.mubr.f32.mxu0 0.0
  %1694 = vmatmul.mubr.f32.gmra.mrb[0].mxu0 %v1559
  %v1695 = vpop.f32.mrb[0].mxu0
  %v1696 = vadd.f32 %v1526, %v1695
  %v1697 = vpop.f32.mrb[0].mxu0
  %1698 = vmatprep.mubr.f32.mxu0 0.0
  %1699 = vmatmul.mubr.f32.gmra.mrb[0].mxu0 %v1562
  %v1700 = vpop.f32.mrb[0].mxu0
  %v1701 = vadd.f32 %v1526, %v1700
  %v1702 = vpop.f32.mrb[0].mxu0
  %1703 = vmatprep.mubr.f32.mxu0 0.0
  %1704 = vmatmul.mubr.f32.gmra.mrb[0].mxu0 %v1565
  %v1705 = vpop.f32.mrb[0].mxu0
  %v1706 = vadd.f32 %v1526, %v1705
  %v1707 = vpop.f32.mrb[0].mxu0
  %1708 = vmatprep.mubr.f32.mxu0 0.0
  %1709 = vmatmul.mubr.f32.gmra.mrb[0].mxu0 %v1568
  %v1710 = vpop.f32.mrb[0].mxu0
  %v1711 = vadd.f32 %v1526, %v1710
  %v1712 = vpop.f32.mrb[0].mxu0
  %1713 = vmatprep.mubr.f32.mxu0 0.0
  %1714 = vmatmul.mubr.f32.gmra.mrb[0].mxu0 %v1571
  %v1715 = vpop.f32.mrb[0].mxu0
  %v1716 = vadd.f32 %v1526, %v1715
  %v1717 = vpop.f32.mrb[0].mxu0
  %1718 = vmatprep.mubr.f32.mxu0 0.0
  %1719 = vmatmul.mubr.f32.gmra.mrb[0].mxu0 %v1574
  %v1720 = vpop.f32.mrb[0].mxu0
  %v1721 = vadd.f32 %v1526, %v1720
  %v1722 = vpop.f32.mrb[0].mxu0
  %1723 = vdwg.mxu0
  %v1724 = vmul.u32 %v696, 64
  %vm1725 = vcmp.ge.s32.totalorder %v698, %v1724
  %v1726 = vmul.u32 %v707, 64
  %vm1727 = vcmp.lt.s32.totalorder %v698, %v1726
  %vm1728 = vmand %vm1725, %vm1727
  %v1729 = vsel %vm1728, 1, 0
  %v1730 = vcvt.s32.f32 %v1729
  %1731 = vmatprep.subr.mxu0 0.0
  %1732 = vmatpush1.msra.mxu0 %v1646
  %1733 = vmatprep.subr.mxu0 0.0
  %1734 = vmatpush1.msra.mxu0 %v1651
  %1735 = vmatprep.subr.mxu0 0.0
  %1736 = vmatpush1.msra.mxu0 %v1656
  %1737 = vmatprep.subr.mxu0 0.0
  %1738 = vmatpush1.msra.mxu0 %v1661
  %1739 = vmatprep.subr.mxu0 0.0
  %1740 = vmatpush1.msra.mxu0 %v1666
  %1741 = vmatprep.subr.mxu0 0.0
  %1742 = vmatpush1.msra.mxu0 %v1671
  %1743 = vmatprep.subr.mxu0 0.0
  %1744 = vmatpush1.msra.mxu0 %v1676
  %1745 = vmatprep.subr.mxu0 0.0
  %1746 = vmatpush1.msra.mxu0 %v1681
  %1747 = vmatprep.subr.mxu0 0.0
  %1748 = vmatpush1.msra.mxu0 %v1686
  %1749 = vmatprep.subr.mxu0 0.0
  %1750 = vmatpush1.msra.mxu0 %v1691
  %1751 = vmatprep.subr.mxu0 0.0
  %1752 = vmatpush1.msra.mxu0 %v1696
  %1753 = vmatprep.subr.mxu0 0.0
  %1754 = vmatpush1.msra.mxu0 %v1701
  %1755 = vmatprep.subr.mxu0 0.0
  %1756 = vmatpush1.msra.mxu0 %v1706
  %1757 = vmatprep.subr.mxu0 0.0
  %1758 = vmatpush1.msra.mxu0 %v1711
  %1759 = vmatprep.subr.mxu0 0.0
  %1760 = vmatpush1.msra.mxu0 %v1716
  %1761 = vmatprep.subr.mxu0 0.0
  %1762 = vmatpush1.msra.mxu0 %v1721
  %1763 = vmatprep.subr.mxu0 0.0
  %1764 = vmatpush1.msra.mxu0 0.0
  %1765 = vmatprep.subr.mxu0 0.0
  %1766 = vmatpush1.msra.mxu0 0.0
  %1767 = vmatprep.subr.mxu0 0.0
  %1768 = vmatpush1.msra.mxu0 0.0
  %1769 = vmatprep.subr.mxu0 0.0
  %1770 = vmatpush1.msra.mxu0 0.0
  %1771 = vmatprep.subr.mxu0 0.0
  %1772 = vmatpush1.msra.mxu0 0.0
  %1773 = vmatprep.subr.mxu0 0.0
  %1774 = vmatpush1.msra.mxu0 0.0
  %1775 = vmatprep.subr.mxu0 0.0
  %1776 = vmatpush1.msra.mxu0 0.0
  %1777 = vmatprep.subr.mxu0 0.0
  %1778 = vmatpush1.msra.mxu0 0.0
  %1779 = vmatprep.subr.mxu0 0.0
  %1780 = vmatpush1.msra.mxu0 0.0
  %1781 = vmatprep.subr.mxu0 0.0
  %1782 = vmatpush1.msra.mxu0 0.0
  %1783 = vmatprep.subr.mxu0 0.0
  %1784 = vmatpush1.msra.mxu0 0.0
  %1785 = vmatprep.subr.mxu0 0.0
  %1786 = vmatpush1.msra.mxu0 0.0
  %1787 = vmatprep.subr.mxu0 0.0
  %1788 = vmatpush1.msra.mxu0 0.0
  %1789 = vmatprep.subr.mxu0 0.0
  %1790 = vmatpush1.msra.mxu0 0.0
  %1791 = vmatprep.subr.mxu0 0.0
  %1792 = vmatpush1.msra.mxu0 0.0
  %1793 = vmatprep.subr.mxu0 0.0
  %1794 = vmatpush1.msra.mxu0 0.0
  %1795 = vmatprep.mubr.f32.mxu0 0.0
  %1796 = vmatmul.mubr.f32.gmra.mrb[0].mxu0 %v1730
  %v1797 = vpop.f32.mrb[0].mxu0
  %v1798 = vadd.f32 0.0, %v1797
  %v1799 = vpop.f32.mrb[0].mxu0
  %1800 = vdwg.mxu0
  %v1801 = vmul.f32 %v1646, %v1646
  %v1802 = vmul.f32 %v1651, %v1651
  %v1803 = vmul.f32 %v1656, %v1656
  %v1804 = vmul.f32 %v1661, %v1661
  %v1805 = vmul.f32 %v1666, %v1666
  %v1806 = vmul.f32 %v1671, %v1671
  %v1807 = vmul.f32 %v1676, %v1676
  %v1808 = vmul.f32 %v1681, %v1681
  %v1809 = vmul.f32 %v1686, %v1686
  %v1810 = vmul.f32 %v1691, %v1691
  %v1811 = vmul.f32 %v1696, %v1696
  %v1812 = vmul.f32 %v1701, %v1701
  %v1813 = vmul.f32 %v1706, %v1706
  %v1814 = vmul.f32 %v1711, %v1711
  %v1815 = vmul.f32 %v1716, %v1716
  %v1816 = vmul.f32 %v1721, %v1721
  %1817 = vmatprep.subr.mxu0 0.0
  %1818 = vmatpush1.msra.mxu0 %v1801
  %1819 = vmatprep.subr.mxu0 0.0
  %1820 = vmatpush1.msra.mxu0 %v1802
  %1821 = vmatprep.subr.mxu0 0.0
  %1822 = vmatpush1.msra.mxu0 %v1803
  %1823 = vmatprep.subr.mxu0 0.0
  %1824 = vmatpush1.msra.mxu0 %v1804
  %1825 = vmatprep.subr.mxu0 0.0
  %1826 = vmatpush1.msra.mxu0 %v1805
  %1827 = vmatprep.subr.mxu0 0.0
  %1828 = vmatpush1.msra.mxu0 %v1806
  %1829 = vmatprep.subr.mxu0 0.0
  %1830 = vmatpush1.msra.mxu0 %v1807
  %1831 = vmatprep.subr.mxu0 0.0
  %1832 = vmatpush1.msra.mxu0 %v1808
  %1833 = vmatprep.subr.mxu0 0.0
  %1834 = vmatpush1.msra.mxu0 %v1809
  %1835 = vmatprep.subr.mxu0 0.0
  %1836 = vmatpush1.msra.mxu0 %v1810
  %1837 = vmatprep.subr.mxu0 0.0
  %1838 = vmatpush1.msra.mxu0 %v1811
  %1839 = vmatprep.subr.mxu0 0.0
  %1840 = vmatpush1.msra.mxu0 %v1812
  %1841 = vmatprep.subr.mxu0 0.0
  %1842 = vmatpush1.msra.mxu0 %v1813
  %1843 = vmatprep.subr.mxu0 0.0
  %1844 = vmatpush1.msra.mxu0 %v1814
  %1845 = vmatprep.subr.mxu0 0.0
  %1846 = vmatpush1.msra.mxu0 %v1815
  %1847 = vmatprep.subr.mxu0 0.0
  %1848 = vmatpush1.msra.mxu0 %v1816
  %1849 = vmatprep.subr.mxu0 0.0
  %1850 = vmatpush1.msra.mxu0 0.0
  %1851 = vmatprep.subr.mxu0 0.0
  %1852 = vmatpush1.msra.mxu0 0.0
  %1853 = vmatprep.subr.mxu0 0.0
  %1854 = vmatpush1.msra.mxu0 0.0
  %1855 = vmatprep.subr.mxu0 0.0
  %1856 = vmatpush1.msra.mxu0 0.0
  %1857 = vmatprep.subr.mxu0 0.0
  %1858 = vmatpush1.msra.mxu0 0.0
  %1859 = vmatprep.subr.mxu0 0.0
  %1860 = vmatpush1.msra.mxu0 0.0
  %1861 = vmatprep.subr.mxu0 0.0
  %1862 = vmatpush1.msra.mxu0 0.0
  %1863 = vmatprep.subr.mxu0 0.0
  %1864 = vmatpush1.msra.mxu0 0.0
  %1865 = vmatprep.subr.mxu0 0.0
  %1866 = vmatpush1.msra.mxu0 0.0
  %1867 = vmatprep.subr.mxu0 0.0
  %1868 = vmatpush1.msra.mxu0 0.0
  %1869 = vmatprep.subr.mxu0 0.0
  %1870 = vmatpush1.msra.mxu0 0.0
  %1871 = vmatprep.subr.mxu0 0.0
  %1872 = vmatpush1.msra.mxu0 0.0
  %1873 = vmatprep.subr.mxu0 0.0
  %1874 = vmatpush1.msra.mxu0 0.0
  %1875 = vmatprep.subr.mxu0 0.0
  %1876 = vmatpush1.msra.mxu0 0.0
  %1877 = vmatprep.subr.mxu0 0.0
  %1878 = vmatpush1.msra.mxu0 0.0
  %1879 = vmatprep.subr.mxu0 0.0
  %1880 = vmatpush1.msra.mxu0 0.0
  %1881 = vmatprep.mubr.f32.mxu0 0.0
  %1882 = vmatmul.mubr.f32.gmra.mrb[0].mxu0 %v1730
  %v1883 = vpop.f32.mrb[0].mxu0
  %v1884 = vadd.f32 0.0, %v1883
  %v1885 = vpop.f32.mrb[0].mxu0
  %1886 = vdwg.mxu0
  %v1887 = vld [vmem:[%s9] sm:$0xff]
  %v1888 = vld [vmem:[%s9 + $0x8] sm:$0xff]
  %v1889 = vld [vmem:[%s9 + $0x10] sm:$0xff]
  %v1890 = vld [vmem:[%s9 + $0x18] sm:$0xff]
  %v1891 = vld [vmem:[%s9 + $0x20] sm:$0xff]
  %v1892 = vld [vmem:[%s9 + $0x28] sm:$0xff]
  %v1893 = vld [vmem:[%s9 + $0x30] sm:$0xff]
  %v1894 = vld [vmem:[%s9 + $0x38] sm:$0xff]
  %v1896 = vsel %vm1077, %v1798, 0
  %1898 = vmatprep.subr.mxu0 0.0
  %1899 = vmatpush1.msra.mxu0 %v1887
  %1900 = vmatprep.subr.mxu0 0.0
  %1901 = vmatpush1.msra.mxu0 %v1888
  %1902 = vmatprep.subr.mxu0 0.0
  %1903 = vmatpush1.msra.mxu0 %v1889
  %1904 = vmatprep.subr.mxu0 0.0
  %1905 = vmatpush1.msra.mxu0 %v1890
  %1906 = vmatprep.subr.mxu0 0.0
  %1907 = vmatpush1.msra.mxu0 %v1891
  %1908 = vmatprep.subr.mxu0 0.0
  %1909 = vmatpush1.msra.mxu0 %v1892
  %1910 = vmatprep.subr.mxu0 0.0
  %1911 = vmatpush1.msra.mxu0 %v1893
  %1912 = vmatprep.subr.mxu0 0.0
  %1913 = vmatpush1.msra.mxu0 %v1894
  %1914 = vmatprep.subr.mxu0 0.0
  %1915 = vmatpush1.msra.mxu0 0.0
  %1916 = vmatprep.subr.mxu0 0.0
  %1917 = vmatpush1.msra.mxu0 0.0
  %1918 = vmatprep.subr.mxu0 0.0
  %1919 = vmatpush1.msra.mxu0 0.0
  %1920 = vmatprep.subr.mxu0 0.0
  %1921 = vmatpush1.msra.mxu0 0.0
  %1922 = vmatprep.subr.mxu0 0.0
  %1923 = vmatpush1.msra.mxu0 0.0
  %1924 = vmatprep.subr.mxu0 0.0
  %1925 = vmatpush1.msra.mxu0 0.0
  %1926 = vmatprep.subr.mxu0 0.0
  %1927 = vmatpush1.msra.mxu0 0.0
  %1928 = vmatprep.subr.mxu0 0.0
  %1929 = vmatpush1.msra.mxu0 0.0
  %1930 = vmatprep.subr.mxu0 0.0
  %1931 = vmatpush1.msra.mxu0 0.0
  %1932 = vmatprep.subr.mxu0 0.0
  %1933 = vmatpush1.msra.mxu0 0.0
  %1934 = vmatprep.subr.mxu0 0.0
  %1935 = vmatpush1.msra.mxu0 0.0
  %1936 = vmatprep.subr.mxu0 0.0
  %1937 = vmatpush1.msra.mxu0 0.0
  %1938 = vmatprep.subr.mxu0 0.0
  %1939 = vmatpush1.msra.mxu0 0.0
  %1940 = vmatprep.subr.mxu0 0.0
  %1941 = vmatpush1.msra.mxu0 0.0
  %1942 = vmatprep.subr.mxu0 0.0
  %1943 = vmatpush1.msra.mxu0 0.0
  %1944 = vmatprep.subr.mxu0 0.0
  %1945 = vmatpush1.msra.mxu0 0.0
  %1946 = vmatprep.subr.mxu0 0.0
  %1947 = vmatpush1.msra.mxu0 0.0
  %1948 = vmatprep.subr.mxu0 0.0
  %1949 = vmatpush1.msra.mxu0 0.0
  %1950 = vmatprep.subr.mxu0 0.0
  %1951 = vmatpush1.msra.mxu0 0.0
  %1952 = vmatprep.subr.mxu0 0.0
  %1953 = vmatpush1.msra.mxu0 0.0
  %1954 = vmatprep.subr.mxu0 0.0
  %1955 = vmatpush1.msra.mxu0 0.0
  %1956 = vmatprep.subr.mxu0 0.0
  %1957 = vmatpush1.msra.mxu0 0.0
  %1958 = vmatprep.subr.mxu0 0.0
  %1959 = vmatpush1.msra.mxu0 0.0
  %1960 = vmatprep.subr.mxu0 0.0
  %1961 = vmatpush1.msra.mxu0 0.0
  %1962 = vmatprep.mubr.f32.mxu0 0.0
  %1963 = vmatmul.mubr.f32.gmra.mrb[0].mxu0 %v1896
  %v1964 = vpop.f32.mrb[0].mxu0
  %v1965 = vadd.f32 0.0, %v1964
  %v1966 = vpop.f32.mrb[0].mxu0
  %1967 = vdwg.mxu0
  %v1969 = vsel %vm1077, %v1884, 0
  %1971 = vmatprep.subr.mxu0 0.0
  %1972 = vmatpush1.msra.mxu0 %v1887
  %1973 = vmatprep.subr.mxu0 0.0
  %1974 = vmatpush1.msra.mxu0 %v1888
  %1975 = vmatprep.subr.mxu0 0.0
  %1976 = vmatpush1.msra.mxu0 %v1889
  %1977 = vmatprep.subr.mxu0 0.0
  %1978 = vmatpush1.msra.mxu0 %v1890
  %1979 = vmatprep.subr.mxu0 0.0
  %1980 = vmatpush1.msra.mxu0 %v1891
  %1981 = vmatprep.subr.mxu0 0.0
  %1982 = vmatpush1.msra.mxu0 %v1892
  %1983 = vmatprep.subr.mxu0 0.0
  %1984 = vmatpush1.msra.mxu0 %v1893
  %1985 = vmatprep.subr.mxu0 0.0
  %1986 = vmatpush1.msra.mxu0 %v1894
  %1987 = vmatprep.subr.mxu0 0.0
  %1988 = vmatpush1.msra.mxu0 0.0
  %1989 = vmatprep.subr.mxu0 0.0
  %1990 = vmatpush1.msra.mxu0 0.0
  %1991 = vmatprep.subr.mxu0 0.0
  %1992 = vmatpush1.msra.mxu0 0.0
  %1993 = vmatprep.subr.mxu0 0.0
  %1994 = vmatpush1.msra.mxu0 0.0
  %1995 = vmatprep.subr.mxu0 0.0
  %1996 = vmatpush1.msra.mxu0 0.0
  %1997 = vmatprep.subr.mxu0 0.0
  %1998 = vmatpush1.msra.mxu0 0.0
  %1999 = vmatprep.subr.mxu0 0.0
  %2000 = vmatpush1.msra.mxu0 0.0
  %2001 = vmatprep.subr.mxu0 0.0
  %2002 = vmatpush1.msra.mxu0 0.0
  %2003 = vmatprep.subr.mxu0 0.0
  %2004 = vmatpush1.msra.mxu0 0.0
  %2005 = vmatprep.subr.mxu0 0.0
  %2006 = vmatpush1.msra.mxu0 0.0
  %2007 = vmatprep.subr.mxu0 0.0
  %2008 = vmatpush1.msra.mxu0 0.0
  %2009 = vmatprep.subr.mxu0 0.0
  %2010 = vmatpush1.msra.mxu0 0.0
  %2011 = vmatprep.subr.mxu0 0.0
  %2012 = vmatpush1.msra.mxu0 0.0
  %2013 = vmatprep.subr.mxu0 0.0
  %2014 = vmatpush1.msra.mxu0 0.0
  %2015 = vmatprep.subr.mxu0 0.0
  %2016 = vmatpush1.msra.mxu0 0.0
  %2017 = vmatprep.subr.mxu0 0.0
  %2018 = vmatpush1.msra.mxu0 0.0
  %2019 = vmatprep.subr.mxu0 0.0
  %2020 = vmatpush1.msra.mxu0 0.0
  %2021 = vmatprep.subr.mxu0 0.0
  %2022 = vmatpush1.msra.mxu0 0.0
  %2023 = vmatprep.subr.mxu0 0.0
  %2024 = vmatpush1.msra.mxu0 0.0
  %2025 = vmatprep.subr.mxu0 0.0
  %2026 = vmatpush1.msra.mxu0 0.0
  %2027 = vmatprep.subr.mxu0 0.0
  %2028 = vmatpush1.msra.mxu0 0.0
  %2029 = vmatprep.subr.mxu0 0.0
  %2030 = vmatpush1.msra.mxu0 0.0
  %2031 = vmatprep.subr.mxu0 0.0
  %2032 = vmatpush1.msra.mxu0 0.0
  %2033 = vmatprep.subr.mxu0 0.0
  %2034 = vmatpush1.msra.mxu0 0.0
  %2035 = vmatprep.mubr.f32.mxu0 0.0
  %2036 = vmatmul.mubr.f32.gmra.mrb[0].mxu0 %v1969
  %v2037 = vpop.f32.mrb[0].mxu0
  %v2038 = vadd.f32 0.0, %v2037
  %v2039 = vpop.f32.mrb[0].mxu0
  %2040 = vdwg.mxu0
  %v2041 = vmul.f32 %v1965, %v1965
  %v2042 = vsub.f32 %v2038, %v2041
  %v2043 = vmax.f32 %v2042, 0.0
  %v2044 = vadd.f32 %v2043, 1e-05
  %v2045 = vrsqrt.pop %v2044
  %v2046 = vld [vmem:[%s10] sm:$0x1]
  %v2048 = vlaneseq
  %v2049 = vshrl.u32 %v2048, 7
  %v2050 = vsub.s32 0, %v2049
  %v2051 = vrot.slane %v2046, %v2050
  %v2053 = vmul.f32 %v2045, %v2051
  %v2054 = vld [vmem:[%s11] sm:$0x1]
  %v2055 = vmul.f32 %v1965, %v2053
  %v2057 = vlaneseq
  %v2058 = vshrl.u32 %v2057, 7
  %v2059 = vsub.s32 0, %v2058
  %v2060 = vrot.slane %v2054, %v2059
  %v2062 = vsub.f32 %v2060, %v2055
  %v2065 = vunpack.c.l.s4 1966171168
  %v2066 = vunpack.c.0.s8 %v2065
  %v2067 = vlaneseq
  %v2068 = vshrl.u32 %v2067, 7
  %v2069 = vsub.s32 %v2066, %v2068
  %v2070 = vrot.slane %v2053, %v2069
  %v2071 = vcombine.high %v2070, %v2070
  %v2073 = vunpack.c.l.s4 1966171168
  %v2074 = vunpack.c.0.s8 %v2073
  %v2075 = vlaneseq
  %v2076 = vshrl.u32 %v2075, 7
  %v2077 = vsub.s32 %v2074, %v2076
  %v2078 = vrot.slane %v2070, %v2077
  %v2080 = vunpack.c.l.s4 1966171168
  %v2081 = vunpack.c.0.s8 %v2080
  %v2082 = vlaneseq
  %v2083 = vshrl.u32 %v2082, 7
  %v2084 = vsub.s32 %v2081, %v2083
  %v2085 = vrot.slane %v2071, %v2084
  %v2086 = vlaneseq
  %v2087 = vshrl.u32 %v2086, 7
  %v2088 = vsub.s32 0, %v2087
  %v2089 = vrot.slane %v2078, %v2088
  %v2090 = vlaneseq
  %v2091 = vshrl.u32 %v2090, 7
  %v2092 = vsub.s32 0, %v2091
  %v2093 = vrot.slane %v2085, %v2092
  %v2096 = vmul.f32 %v1646, %v2089
  %v2097 = vmul.f32 %v1651, %v2089
  %v2098 = vmul.f32 %v1656, %v2089
  %v2099 = vmul.f32 %v1661, %v2089
  %v2100 = vmul.f32 %v1666, %v2089
  %v2101 = vmul.f32 %v1671, %v2089
  %v2102 = vmul.f32 %v1676, %v2089
  %v2103 = vmul.f32 %v1681, %v2089
  %v2104 = vmul.f32 %v1686, %v2093
  %v2105 = vmul.f32 %v1691, %v2093
  %v2106 = vmul.f32 %v1696, %v2093
  %v2107 = vmul.f32 %v1701, %v2093
  %v2108 = vmul.f32 %v1706, %v2093
  %v2109 = vmul.f32 %v1711, %v2093
  %v2110 = vmul.f32 %v1716, %v2093
  %v2111 = vmul.f32 %v1721, %v2093
  %v2114 = vunpack.c.l.s4 1966171168
  %v2115 = vunpack.c.0.s8 %v2114
  %v2116 = vlaneseq
  %v2117 = vshrl.u32 %v2116, 7
  %v2118 = vsub.s32 %v2115, %v2117
  %v2119 = vrot.slane %v2062, %v2118
  %v2120 = vcombine.high %v2119, %v2119
  %v2122 = vunpack.c.l.s4 1966171168
  %v2123 = vunpack.c.0.s8 %v2122
  %v2124 = vlaneseq
  %v2125 = vshrl.u32 %v2124, 7
  %v2126 = vsub.s32 %v2123, %v2125
  %v2127 = vrot.slane %v2119, %v2126
  %v2129 = vunpack.c.l.s4 1966171168
  %v2130 = vunpack.c.0.s8 %v2129
  %v2131 = vlaneseq
  %v2132 = vshrl.u32 %v2131, 7
  %v2133 = vsub.s32 %v2130, %v2132
  %v2134 = vrot.slane %v2120, %v2133
  %v2135 = vlaneseq
  %v2136 = vshrl.u32 %v2135, 7
  %v2137 = vsub.s32 0, %v2136
  %v2138 = vrot.slane %v2127, %v2137
  %v2139 = vlaneseq
  %v2140 = vshrl.u32 %v2139, 7
  %v2141 = vsub.s32 0, %v2140
  %v2142 = vrot.slane %v2134, %v2141
  %v2145 = vadd.f32 %v2096, %v2138
  %v2146 = vadd.f32 %v2097, %v2138
  %v2147 = vadd.f32 %v2098, %v2138
  %v2148 = vadd.f32 %v2099, %v2138
  %v2149 = vadd.f32 %v2100, %v2138
  %v2150 = vadd.f32 %v2101, %v2138
  %v2151 = vadd.f32 %v2102, %v2138
  %v2152 = vadd.f32 %v2103, %v2138
  %v2153 = vadd.f32 %v2104, %v2142
  %v2154 = vadd.f32 %v2105, %v2142
  %v2155 = vadd.f32 %v2106, %v2142
  %v2156 = vadd.f32 %v2107, %v2142
  %v2157 = vadd.f32 %v2108, %v2142
  %v2158 = vadd.f32 %v2109, %v2142
  %v2159 = vadd.f32 %v2110, %v2142
  %v2160 = vadd.f32 %v2111, %v2142
  %2161 = vst.msk [vmem:[%s12 + $0x100] sm:$0xff] %vm1077, %v2145
  %2162 = vst.msk [vmem:[%s12 + $0x108] sm:$0xff] %vm1077, %v2146
  %2163 = vst.msk [vmem:[%s12 + $0x110] sm:$0xff] %vm1077, %v2147
  %2164 = vst.msk [vmem:[%s12 + $0x118] sm:$0xff] %vm1077, %v2148
  %2165 = vst.msk [vmem:[%s12 + $0x120] sm:$0xff] %vm1077, %v2149
  %2166 = vst.msk [vmem:[%s12 + $0x128] sm:$0xff] %vm1077, %v2150
  %2167 = vst.msk [vmem:[%s12 + $0x130] sm:$0xff] %vm1077, %v2151
  %2168 = vst.msk [vmem:[%s12 + $0x138] sm:$0xff] %vm1077, %v2152
  %2169 = vst.msk [vmem:[%s12 + $0x240] sm:$0xff] %vm1077, %v2153
  %2170 = vst.msk [vmem:[%s12 + $0x248] sm:$0xff] %vm1077, %v2154
  %2171 = vst.msk [vmem:[%s12 + $0x250] sm:$0xff] %vm1077, %v2155
  %2172 = vst.msk [vmem:[%s12 + $0x258] sm:$0xff] %vm1077, %v2156
  %2173 = vst.msk [vmem:[%s12 + $0x260] sm:$0xff] %vm1077, %v2157
  %2174 = vst.msk [vmem:[%s12 + $0x268] sm:$0xff] %vm1077, %v2158
  %2175 = vst.msk [vmem:[%s12 + $0x270] sm:$0xff] %vm1077, %v2159
  %2176 = vst.msk [vmem:[%s12 + $0x278] sm:$0xff] %vm1077, %v2160
  // Predicated region
  $region50: #{deformable_detr_forward.2} parent=0 // pred_check
    _
  $region51: #{deformable_detr_forward.2} parent=0 // pred_check_branch
    %2178 = sbr.rel (0) target = $region53
  $region52: #{deformable_detr_forward.2} parent=0 // pred_region
    _
  $region53: #{deformable_detr_forward.2} parent=0 // pred_fallthru
    _
  // Predicated region
  $region54: #{deformable_detr_forward.2} parent=0 // pred_check
    _
  $region55: #{deformable_detr_forward.2} parent=0 // pred_check_branch
    %2180 = sbr.rel (0) target = $region57
  $region56: #{deformable_detr_forward.2} parent=0 // pred_region
    _
  $region57: #{deformable_detr_forward.2} parent=0 // pred_fallthru
    _

// kernel: deformable_detr_forward.3
$region0: #{deformable_detr_forward.3}
  #allocation0 [shape = 'u32[]', space=smem, size = 0x4, offset = 0x4, fixed_abs, tag = 'smem constant byte address 0x4 - core index']
  #allocation1 [shape = 'u32[144,128]{1,0:T(1,128)}', space=vmem, size = 0x12000, scoped, tag = 'internal scratch']
  %s0 = inlined_call_operand.vmem [shape: f32[48,64], index: 0, kind: input, shape index: {}]
  %s1 = inlined_call_operand.vmem [shape: f32[48,128], index: 1, kind: input, shape index: {}]
  %s2 = inlined_call_operand.vmem [shape: f32[64,64], index: 2, kind: input, shape index: {}]
  %s3 = inlined_call_operand.vmem [shape: f32[1,64], index: 3, kind: input, shape index: {}]
  %s4 = inlined_call_operand.vmem [shape: f32[64,64], index: 4, kind: input, shape index: {}]
  %s5 = inlined_call_operand.vmem [shape: f32[1,64], index: 5, kind: input, shape index: {}]
  %s6 = inlined_call_operand.vmem [shape: f32[128,128], index: 6, kind: input, shape index: {}]
  %s7 = inlined_call_operand.vmem [shape: f32[48,128], index: 7, kind: output, shape index: {}]
  %s8 = sld [smem:[#allocation0]]
  $region38: #{deformable_detr_forward.3} parent=0
    _
  %s10 = ssub.s32 1, %s8
  %s11 = scalar_select 0, %s10, %s8
  // Predicated region
  $region2: #{deformable_detr_forward.3} parent=0 // pred_check
    _
  $region3: #{deformable_detr_forward.3} parent=0 // pred_check_branch
    %13 = sbr.rel (0) target = $region5
  $region4: #{deformable_detr_forward.3} parent=0 // pred_region
    _
  $region5: #{deformable_detr_forward.3} parent=0 // pred_fallthru
    _
  // Predicated region
  $region6: #{deformable_detr_forward.3} parent=0 // pred_check
    _
  $region7: #{deformable_detr_forward.3} parent=0 // pred_check_branch
    %15 = sbr.rel (0) target = $region9
  $region8: #{deformable_detr_forward.3} parent=0 // pred_region
    _
  $region9: #{deformable_detr_forward.3} parent=0 // pred_fallthru
    _
  // Predicated region
  $region10: #{deformable_detr_forward.3} parent=0 // pred_check
    _
  $region11: #{deformable_detr_forward.3} parent=0 // pred_check_branch
    %17 = sbr.rel (0) target = $region13
  $region12: #{deformable_detr_forward.3} parent=0 // pred_region
    _
  $region13: #{deformable_detr_forward.3} parent=0 // pred_fallthru
    _
  // Predicated region
  $region14: #{deformable_detr_forward.3} parent=0 // pred_check
    _
  $region15: #{deformable_detr_forward.3} parent=0 // pred_check_branch
    %19 = sbr.rel (0) target = $region17
  $region16: #{deformable_detr_forward.3} parent=0 // pred_region
    _
  $region17: #{deformable_detr_forward.3} parent=0 // pred_fallthru
    _
  // Predicated region
  $region18: #{deformable_detr_forward.3} parent=0 // pred_check
    _
  $region19: #{deformable_detr_forward.3} parent=0 // pred_check_branch
    %21 = sbr.rel (0) target = $region21
  $region20: #{deformable_detr_forward.3} parent=0 // pred_region
    _
  $region21: #{deformable_detr_forward.3} parent=0 // pred_fallthru
    _
  // Predicated region
  $region22: #{deformable_detr_forward.3} parent=0 // pred_check
    _
  $region23: #{deformable_detr_forward.3} parent=0 // pred_check_branch
    %23 = sbr.rel (0) target = $region25
  $region24: #{deformable_detr_forward.3} parent=0 // pred_region
    _
  $region25: #{deformable_detr_forward.3} parent=0 // pred_fallthru
    _
  // Predicated region
  $region26: #{deformable_detr_forward.3} parent=0 // pred_check
    _
  $region27: #{deformable_detr_forward.3} parent=0 // pred_check_branch
    %25 = sbr.rel (0) target = $region29
  $region28: #{deformable_detr_forward.3} parent=0 // pred_region
    _
  $region29: #{deformable_detr_forward.3} parent=0 // pred_fallthru
    _
  %v26 = vld [vmem:[%s0] sm:$0xff]
  %v27 = vld [vmem:[%s0 + $0x8] sm:$0xff]
  %v28 = vld [vmem:[%s0 + $0x10] sm:$0xff]
  %v29 = vld [vmem:[%s0 + $0x18] sm:$0xff]
  %v30 = vld [vmem:[%s0 + $0x20] sm:$0xff]
  %v31 = vld [vmem:[%s0 + $0x28] sm:$0xff]
  %v32 = vld [vmem:[%s2] sm:$0xff]
  %v33 = vld [vmem:[%s2 + $0x8] sm:$0xff]
  %v34 = vld [vmem:[%s2 + $0x10] sm:$0xff]
  %v35 = vld [vmem:[%s2 + $0x18] sm:$0xff]
  %v36 = vld [vmem:[%s2 + $0x20] sm:$0xff]
  %v37 = vld [vmem:[%s2 + $0x28] sm:$0xff]
  %v38 = vld [vmem:[%s2 + $0x30] sm:$0xff]
  %v39 = vld [vmem:[%s2 + $0x38] sm:$0xff]
  %v40 = vld [vmem:[%s3] sm:$0x1]
  %v42 = vlaneseq
  %v43 = vshrl.u32 %v42, 7
  %v44 = vsub.s32 0, %v43
  %v45 = vrot.slane %v40, %v44
  %vm47 = vcmask 523264
  %v49 = vsel %vm47, %v26, 0
  %v52 = vsel %vm47, %v27, 0
  %v55 = vsel %vm47, %v28, 0
  %v58 = vsel %vm47, %v29, 0
  %v61 = vsel %vm47, %v30, 0
  %v64 = vsel %vm47, %v31, 0
  %66 = vmatprep.subr.mxu0 0.0
  %67 = vmatpush1.msra.mxu0 %v32
  %68 = vmatprep.subr.mxu0 0.0
  %69 = vmatpush1.msra.mxu0 %v33
  %70 = vmatprep.subr.mxu0 0.0
  %71 = vmatpush1.msra.mxu0 %v34
  %72 = vmatprep.subr.mxu0 0.0
  %73 = vmatpush1.msra.mxu0 %v35
  %74 = vmatprep.subr.mxu0 0.0
  %75 = vmatpush1.msra.mxu0 %v36
  %76 = vmatprep.subr.mxu0 0.0
  %77 = vmatpush1.msra.mxu0 %v37
  %78 = vmatprep.subr.mxu0 0.0
  %79 = vmatpush1.msra.mxu0 %v38
  %80 = vmatprep.subr.mxu0 0.0
  %81 = vmatpush1.msra.mxu0 %v39
  %82 = vmatprep.subr.mxu0 0.0
  %83 = vmatpush1.msra.mxu0 0.0
  %84 = vmatprep.subr.mxu0 0.0
  %85 = vmatpush1.msra.mxu0 0.0
  %86 = vmatprep.subr.mxu0 0.0
  %87 = vmatpush1.msra.mxu0 0.0
  %88 = vmatprep.subr.mxu0 0.0
  %89 = vmatpush1.msra.mxu0 0.0
  %90 = vmatprep.subr.mxu0 0.0
  %91 = vmatpush1.msra.mxu0 0.0
  %92 = vmatprep.subr.mxu0 0.0
  %93 = vmatpush1.msra.mxu0 0.0
  %94 = vmatprep.subr.mxu0 0.0
  %95 = vmatpush1.msra.mxu0 0.0
  %96 = vmatprep.subr.mxu0 0.0
  %97 = vmatpush1.msra.mxu0 0.0
  %98 = vmatprep.subr.mxu0 0.0
  %99 = vmatpush1.msra.mxu0 0.0
  %100 = vmatprep.subr.mxu0 0.0
  %101 = vmatpush1.msra.mxu0 0.0
  %102 = vmatprep.subr.mxu0 0.0
  %103 = vmatpush1.msra.mxu0 0.0
  %104 = vmatprep.subr.mxu0 0.0
  %105 = vmatpush1.msra.mxu0 0.0
  %106 = vmatprep.subr.mxu0 0.0
  %107 = vmatpush1.msra.mxu0 0.0
  %108 = vmatprep.subr.mxu0 0.0
  %109 = vmatpush1.msra.mxu0 0.0
  %110 = vmatprep.subr.mxu0 0.0
  %111 = vmatpush1.msra.mxu0 0.0
  %112 = vmatprep.subr.mxu0 0.0
  %113 = vmatpush1.msra.mxu0 0.0
  %114 = vmatprep.subr.mxu0 0.0
  %115 = vmatpush1.msra.mxu0 0.0
  %116 = vmatprep.subr.mxu0 0.0
  %117 = vmatpush1.msra.mxu0 0.0
  %118 = vmatprep.subr.mxu0 0.0
  %119 = vmatpush1.msra.mxu0 0.0
  %120 = vmatprep.subr.mxu0 0.0
  %121 = vmatpush1.msra.mxu0 0.0
  %122 = vmatprep.subr.mxu0 0.0
  %123 = vmatpush1.msra.mxu0 0.0
  %124 = vmatprep.subr.mxu0 0.0
  %125 = vmatpush1.msra.mxu0 0.0
  %126 = vmatprep.subr.mxu0 0.0
  %127 = vmatpush1.msra.mxu0 0.0
  %128 = vmatprep.subr.mxu0 0.0
  %129 = vmatpush1.msra.mxu0 0.0
  %130 = vmatprep.mubr.f32.mxu0 0.0
  %131 = vmatmul.mubr.f32.gmra.mrb[0].mxu0 %v49
  %v132 = vpop.f32.mrb[0].mxu0
  %v133 = vadd.f32 %v45, %v132
  %v134 = vpop.f32.mrb[0].mxu0
  %135 = vmatprep.mubr.f32.mxu0 0.0
  %136 = vmatmul.mubr.f32.gmra.mrb[0].mxu0 %v52
  %v137 = vpop.f32.mrb[0].mxu0
  %v138 = vadd.f32 %v45, %v137
  %v139 = vpop.f32.mrb[0].mxu0
  %140 = vmatprep.mubr.f32.mxu0 0.0
  %141 = vmatmul.mubr.f32.gmra.mrb[0].mxu0 %v55
  %v142 = vpop.f32.mrb[0].mxu0
  %v143 = vadd.f32 %v45, %v142
  %v144 = vpop.f32.mrb[0].mxu0
  %145 = vmatprep.mubr.f32.mxu0 0.0
  %146 = vmatmul.mubr.f32.gmra.mrb[0].mxu0 %v58
  %v147 = vpop.f32.mrb[0].mxu0
  %v148 = vadd.f32 %v45, %v147
  %v149 = vpop.f32.mrb[0].mxu0
  %150 = vmatprep.mubr.f32.mxu0 0.0
  %151 = vmatmul.mubr.f32.gmra.mrb[0].mxu0 %v61
  %v152 = vpop.f32.mrb[0].mxu0
  %v153 = vadd.f32 %v45, %v152
  %v154 = vpop.f32.mrb[0].mxu0
  %155 = vmatprep.mubr.f32.mxu0 0.0
  %156 = vmatmul.mubr.f32.gmra.mrb[0].mxu0 %v64
  %v157 = vpop.f32.mrb[0].mxu0
  %v158 = vadd.f32 %v45, %v157
  %v159 = vpop.f32.mrb[0].mxu0
  %160 = vdwg.mxu0
  %v161 = vmax.f32 %v133, 0.0
  %v162 = vmax.f32 %v138, 0.0
  %v163 = vmax.f32 %v143, 0.0
  %v164 = vmax.f32 %v148, 0.0
  %v165 = vmax.f32 %v153, 0.0
  %v166 = vmax.f32 %v158, 0.0
  %v167 = vld [vmem:[%s4] sm:$0xff]
  %v168 = vld [vmem:[%s4 + $0x8] sm:$0xff]
  %v169 = vld [vmem:[%s4 + $0x10] sm:$0xff]
  %v170 = vld [vmem:[%s4 + $0x18] sm:$0xff]
  %v171 = vld [vmem:[%s4 + $0x20] sm:$0xff]
  %v172 = vld [vmem:[%s4 + $0x28] sm:$0xff]
  %v173 = vld [vmem:[%s4 + $0x30] sm:$0xff]
  %v174 = vld [vmem:[%s4 + $0x38] sm:$0xff]
  %v175 = vld [vmem:[%s5] sm:$0x1]
  %v177 = vlaneseq
  %v178 = vshrl.u32 %v177, 7
  %v179 = vsub.s32 0, %v178
  %v180 = vrot.slane %v175, %v179
  %v183 = vsel %vm47, %v161, 0
  %v186 = vsel %vm47, %v162, 0
  %v189 = vsel %vm47, %v163, 0
  %v192 = vsel %vm47, %v164, 0
  %v195 = vsel %vm47, %v165, 0
  %v198 = vsel %vm47, %v166, 0
  %200 = vmatprep.subr.mxu0 0.0
  %201 = vmatpush1.msra.mxu0 %v167
  %202 = vmatprep.subr.mxu0 0.0
  %203 = vmatpush1.msra.mxu0 %v168
  %204 = vmatprep.subr.mxu0 0.0
  %205 = vmatpush1.msra.mxu0 %v169
  %206 = vmatprep.subr.mxu0 0.0
  %207 = vmatpush1.msra.mxu0 %v170
  %208 = vmatprep.subr.mxu0 0.0
  %209 = vmatpush1.msra.mxu0 %v171
  %210 = vmatprep.subr.mxu0 0.0
  %211 = vmatpush1.msra.mxu0 %v172
  %212 = vmatprep.subr.mxu0 0.0
  %213 = vmatpush1.msra.mxu0 %v173
  %214 = vmatprep.subr.mxu0 0.0
  %215 = vmatpush1.msra.mxu0 %v174
  %216 = vmatprep.subr.mxu0 0.0
  %217 = vmatpush1.msra.mxu0 0.0
  %218 = vmatprep.subr.mxu0 0.0
  %219 = vmatpush1.msra.mxu0 0.0
  %220 = vmatprep.subr.mxu0 0.0
  %221 = vmatpush1.msra.mxu0 0.0
  %222 = vmatprep.subr.mxu0 0.0
  %223 = vmatpush1.msra.mxu0 0.0
  %224 = vmatprep.subr.mxu0 0.0
  %225 = vmatpush1.msra.mxu0 0.0
  %226 = vmatprep.subr.mxu0 0.0
  %227 = vmatpush1.msra.mxu0 0.0
  %228 = vmatprep.subr.mxu0 0.0
  %229 = vmatpush1.msra.mxu0 0.0
  %230 = vmatprep.subr.mxu0 0.0
  %231 = vmatpush1.msra.mxu0 0.0
  %232 = vmatprep.subr.mxu0 0.0
  %233 = vmatpush1.msra.mxu0 0.0
  %234 = vmatprep.subr.mxu0 0.0
  %235 = vmatpush1.msra.mxu0 0.0
  %236 = vmatprep.subr.mxu0 0.0
  %237 = vmatpush1.msra.mxu0 0.0
  %238 = vmatprep.subr.mxu0 0.0
  %239 = vmatpush1.msra.mxu0 0.0
  %240 = vmatprep.subr.mxu0 0.0
  %241 = vmatpush1.msra.mxu0 0.0
  %242 = vmatprep.subr.mxu0 0.0
  %243 = vmatpush1.msra.mxu0 0.0
  %244 = vmatprep.subr.mxu0 0.0
  %245 = vmatpush1.msra.mxu0 0.0
  %246 = vmatprep.subr.mxu0 0.0
  %247 = vmatpush1.msra.mxu0 0.0
  %248 = vmatprep.subr.mxu0 0.0
  %249 = vmatpush1.msra.mxu0 0.0
  %250 = vmatprep.subr.mxu0 0.0
  %251 = vmatpush1.msra.mxu0 0.0
  %252 = vmatprep.subr.mxu0 0.0
  %253 = vmatpush1.msra.mxu0 0.0
  %254 = vmatprep.subr.mxu0 0.0
  %255 = vmatpush1.msra.mxu0 0.0
  %256 = vmatprep.subr.mxu0 0.0
  %257 = vmatpush1.msra.mxu0 0.0
  %258 = vmatprep.subr.mxu0 0.0
  %259 = vmatpush1.msra.mxu0 0.0
  %260 = vmatprep.subr.mxu0 0.0
  %261 = vmatpush1.msra.mxu0 0.0
  %262 = vmatprep.subr.mxu0 0.0
  %263 = vmatpush1.msra.mxu0 0.0
  %264 = vmatprep.mubr.f32.mxu0 0.0
  %265 = vmatmul.mubr.f32.gmra.mrb[0].mxu0 %v183
  %v266 = vpop.f32.mrb[0].mxu0
  %v267 = vadd.f32 %v180, %v266
  %v268 = vpop.f32.mrb[0].mxu0
  %269 = vmatprep.mubr.f32.mxu0 0.0
  %270 = vmatmul.mubr.f32.gmra.mrb[0].mxu0 %v186
  %v271 = vpop.f32.mrb[0].mxu0
  %v272 = vadd.f32 %v180, %v271
  %v273 = vpop.f32.mrb[0].mxu0
  %274 = vmatprep.mubr.f32.mxu0 0.0
  %275 = vmatmul.mubr.f32.gmra.mrb[0].mxu0 %v189
  %v276 = vpop.f32.mrb[0].mxu0
  %v277 = vadd.f32 %v180, %v276
  %v278 = vpop.f32.mrb[0].mxu0
  %279 = vmatprep.mubr.f32.mxu0 0.0
  %280 = vmatmul.mubr.f32.gmra.mrb[0].mxu0 %v192
  %v281 = vpop.f32.mrb[0].mxu0
  %v282 = vadd.f32 %v180, %v281
  %v283 = vpop.f32.mrb[0].mxu0
  %284 = vmatprep.mubr.f32.mxu0 0.0
  %285 = vmatmul.mubr.f32.gmra.mrb[0].mxu0 %v195
  %v286 = vpop.f32.mrb[0].mxu0
  %v287 = vadd.f32 %v180, %v286
  %v288 = vpop.f32.mrb[0].mxu0
  %289 = vmatprep.mubr.f32.mxu0 0.0
  %290 = vmatmul.mubr.f32.gmra.mrb[0].mxu0 %v198
  %v291 = vpop.f32.mrb[0].mxu0
  %v292 = vadd.f32 %v180, %v291
  %v293 = vpop.f32.mrb[0].mxu0
  %294 = vdwg.mxu0
  %v295 = vmax.f32 %v267, 0.0
  %v296 = vmax.f32 %v272, 0.0
  %v297 = vmax.f32 %v277, 0.0
  %v298 = vmax.f32 %v282, 0.0
  %v299 = vmax.f32 %v287, 0.0
  %v300 = vmax.f32 %v292, 0.0
  %301 = vrot.lane.b32.xlu0 %v26, 64
  %v302 = vpop.permute.xlu0 %301
  %303 = vrot.lane.b32.xlu0 %v27, 64
  %v304 = vpop.permute.xlu0 %303
  %305 = vrot.lane.b32.xlu0 %v28, 64
  %v306 = vpop.permute.xlu0 %305
  %307 = vrot.lane.b32.xlu0 %v29, 64
  %v308 = vpop.permute.xlu0 %307
  %309 = vrot.lane.b32.xlu0 %v30, 64
  %v310 = vpop.permute.xlu0 %309
  %311 = vrot.lane.b32.xlu0 %v31, 64
  %v312 = vpop.permute.xlu0 %311
  %v319 = vsel %vm47, %v295, %v302
  %v320 = vsel %vm47, %v296, %v304
  %v321 = vsel %vm47, %v297, %v306
  %v322 = vsel %vm47, %v298, %v308
  %v323 = vsel %vm47, %v299, %v310
  %v324 = vsel %vm47, %v300, %v312
  %v325 = vld [vmem:[%s6] sm:$0xff]
  %v326 = vld [vmem:[%s6 + $0x8] sm:$0xff]
  %v327 = vld [vmem:[%s6 + $0x10] sm:$0xff]
  %v328 = vld [vmem:[%s6 + $0x18] sm:$0xff]
  %v329 = vld [vmem:[%s6 + $0x20] sm:$0xff]
  %v330 = vld [vmem:[%s6 + $0x28] sm:$0xff]
  %v331 = vld [vmem:[%s6 + $0x30] sm:$0xff]
  %v332 = vld [vmem:[%s6 + $0x38] sm:$0xff]
  %v333 = vld [vmem:[%s6 + $0x40] sm:$0xff]
  %v334 = vld [vmem:[%s6 + $0x48] sm:$0xff]
  %v335 = vld [vmem:[%s6 + $0x50] sm:$0xff]
  %v336 = vld [vmem:[%s6 + $0x58] sm:$0xff]
  %v337 = vld [vmem:[%s6 + $0x60] sm:$0xff]
  %v338 = vld [vmem:[%s6 + $0x68] sm:$0xff]
  %v339 = vld [vmem:[%s6 + $0x70] sm:$0xff]
  %v340 = vld [vmem:[%s6 + $0x78] sm:$0xff]
  %v341 = vld [vmem:[%s1] sm:$0xff]
  %v342 = vld [vmem:[%s1 + $0x8] sm:$0xff]
  %v343 = vld [vmem:[%s1 + $0x10] sm:$0xff]
  %v344 = vld [vmem:[%s1 + $0x18] sm:$0xff]
  %v345 = vld [vmem:[%s1 + $0x20] sm:$0xff]
  %v346 = vld [vmem:[%s1 + $0x28] sm:$0xff]
  %347 = vmatprep.subr.mxu0 0.0
  %348 = vmatpush1.msra.mxu0 %v325
  %349 = vmatprep.subr.mxu0 0.0
  %350 = vmatpush1.msra.mxu0 %v326
  %351 = vmatprep.subr.mxu0 0.0
  %352 = vmatpush1.msra.mxu0 %v327
  %353 = vmatprep.subr.mxu0 0.0
  %354 = vmatpush1.msra.mxu0 %v328
  %355 = vmatprep.subr.mxu0 0.0
  %356 = vmatpush1.msra.mxu0 %v329
  %357 = vmatprep.subr.mxu0 0.0
  %358 = vmatpush1.msra.mxu0 %v330
  %359 = vmatprep.subr.mxu0 0.0
  %360 = vmatpush1.msra.mxu0 %v331
  %361 = vmatprep.subr.mxu0 0.0
  %362 = vmatpush1.msra.mxu0 %v332
  %363 = vmatprep.subr.mxu0 0.0
  %364 = vmatpush1.msra.mxu0 %v333
  %365 = vmatprep.subr.mxu0 0.0
  %366 = vmatpush1.msra.mxu0 %v334
  %367 = vmatprep.subr.mxu0 0.0
  %368 = vmatpush1.msra.mxu0 %v335
  %369 = vmatprep.subr.mxu0 0.0
  %370 = vmatpush1.msra.mxu0 %v336
  %371 = vmatprep.subr.mxu0 0.0
  %372 = vmatpush1.msra.mxu0 %v337
  %373 = vmatprep.subr.mxu0 0.0
  %374 = vmatpush1.msra.mxu0 %v338
  %375 = vmatprep.subr.mxu0 0.0
  %376 = vmatpush1.msra.mxu0 %v339
  %377 = vmatprep.subr.mxu0 0.0
  %378 = vmatpush1.msra.mxu0 %v340
  %379 = vmatprep.subr.mxu0 0.0
  %380 = vmatpush1.msra.mxu0 0.0
  %381 = vmatprep.subr.mxu0 0.0
  %382 = vmatpush1.msra.mxu0 0.0
  %383 = vmatprep.subr.mxu0 0.0
  %384 = vmatpush1.msra.mxu0 0.0
  %385 = vmatprep.subr.mxu0 0.0
  %386 = vmatpush1.msra.mxu0 0.0
  %387 = vmatprep.subr.mxu0 0.0
  %388 = vmatpush1.msra.mxu0 0.0
  %389 = vmatprep.subr.mxu0 0.0
  %390 = vmatpush1.msra.mxu0 0.0
  %391 = vmatprep.subr.mxu0 0.0
  %392 = vmatpush1.msra.mxu0 0.0
  %393 = vmatprep.subr.mxu0 0.0
  %394 = vmatpush1.msra.mxu0 0.0
  %395 = vmatprep.subr.mxu0 0.0
  %396 = vmatpush1.msra.mxu0 0.0
  %397 = vmatprep.subr.mxu0 0.0
  %398 = vmatpush1.msra.mxu0 0.0
  %399 = vmatprep.subr.mxu0 0.0
  %400 = vmatpush1.msra.mxu0 0.0
  %401 = vmatprep.subr.mxu0 0.0
  %402 = vmatpush1.msra.mxu0 0.0
  %403 = vmatprep.subr.mxu0 0.0
  %404 = vmatpush1.msra.mxu0 0.0
  %405 = vmatprep.subr.mxu0 0.0
  %406 = vmatpush1.msra.mxu0 0.0
  %407 = vmatprep.subr.mxu0 0.0
  %408 = vmatpush1.msra.mxu0 0.0
  %409 = vmatprep.subr.mxu0 0.0
  %410 = vmatpush1.msra.mxu0 0.0
  %411 = vmatprep.mubr.f32.mxu0 0.0
  %412 = vmatmul.mubr.f32.gmra.mrb[0].mxu0 %v319
  %v413 = vpop.f32.mrb[0].mxu0
  %v414 = vadd.f32 %v341, %v413
  %v415 = vpop.f32.mrb[0].mxu0
  %416 = vmatprep.mubr.f32.mxu0 0.0
  %417 = vmatmul.mubr.f32.gmra.mrb[0].mxu0 %v320
  %v418 = vpop.f32.mrb[0].mxu0
  %v419 = vadd.f32 %v342, %v418
  %v420 = vpop.f32.mrb[0].mxu0
  %421 = vmatprep.mubr.f32.mxu0 0.0
  %422 = vmatmul.mubr.f32.gmra.mrb[0].mxu0 %v321
  %v423 = vpop.f32.mrb[0].mxu0
  %v424 = vadd.f32 %v343, %v423
  %v425 = vpop.f32.mrb[0].mxu0
  %426 = vmatprep.mubr.f32.mxu0 0.0
  %427 = vmatmul.mubr.f32.gmra.mrb[0].mxu0 %v322
  %v428 = vpop.f32.mrb[0].mxu0
  %v429 = vadd.f32 %v344, %v428
  %v430 = vpop.f32.mrb[0].mxu0
  %431 = vmatprep.mubr.f32.mxu0 0.0
  %432 = vmatmul.mubr.f32.gmra.mrb[0].mxu0 %v323
  %v433 = vpop.f32.mrb[0].mxu0
  %v434 = vadd.f32 %v345, %v433
  %v435 = vpop.f32.mrb[0].mxu0
  %436 = vmatprep.mubr.f32.mxu0 0.0
  %437 = vmatmul.mubr.f32.gmra.mrb[0].mxu0 %v324
  %v438 = vpop.f32.mrb[0].mxu0
  %v439 = vadd.f32 %v346, %v438
  %v440 = vpop.f32.mrb[0].mxu0
  %441 = vdwg.mxu0
  %v442 = vlaneseq
  %v443 = vand.u32 %v442, 127
  %vm444 = vcmp.lt.s32.totalorder %v443, 4
  %v445 = vxor.u32 %v414, 2147483648
  %v446 = vxor.u32 %v419, 2147483648
  %v447 = vxor.u32 %v424, 2147483648
  %v448 = vxor.u32 %v429, 2147483648
  %v449 = vxor.u32 %v434, 2147483648
  %v450 = vxor.u32 %v439, 2147483648
  %v451 = vmul.f32 %v445, 1.442695
  %v452 = vpow.pop %v451
  %v453 = vmul.f32 %v446, 1.442695
  %v454 = vpow.pop %v453
  %v455 = vmul.f32 %v447, 1.442695
  %v456 = vpow.pop %v455
  %v457 = vmul.f32 %v448, 1.442695
  %v458 = vpow.pop %v457
  %v459 = vmul.f32 %v449, 1.442695
  %v460 = vpow.pop %v459
  %v461 = vmul.f32 %v450, 1.442695
  %v462 = vpow.pop %v461
  %v463 = vadd.f32 %v452, 1.0
  %v464 = vadd.f32 %v454, 1.0
  %v465 = vadd.f32 %v456, 1.0
  %v466 = vadd.f32 %v458, 1.0
  %v467 = vadd.f32 %v460, 1.0
  %v468 = vadd.f32 %v462, 1.0
  %v469 = vrcp.pop %v463
  %v470 = vmul.f32 1.0, %v469
  %v471 = vrcp.pop %v464
  %v472 = vmul.f32 1.0, %v471
  %v473 = vrcp.pop %v465
  %v474 = vmul.f32 1.0, %v473
  %v475 = vrcp.pop %v466
  %v476 = vmul.f32 1.0, %v475
  %v477 = vrcp.pop %v467
  %v478 = vmul.f32 1.0, %v477
  %v479 = vrcp.pop %v468
  %v480 = vmul.f32 1.0, %v479
  %v481 = vsel %vm444, %v470, %v414
  %v482 = vsel %vm444, %v472, %v419
  %v483 = vsel %vm444, %v474, %v424
  %v484 = vsel %vm444, %v476, %v429
  %v485 = vsel %vm444, %v478, %v434
  %v486 = vsel %vm444, %v480, %v439
  %487 = vst [vmem:[%s7] sm:$0xff] %v481
  %488 = vst [vmem:[%s7 + $0x8] sm:$0xff] %v482
  %489 = vst [vmem:[%s7 + $0x10] sm:$0xff] %v483
  %490 = vst [vmem:[%s7 + $0x18] sm:$0xff] %v484
  %491 = vst [vmem:[%s7 + $0x20] sm:$0xff] %v485
  %492 = vst [vmem:[%s7 + $0x28] sm:$0xff] %v486
  // Predicated region
  $region30: #{deformable_detr_forward.3} parent=0 // pred_check
    _
  $region31: #{deformable_detr_forward.3} parent=0 // pred_check_branch
    %494 = sbr.rel (0) target = $region33
  $region32: #{deformable_detr_forward.3} parent=0 // pred_region
    _
  $region33: #{deformable_detr_forward.3} parent=0 // pred_fallthru
    _
  // Predicated region
  $region34: #{deformable_detr_forward.3} parent=0 // pred_check
    _
  $region35: #{deformable_detr_forward.3} parent=0 // pred_check_branch
    %496 = sbr.rel (0) target = $region37
  $region36: #{deformable_detr_forward.3} parent=0 // pred_region
    _
  $region37: #{deformable_detr_forward.3} parent=0 // pred_fallthru
    _

</llo_original>
